<compile_context>
chip_gen: v6e
topology: v6e:2x2x1
jax: 0.10.0
libtpu: 0.0.40
codegen_flags: <defaults>
</compile_context>

<pallas_src>
import math
import jax
import jax.numpy as jnp
from jax import lax
from jax.experimental import pallas as pl
from jax.experimental.pallas import tpu as pltpu

# ----- small, module-consistent sizes -----
B = 2           # batch
S = 8           # sequence length
HIDDEN = 32     # config.hidden_size
NUM_HEADS = 4   # config.num_attention_heads
HEAD_DIM = HIDDEN // NUM_HEADS
LN_EPS = 1e-12  # config.layer_norm_eps (BERT default)

_SCALE = 1.0 / math.sqrt(HEAD_DIM)
_QSCALE = _SCALE ** 0.5          # d**-0.25; (q*r)(k*r)^T == (q k^T)/sqrt(d)


def _vmem():
    return pl.BlockSpec(memory_space=pltpu.MemorySpace.VMEM)


# ---------------- fully fused BertAttention kernel ----------------
def bert_attention_kernel(x_ref, mask_ref, wqkv_ref, bqkv_ref,
                          wo_ref, bo_ref, gamma_ref, beta_ref,
                          out_ref, scores_ref, ctx_ref):
    # ---- fused QKV projection: (B*S, H) @ (H, 3H) + bias ----
    x = x_ref[...]                                                        # (16, 32)
    qkv = jnp.dot(x, wqkv_ref[...], preferred_element_type=jnp.float32) + bqkv_ref[...]

    # Fold the 1/sqrt(d) scale once into q/k; keep v unscaled for the context matmul
    # and a scaled copy for value_scores.
    q = qkv[:, 0:HIDDEN] * _QSCALE
    k = qkv[:, HIDDEN:2 * HIDDEN] * _QSCALE
    v = qkv[:, 2 * HIDDEN:3 * HIDDEN]
    vs = v * _QSCALE

    mask = mask_ref[...]                                                  # (B, S), loaded once

    dn = (((1,), (1,)), ((), ()))   # contract last axes of both operands: a @ b^T, no transpose

    for b in range(B):
        m_b = mask[b:b + 1, :]                                            # (1, S) -> bcast rows
        r0, r1 = b * S, (b + 1) * S
        for h in range(NUM_HEADS):
            c0, c1 = h * HEAD_DIM, (h + 1) * HEAD_DIM
            q_bh = q[r0:r1, c0:c1]                                        # (S, D), pre-scaled
            k_bh = k[r0:r1, c0:c1]                                        # (S, D), pre-scaled
            v_bh = v[r0:r1, c0:c1]                                        # unscaled (context)
            vs_bh = vs[r0:r1, c0:c1]

            idx = b * NUM_HEADS + h

            # attention_scores = qk^T/sqrt(d) + mask   (returned as layer_att, post-mask,
            # matching the PyTorch module which reassigns attention_scores after the add)
            att = lax.dot_general(q_bh, k_bh, dn,
                                  preferred_element_type=jnp.float32) + m_b
            scores_ref[0, idx] = att
            # self-similarity score matrices (the folded scale already provides 1/sqrt(d))
            scores_ref[1, idx] = lax.dot_general(q_bh, q_bh, dn,
                                                 preferred_element_type=jnp.float32)
            scores_ref[2, idx] = lax.dot_general(k_bh, k_bh, dn,
                                                 preferred_element_type=jnp.float32)
            scores_ref[3, idx] = lax.dot_general(vs_bh, vs_bh, dn,
                                                 preferred_element_type=jnp.float32)

            # softmax over keys (attention dropout is identity at inference)
            mx = jnp.max(att, axis=-1, keepdims=True)
            e = jnp.exp(att - mx)
            probs = e / jnp.sum(e, axis=-1, keepdims=True)

            # context for this (batch, head), scattered directly into the merged layout:
            # permute(0, 2, 1, 3).reshape(B*S, H*D) == rows [b*S:(b+1)*S], cols [h*D:(h+1)*D]
            ctx_ref[r0:r1, c0:c1] = jnp.dot(probs, v_bh,
                                            preferred_element_type=jnp.float32)

    # ---- BertSelfOutput: dense -> dropout(identity) -> LayerNorm(h + input_tensor) ----
    dense = jnp.dot(ctx_ref[...], wo_ref[...],
                    preferred_element_type=jnp.float32) + bo_ref[...]
    y = dense + x
    mean = jnp.mean(y, axis=-1, keepdims=True)
    var = jnp.mean(jnp.square(y - mean), axis=-1, keepdims=True)
    out_ref[...] = (y - mean) * lax.rsqrt(var + LN_EPS) * gamma_ref[...] + beta_ref[...]


# ---------------- Full BertAttention forward (single pallas_call) ----------------
def bert_attention(x, attention_mask, params):
    # x: (B, S, HIDDEN); attention_mask: BERT extended additive mask (B, 1, 1, S).
    x2 = x.reshape(B * S, HIDDEN)
    mask2 = attention_mask.reshape(B, S).astype(jnp.float32)

    out, scores = pl.pallas_call(
        bert_attention_kernel,
        out_shape=(
            jax.ShapeDtypeStruct((B * S, HIDDEN), jnp.float32),            # attention_output
            jax.ShapeDtypeStruct((4, B * NUM_HEADS, S, S), jnp.float32),   # [att, qq, kk, vv]
        ),
        in_specs=[_vmem()] * 8,
        out_specs=(_vmem(), _vmem()),
        scratch_shapes=[pltpu.VMEM((B * S, HIDDEN), jnp.float32)],         # merged context
    )(x2, mask2,
      params["wqkv"], params["bqkv"],
      params["wo"], params["bo"],
      params["gamma"], params["beta"])

    attention_output = out.reshape(B, S, HIDDEN)
    sp = scores.reshape(4, B, NUM_HEADS, S, S)
    layer_att, query_scores, key_scores, value_scores = sp[0], sp[1], sp[2], sp[3]
    context_score = 0  # matches the PyTorch module (plain python int 0)
    return (attention_output, layer_att, value_scores, context_score,
            query_scores, key_scores)


# ---------------- pure-JAX reference (for a sanity check in __main__) ----------------
def bert_attention_reference(x, attention_mask, params):
    hp = lax.Precision.HIGHEST
    xf = x.reshape(B * S, HIDDEN)
    qkv = jnp.dot(xf, params["wqkv"], precision=hp) + params["bqkv"]
    q, k, v = qkv[:, :HIDDEN], qkv[:, HIDDEN:2 * HIDDEN], qkv[:, 2 * HIDDEN:]

    def heads(t):
        return t.reshape(B, S, NUM_HEADS, HEAD_DIM).transpose(0, 2, 1, 3)

    qh, kh, vh = heads(q), heads(k), heads(v)
    att = jnp.einsum('bhqd,bhkd->bhqk', qh, kh, precision=hp) * _SCALE + attention_mask
    probs = jax.nn.softmax(att, axis=-1)
    qq = jnp.einsum('bhqd,bhkd->bhqk', qh, qh, precision=hp) * _SCALE
    kk = jnp.einsum('bhqd,bhkd->bhqk', kh, kh, precision=hp) * _SCALE
    vv = jnp.einsum('bhqd,bhkd->bhqk', vh, vh, precision=hp) * _SCALE
    ctx = jnp.einsum('bhqk,bhkd->bhqd', probs, vh, precision=hp)
    ctx = ctx.transpose(0, 2, 1, 3).reshape(B * S, HIDDEN)
    dense = jnp.dot(ctx, params["wo"], precision=hp) + params["bo"]
    y = dense + xf
    mean = jnp.mean(y, axis=-1, keepdims=True)
    var = jnp.mean(jnp.square(y - mean), axis=-1, keepdims=True)
    out = (y - mean) / jnp.sqrt(var + LN_EPS) * params["gamma"] + params["beta"]
    return (out.reshape(B, S, HIDDEN), att, vv, 0, qq, kk)


def init_params(key):
    ks = jax.random.split(key, 8)

    def w(k):
        return (0.02 * jax.random.normal(k, (HIDDEN, HIDDEN))).astype(jnp.float32)

    def bvec(k):
        return (0.02 * jax.random.normal(k, (1, HIDDEN))).astype(jnp.float32)

    wq, bq = w(ks[0]), bvec(ks[1])
    wk, bk = w(ks[2]), bvec(ks[3])
    wv, bv = w(ks[4]), bvec(ks[5])
    return {
        # Q/K/V weights packed once at init time (fused projection in the kernel).
        "wqkv": jnp.concatenate([wq, wk, wv], axis=1),     # (HIDDEN, 3*HIDDEN)
        "bqkv": jnp.concatenate([bq, bk, bv], axis=1),     # (1, 3*HIDDEN)
        "wo": w(ks[6]), "bo": bvec(ks[7]),
        "gamma": jnp.ones((1, HIDDEN), jnp.float32),
        "beta": jnp.zeros((1, HIDDEN), jnp.float32),
    }


if __name__ == "__main__":
    root = jax.random.PRNGKey(0)
    k_params, k_x = jax.random.split(root)
    params = init_params(k_params)

    x = jax.random.normal(k_x, (B, S, HIDDEN), dtype=jnp.float32)

    # Standard BERT extended attention mask: 0 for keep, -10000 for masked positions.
    keep = jnp.ones((B, S), jnp.float32)
    keep = keep.at[1, -2:].set(0.0)  # mask out last two tokens of batch element 1
    attention_mask = ((1.0 - keep) * -10000.0).reshape(B, 1, 1, S)

    outs = bert_attention(x, attention_mask, params)
    # block on all array outputs (element 3 is the python int context_score == 0)
    for o in outs:
        if isinstance(o, jnp.ndarray):
            jax.block_until_ready(o)

    # Light correctness check against a pure-JAX reference (generous tolerance: the
    # masked scores carry -10000 and the scale folding reorders a few fp32 rounds).
    refs = bert_attention_reference(x, attention_mask, params)
    names = ("attention_output", "layer_att", "value_scores",
             "context_score", "query_scores", "key_scores")
    for got, ref, name in zip(outs, refs, names):
        if isinstance(got, jnp.ndarray):
            if not bool(jnp.allclose(got, ref, rtol=1e-2, atol=1e-2)):
                raise AssertionError(
                    f"{name} mismatch, max abs diff "
                    f"{float(jnp.max(jnp.abs(got - ref)))}")

    print("KERNEL_OK")
</pallas_src>

<mosaic_0001>
module attributes {stable_mosaic.version = 11 : i64} {
  func.func @bert_attention_kernel(%arg0: memref<16x32xf32, #tpu.memory_space<vmem>>, %arg1: memref<2x8xf32, #tpu.memory_space<vmem>>, %arg2: memref<32x96xf32, #tpu.memory_space<vmem>>, %arg3: memref<1x96xf32, #tpu.memory_space<vmem>>, %arg4: memref<32x32xf32, #tpu.memory_space<vmem>>, %arg5: memref<1x32xf32, #tpu.memory_space<vmem>>, %arg6: memref<1x32xf32, #tpu.memory_space<vmem>>, %arg7: memref<1x32xf32, #tpu.memory_space<vmem>>, %arg8: memref<16x32xf32, #tpu.memory_space<vmem>>, %arg9: memref<4x8x8x8xf32, #tpu.memory_space<vmem>>, %arg10: memref<16x32xf32, #tpu.memory_space<vmem>>) attributes {dimension_semantics = [], scalar_prefetch = 0 : i64, scratch_operands = 1 : i64, tpu.core_type = #tpu.core_type<tc>} {
    %c0 = arith.constant 0 : index
    %c0_0 = arith.constant 0 : index
    %0 = vector.load %arg0[%c0, %c0_0] : memref<16x32xf32, #tpu.memory_space<vmem>>, vector<16x32xf32>
    %c0_1 = arith.constant 0 : index
    %c0_2 = arith.constant 0 : index
    %1 = vector.load %arg2[%c0_1, %c0_2] : memref<32x96xf32, #tpu.memory_space<vmem>>, vector<32x96xf32>
    %cst = arith.constant dense<0.000000e+00> : vector<16x96xf32>
    %2 = tpu.matmul %0, %1, %cst {dimension_numbers = #tpu.dot_dimension_numbers<[1], [0], [0], [1], [0, 0, 1, 1], [], []>} : vector<16x32xf32>, vector<32x96xf32>, vector<16x96xf32> -> vector<16x96xf32>
    %c0_3 = arith.constant 0 : index
    %c0_4 = arith.constant 0 : index
    %3 = vector.load %arg3[%c0_3, %c0_4] : memref<1x96xf32, #tpu.memory_space<vmem>>, vector<1x96xf32>
    %4 = vector.broadcast %3 : vector<1x96xf32> to vector<16x96xf32>
    %5 = arith.addf %2, %4 : vector<16x96xf32>
    %6 = vector.extract_strided_slice %5 {offsets = [0, 0], sizes = [16, 32], strides = [1, 1]} : vector<16x96xf32> to vector<16x32xf32>
    %cst_5 = arith.constant 0.594603539 : f32
    %7 = vector.broadcast %cst_5 : f32 to vector<16x32xf32>
    %8 = arith.mulf %6, %7 : vector<16x32xf32>
    %9 = vector.extract_strided_slice %5 {offsets = [0, 32], sizes = [16, 32], strides = [1, 1]} : vector<16x96xf32> to vector<16x32xf32>
    %cst_6 = arith.constant 0.594603539 : f32
    %10 = vector.broadcast %cst_6 : f32 to vector<16x32xf32>
    %11 = arith.mulf %9, %10 : vector<16x32xf32>
    %12 = vector.extract_strided_slice %5 {offsets = [0, 64], sizes = [16, 32], strides = [1, 1]} : vector<16x96xf32> to vector<16x32xf32>
    %cst_7 = arith.constant 0.594603539 : f32
    %13 = vector.broadcast %cst_7 : f32 to vector<16x32xf32>
    %14 = arith.mulf %12, %13 : vector<16x32xf32>
    %c0_8 = arith.constant 0 : index
    %c0_9 = arith.constant 0 : index
    %15 = vector.load %arg1[%c0_8, %c0_9] : memref<2x8xf32, #tpu.memory_space<vmem>>, vector<2x8xf32>
    %16 = vector.extract_strided_slice %15 {offsets = [0, 0], sizes = [1, 8], strides = [1, 1]} : vector<2x8xf32> to vector<1x8xf32>
    %17 = vector.extract_strided_slice %8 {offsets = [0, 0], sizes = [8, 8], strides = [1, 1]} : vector<16x32xf32> to vector<8x8xf32>
    %18 = vector.extract_strided_slice %11 {offsets = [0, 0], sizes = [8, 8], strides = [1, 1]} : vector<16x32xf32> to vector<8x8xf32>
    %19 = vector.extract_strided_slice %12 {offsets = [0, 0], sizes = [8, 8], strides = [1, 1]} : vector<16x32xf32> to vector<8x8xf32>
    %20 = vector.extract_strided_slice %14 {offsets = [0, 0], sizes = [8, 8], strides = [1, 1]} : vector<16x32xf32> to vector<8x8xf32>
    %cst_10 = arith.constant dense<0.000000e+00> : vector<8x8xf32>
    %21 = tpu.matmul %17, %18, %cst_10 {dimension_numbers = #tpu.dot_dimension_numbers<[1], [1], [0], [0], [0, 0, 1, 0], [], []>} : vector<8x8xf32>, vector<8x8xf32>, vector<8x8xf32> -> vector<8x8xf32>
    %22 = vector.broadcast %16 : vector<1x8xf32> to vector<8x8xf32>
    %23 = arith.addf %21, %22 : vector<8x8xf32>
    %c0_11 = arith.constant 0 : index
    %c0_12 = arith.constant 0 : index
    %c0_13 = arith.constant 0 : index
    %c0_14 = arith.constant 0 : index
    %24 = vector.load %arg9[%c0_11, %c0_12, %c0_13, %c0_14] : memref<4x8x8x8xf32, #tpu.memory_space<vmem>>, vector<1x1x8x8xf32>
    %25 = vector.shape_cast %24 : vector<1x1x8x8xf32> to vector<8x8xf32>
    %26 = vector.shape_cast %23 : vector<8x8xf32> to vector<1x1x8x8xf32>
    tpu.vector_store %arg9[%c0_11, %c0_12, %c0_13, %c0_14], %26 {strides = array<i32>} : memref<4x8x8x8xf32, #tpu.memory_space<vmem>>, vector<1x1x8x8xf32>,
    %cst_15 = arith.constant dense<0.000000e+00> : vector<8x8xf32>
    %27 = tpu.matmul %17, %17, %cst_15 {dimension_numbers = #tpu.dot_dimension_numbers<[1], [1], [0], [0], [0, 0, 1, 0], [], []>} : vector<8x8xf32>, vector<8x8xf32>, vector<8x8xf32> -> vector<8x8xf32>
    %c1 = arith.constant 1 : index
    %c0_16 = arith.constant 0 : index
    %c0_17 = arith.constant 0 : index
    %c0_18 = arith.constant 0 : index
    %28 = vector.load %arg9[%c1, %c0_16, %c0_17, %c0_18] : memref<4x8x8x8xf32, #tpu.memory_space<vmem>>, vector<1x1x8x8xf32>
    %29 = vector.shape_cast %28 : vector<1x1x8x8xf32> to vector<8x8xf32>
    %30 = vector.shape_cast %27 : vector<8x8xf32> to vector<1x1x8x8xf32>
    tpu.vector_store %arg9[%c1, %c0_16, %c0_17, %c0_18], %30 {strides = array<i32>} : memref<4x8x8x8xf32, #tpu.memory_space<vmem>>, vector<1x1x8x8xf32>,
    %cst_19 = arith.constant dense<0.000000e+00> : vector<8x8xf32>
    %31 = tpu.matmul %18, %18, %cst_19 {dimension_numbers = #tpu.dot_dimension_numbers<[1], [1], [0], [0], [0, 0, 1, 0], [], []>} : vector<8x8xf32>, vector<8x8xf32>, vector<8x8xf32> -> vector<8x8xf32>
    %c2 = arith.constant 2 : index
    %c0_20 = arith.constant 0 : index
    %c0_21 = arith.constant 0 : index
    %c0_22 = arith.constant 0 : index
    %32 = vector.load %arg9[%c2, %c0_20, %c0_21, %c0_22] : memref<4x8x8x8xf32, #tpu.memory_space<vmem>>, vector<1x1x8x8xf32>
    %33 = vector.shape_cast %32 : vector<1x1x8x8xf32> to vector<8x8xf32>
    %34 = vector.shape_cast %31 : vector<8x8xf32> to vector<1x1x8x8xf32>
    tpu.vector_store %arg9[%c2, %c0_20, %c0_21, %c0_22], %34 {strides = array<i32>} : memref<4x8x8x8xf32, #tpu.memory_space<vmem>>, vector<1x1x8x8xf32>,
    %cst_23 = arith.constant dense<0.000000e+00> : vector<8x8xf32>
    %35 = tpu.matmul %20, %20, %cst_23 {dimension_numbers = #tpu.dot_dimension_numbers<[1], [1], [0], [0], [0, 0, 1, 0], [], []>} : vector<8x8xf32>, vector<8x8xf32>, vector<8x8xf32> -> vector<8x8xf32>
    %c3 = arith.constant 3 : index
    %c0_24 = arith.constant 0 : index
    %c0_25 = arith.constant 0 : index
    %c0_26 = arith.constant 0 : index
    %36 = vector.load %arg9[%c3, %c0_24, %c0_25, %c0_26] : memref<4x8x8x8xf32, #tpu.memory_space<vmem>>, vector<1x1x8x8xf32>
    %37 = vector.shape_cast %36 : vector<1x1x8x8xf32> to vector<8x8xf32>
    %38 = vector.shape_cast %35 : vector<8x8xf32> to vector<1x1x8x8xf32>
    tpu.vector_store %arg9[%c3, %c0_24, %c0_25, %c0_26], %38 {strides = array<i32>} : memref<4x8x8x8xf32, #tpu.memory_space<vmem>>, vector<1x1x8x8xf32>,
    %cst_27 = arith.constant dense<0xFF800000> : vector<8xf32>
    %39 = vector.multi_reduction <maximumf>, %23, %cst_27 [1] : vector<8x8xf32> to vector<8xf32>
    %40 = vector.shape_cast %39 : vector<8xf32> to vector<8x1xf32>
    %41 = vector.broadcast %40 : vector<8x1xf32> to vector<8x8xf32>
    %42 = arith.subf %23, %41 : vector<8x8xf32>
    %43 = math.exp %42 : vector<8x8xf32>
    %cst_28 = arith.constant dense<0.000000e+00> : vector<8xf32>
    %44 = vector.multi_reduction <add>, %43, %cst_28 [1] : vector<8x8xf32> to vector<8xf32>
    %45 = vector.shape_cast %44 : vector<8xf32> to vector<8x1xf32>
    %46 = vector.broadcast %45 : vector<8x1xf32> to vector<8x8xf32>
    %47 = arith.divf %43, %46 : vector<8x8xf32>
    %cst_29 = arith.constant dense<0.000000e+00> : vector<8x8xf32>
    %48 = tpu.matmul %47, %19, %cst_29 {dimension_numbers = #tpu.dot_dimension_numbers<[1], [0], [0], [1], [0, 0, 1, 1], [], []>} : vector<8x8xf32>, vector<8x8xf32>, vector<8x8xf32> -> vector<8x8xf32>
    %c0_30 = arith.constant 0 : index
    %c0_31 = arith.constant 0 : index
    %49 = vector.load %arg10[%c0_30, %c0_31] : memref<16x32xf32, #tpu.memory_space<vmem>>, vector<8x8xf32>
    tpu.vector_store %arg10[%c0_30, %c0_31], %48 {strides = array<i32>} : memref<16x32xf32, #tpu.memory_space<vmem>>, vector<8x8xf32>,
    %50 = vector.extract_strided_slice %8 {offsets = [0, 8], sizes = [8, 8], strides = [1, 1]} : vector<16x32xf32> to vector<8x8xf32>
    %51 = vector.extract_strided_slice %11 {offsets = [0, 8], sizes = [8, 8], strides = [1, 1]} : vector<16x32xf32> to vector<8x8xf32>
    %52 = vector.extract_strided_slice %12 {offsets = [0, 8], sizes = [8, 8], strides = [1, 1]} : vector<16x32xf32> to vector<8x8xf32>
    %53 = vector.extract_strided_slice %14 {offsets = [0, 8], sizes = [8, 8], strides = [1, 1]} : vector<16x32xf32> to vector<8x8xf32>
    %cst_32 = arith.constant dense<0.000000e+00> : vector<8x8xf32>
    %54 = tpu.matmul %50, %51, %cst_32 {dimension_numbers = #tpu.dot_dimension_numbers<[1], [1], [0], [0], [0, 0, 1, 0], [], []>} : vector<8x8xf32>, vector<8x8xf32>, vector<8x8xf32> -> vector<8x8xf32>
    %55 = vector.broadcast %16 : vector<1x8xf32> to vector<8x8xf32>
    %56 = arith.addf %54, %55 : vector<8x8xf32>
    %c0_33 = arith.constant 0 : index
    %c1_34 = arith.constant 1 : index
    %c0_35 = arith.constant 0 : index
    %c0_36 = arith.constant 0 : index
    %57 = vector.load %arg9[%c0_33, %c1_34, %c0_35, %c0_36] : memref<4x8x8x8xf32, #tpu.memory_space<vmem>>, vector<1x1x8x8xf32>
    %58 = vector.shape_cast %57 : vector<1x1x8x8xf32> to vector<8x8xf32>
    %59 = vector.shape_cast %56 : vector<8x8xf32> to vector<1x1x8x8xf32>
    tpu.vector_store %arg9[%c0_33, %c1_34, %c0_35, %c0_36], %59 {strides = array<i32>} : memref<4x8x8x8xf32, #tpu.memory_space<vmem>>, vector<1x1x8x8xf32>,
    %cst_37 = arith.constant dense<0.000000e+00> : vector<8x8xf32>
    %60 = tpu.matmul %50, %50, %cst_37 {dimension_numbers = #tpu.dot_dimension_numbers<[1], [1], [0], [0], [0, 0, 1, 0], [], []>} : vector<8x8xf32>, vector<8x8xf32>, vector<8x8xf32> -> vector<8x8xf32>
    %c1_38 = arith.constant 1 : index
    %c1_39 = arith.constant 1 : index
    %c0_40 = arith.constant 0 : index
    %c0_41 = arith.constant 0 : index
    %61 = vector.load %arg9[%c1_38, %c1_39, %c0_40, %c0_41] : memref<4x8x8x8xf32, #tpu.memory_space<vmem>>, vector<1x1x8x8xf32>
    %62 = vector.shape_cast %61 : vector<1x1x8x8xf32> to vector<8x8xf32>
    %63 = vector.shape_cast %60 : vector<8x8xf32> to vector<1x1x8x8xf32>
    tpu.vector_store %arg9[%c1_38, %c1_39, %c0_40, %c0_41], %63 {strides = array<i32>} : memref<4x8x8x8xf32, #tpu.memory_space<vmem>>, vector<1x1x8x8xf32>,
    %cst_42 = arith.constant dense<0.000000e+00> : vector<8x8xf32>
    %64 = tpu.matmul %51, %51, %cst_42 {dimension_numbers = #tpu.dot_dimension_numbers<[1], [1], [0], [0], [0, 0, 1, 0], [], []>} : vector<8x8xf32>, vector<8x8xf32>, vector<8x8xf32> -> vector<8x8xf32>
    %c2_43 = arith.constant 2 : index
    %c1_44 = arith.constant 1 : index
    %c0_45 = arith.constant 0 : index
    %c0_46 = arith.constant 0 : index
    %65 = vector.load %arg9[%c2_43, %c1_44, %c0_45, %c0_46] : memref<4x8x8x8xf32, #tpu.memory_space<vmem>>, vector<1x1x8x8xf32>
    %66 = vector.shape_cast %65 : vector<1x1x8x8xf32> to vector<8x8xf32>
    %67 = vector.shape_cast %64 : vector<8x8xf32> to vector<1x1x8x8xf32>
    tpu.vector_store %arg9[%c2_43, %c1_44, %c0_45, %c0_46], %67 {strides = array<i32>} : memref<4x8x8x8xf32, #tpu.memory_space<vmem>>, vector<1x1x8x8xf32>,
    %cst_47 = arith.constant dense<0.000000e+00> : vector<8x8xf32>
    %68 = tpu.matmul %53, %53, %cst_47 {dimension_numbers = #tpu.dot_dimension_numbers<[1], [1], [0], [0], [0, 0, 1, 0], [], []>} : vector<8x8xf32>, vector<8x8xf32>, vector<8x8xf32> -> vector<8x8xf32>
    %c3_48 = arith.constant 3 : index
    %c1_49 = arith.constant 1 : index
    %c0_50 = arith.constant 0 : index
    %c0_51 = arith.constant 0 : index
    %69 = vector.load %arg9[%c3_48, %c1_49, %c0_50, %c0_51] : memref<4x8x8x8xf32, #tpu.memory_space<vmem>>, vector<1x1x8x8xf32>
    %70 = vector.shape_cast %69 : vector<1x1x8x8xf32> to vector<8x8xf32>
    %71 = vector.shape_cast %68 : vector<8x8xf32> to vector<1x1x8x8xf32>
    tpu.vector_store %arg9[%c3_48, %c1_49, %c0_50, %c0_51], %71 {strides = array<i32>} : memref<4x8x8x8xf32, #tpu.memory_space<vmem>>, vector<1x1x8x8xf32>,
    %cst_52 = arith.constant dense<0xFF800000> : vector<8xf32>
    %72 = vector.multi_reduction <maximumf>, %56, %cst_52 [1] : vector<8x8xf32> to vector<8xf32>
    %73 = vector.shape_cast %72 : vector<8xf32> to vector<8x1xf32>
    %74 = vector.broadcast %73 : vector<8x1xf32> to vector<8x8xf32>
    %75 = arith.subf %56, %74 : vector<8x8xf32>
    %76 = math.exp %75 : vector<8x8xf32>
    %cst_53 = arith.constant dense<0.000000e+00> : vector<8xf32>
    %77 = vector.multi_reduction <add>, %76, %cst_53 [1] : vector<8x8xf32> to vector<8xf32>
    %78 = vector.shape_cast %77 : vector<8xf32> to vector<8x1xf32>
    %79 = vector.broadcast %78 : vector<8x1xf32> to vector<8x8xf32>
    %80 = arith.divf %76, %79 : vector<8x8xf32>
    %cst_54 = arith.constant dense<0.000000e+00> : vector<8x8xf32>
    %81 = tpu.matmul %80, %52, %cst_54 {dimension_numbers = #tpu.dot_dimension_numbers<[1], [0], [0], [1], [0, 0, 1, 1], [], []>} : vector<8x8xf32>, vector<8x8xf32>, vector<8x8xf32> -> vector<8x8xf32>
    %c0_55 = arith.constant 0 : index
    %c8 = arith.constant 8 : index
    %82 = vector.load %arg10[%c0_55, %c8] : memref<16x32xf32, #tpu.memory_space<vmem>>, vector<8x8xf32>
    tpu.vector_store %arg10[%c0_55, %c8], %81 {strides = array<i32>} : memref<16x32xf32, #tpu.memory_space<vmem>>, vector<8x8xf32>,
    %83 = vector.extract_strided_slice %8 {offsets = [0, 16], sizes = [8, 8], strides = [1, 1]} : vector<16x32xf32> to vector<8x8xf32>
    %84 = vector.extract_strided_slice %11 {offsets = [0, 16], sizes = [8, 8], strides = [1, 1]} : vector<16x32xf32> to vector<8x8xf32>
    %85 = vector.extract_strided_slice %12 {offsets = [0, 16], sizes = [8, 8], strides = [1, 1]} : vector<16x32xf32> to vector<8x8xf32>
    %86 = vector.extract_strided_slice %14 {offsets = [0, 16], sizes = [8, 8], strides = [1, 1]} : vector<16x32xf32> to vector<8x8xf32>
    %cst_56 = arith.constant dense<0.000000e+00> : vector<8x8xf32>
    %87 = tpu.matmul %83, %84, %cst_56 {dimension_numbers = #tpu.dot_dimension_numbers<[1], [1], [0], [0], [0, 0, 1, 0], [], []>} : vector<8x8xf32>, vector<8x8xf32>, vector<8x8xf32> -> vector<8x8xf32>
    %88 = vector.broadcast %16 : vector<1x8xf32> to vector<8x8xf32>
    %89 = arith.addf %87, %88 : vector<8x8xf32>
    %c0_57 = arith.constant 0 : index
    %c2_58 = arith.constant 2 : index
    %c0_59 = arith.constant 0 : index
    %c0_60 = arith.constant 0 : index
    %90 = vector.load %arg9[%c0_57, %c2_58, %c0_59, %c0_60] : memref<4x8x8x8xf32, #tpu.memory_space<vmem>>, vector<1x1x8x8xf32>
    %91 = vector.shape_cast %90 : vector<1x1x8x8xf32> to vector<8x8xf32>
    %92 = vector.shape_cast %89 : vector<8x8xf32> to vector<1x1x8x8xf32>
    tpu.vector_store %arg9[%c0_57, %c2_58, %c0_59, %c0_60], %92 {strides = array<i32>} : memref<4x8x8x8xf32, #tpu.memory_space<vmem>>, vector<1x1x8x8xf32>,
    %cst_61 = arith.constant dense<0.000000e+00> : vector<8x8xf32>
    %93 = tpu.matmul %83, %83, %cst_61 {dimension_numbers = #tpu.dot_dimension_numbers<[1], [1], [0], [0], [0, 0, 1, 0], [], []>} : vector<8x8xf32>, vector<8x8xf32>, vector<8x8xf32> -> vector<8x8xf32>
    %c1_62 = arith.constant 1 : index
    %c2_63 = arith.constant 2 : index
    %c0_64 = arith.constant 0 : index
    %c0_65 = arith.constant 0 : index
    %94 = vector.load %arg9[%c1_62, %c2_63, %c0_64, %c0_65] : memref<4x8x8x8xf32, #tpu.memory_space<vmem>>, vector<1x1x8x8xf32>
    %95 = vector.shape_cast %94 : vector<1x1x8x8xf32> to vector<8x8xf32>
    %96 = vector.shape_cast %93 : vector<8x8xf32> to vector<1x1x8x8xf32>
    tpu.vector_store %arg9[%c1_62, %c2_63, %c0_64, %c0_65], %96 {strides = array<i32>} : memref<4x8x8x8xf32, #tpu.memory_space<vmem>>, vector<1x1x8x8xf32>,
    %cst_66 = arith.constant dense<0.000000e+00> : vector<8x8xf32>
    %97 = tpu.matmul %84, %84, %cst_66 {dimension_numbers = #tpu.dot_dimension_numbers<[1], [1], [0], [0], [0, 0, 1, 0], [], []>} : vector<8x8xf32>, vector<8x8xf32>, vector<8x8xf32> -> vector<8x8xf32>
    %c2_67 = arith.constant 2 : index
    %c2_68 = arith.constant 2 : index
    %c0_69 = arith.constant 0 : index
    %c0_70 = arith.constant 0 : index
    %98 = vector.load %arg9[%c2_67, %c2_68, %c0_69, %c0_70] : memref<4x8x8x8xf32, #tpu.memory_space<vmem>>, vector<1x1x8x8xf32>
    %99 = vector.shape_cast %98 : vector<1x1x8x8xf32> to vector<8x8xf32>
    %100 = vector.shape_cast %97 : vector<8x8xf32> to vector<1x1x8x8xf32>
    tpu.vector_store %arg9[%c2_67, %c2_68, %c0_69, %c0_70], %100 {strides = array<i32>} : memref<4x8x8x8xf32, #tpu.memory_space<vmem>>, vector<1x1x8x8xf32>,
    %cst_71 = arith.constant dense<0.000000e+00> : vector<8x8xf32>
    %101 = tpu.matmul %86, %86, %cst_71 {dimension_numbers = #tpu.dot_dimension_numbers<[1], [1], [0], [0], [0, 0, 1, 0], [], []>} : vector<8x8xf32>, vector<8x8xf32>, vector<8x8xf32> -> vector<8x8xf32>
    %c3_72 = arith.constant 3 : index
    %c2_73 = arith.constant 2 : index
    %c0_74 = arith.constant 0 : index
    %c0_75 = arith.constant 0 : index
    %102 = vector.load %arg9[%c3_72, %c2_73, %c0_74, %c0_75] : memref<4x8x8x8xf32, #tpu.memory_space<vmem>>, vector<1x1x8x8xf32>
    %103 = vector.shape_cast %102 : vector<1x1x8x8xf32> to vector<8x8xf32>
    %104 = vector.shape_cast %101 : vector<8x8xf32> to vector<1x1x8x8xf32>
    tpu.vector_store %arg9[%c3_72, %c2_73, %c0_74, %c0_75], %104 {strides = array<i32>} : memref<4x8x8x8xf32, #tpu.memory_space<vmem>>, vector<1x1x8x8xf32>,
    %cst_76 = arith.constant dense<0xFF800000> : vector<8xf32>
    %105 = vector.multi_reduction <maximumf>, %89, %cst_76 [1] : vector<8x8xf32> to vector<8xf32>
    %106 = vector.shape_cast %105 : vector<8xf32> to vector<8x1xf32>
    %107 = vector.broadcast %106 : vector<8x1xf32> to vector<8x8xf32>
    %108 = arith.subf %89, %107 : vector<8x8xf32>
    %109 = math.exp %108 : vector<8x8xf32>
    %cst_77 = arith.constant dense<0.000000e+00> : vector<8xf32>
    %110 = vector.multi_reduction <add>, %109, %cst_77 [1] : vector<8x8xf32> to vector<8xf32>
    %111 = vector.shape_cast %110 : vector<8xf32> to vector<8x1xf32>
    %112 = vector.broadcast %111 : vector<8x1xf32> to vector<8x8xf32>
    %113 = arith.divf %109, %112 : vector<8x8xf32>
    %cst_78 = arith.constant dense<0.000000e+00> : vector<8x8xf32>
    %114 = tpu.matmul %113, %85, %cst_78 {dimension_numbers = #tpu.dot_dimension_numbers<[1], [0], [0], [1], [0, 0, 1, 1], [], []>} : vector<8x8xf32>, vector<8x8xf32>, vector<8x8xf32> -> vector<8x8xf32>
    %c0_79 = arith.constant 0 : index
    %c16 = arith.constant 16 : index
    %115 = vector.load %arg10[%c0_79, %c16] : memref<16x32xf32, #tpu.memory_space<vmem>>, vector<8x8xf32>
    tpu.vector_store %arg10[%c0_79, %c16], %114 {strides = array<i32>} : memref<16x32xf32, #tpu.memory_space<vmem>>, vector<8x8xf32>,
    %116 = vector.extract_strided_slice %8 {offsets = [0, 24], sizes = [8, 8], strides = [1, 1]} : vector<16x32xf32> to vector<8x8xf32>
    %117 = vector.extract_strided_slice %11 {offsets = [0, 24], sizes = [8, 8], strides = [1, 1]} : vector<16x32xf32> to vector<8x8xf32>
    %118 = vector.extract_strided_slice %12 {offsets = [0, 24], sizes = [8, 8], strides = [1, 1]} : vector<16x32xf32> to vector<8x8xf32>
    %119 = vector.extract_strided_slice %14 {offsets = [0, 24], sizes = [8, 8], strides = [1, 1]} : vector<16x32xf32> to vector<8x8xf32>
    %cst_80 = arith.constant dense<0.000000e+00> : vector<8x8xf32>
    %120 = tpu.matmul %116, %117, %cst_80 {dimension_numbers = #tpu.dot_dimension_numbers<[1], [1], [0], [0], [0, 0, 1, 0], [], []>} : vector<8x8xf32>, vector<8x8xf32>, vector<8x8xf32> -> vector<8x8xf32>
    %121 = vector.broadcast %16 : vector<1x8xf32> to vector<8x8xf32>
    %122 = arith.addf %120, %121 : vector<8x8xf32>
    %c0_81 = arith.constant 0 : index
    %c3_82 = arith.constant 3 : index
    %c0_83 = arith.constant 0 : index
    %c0_84 = arith.constant 0 : index
    %123 = vector.load %arg9[%c0_81, %c3_82, %c0_83, %c0_84] : memref<4x8x8x8xf32, #tpu.memory_space<vmem>>, vector<1x1x8x8xf32>
    %124 = vector.shape_cast %123 : vector<1x1x8x8xf32> to vector<8x8xf32>
    %125 = vector.shape_cast %122 : vector<8x8xf32> to vector<1x1x8x8xf32>
    tpu.vector_store %arg9[%c0_81, %c3_82, %c0_83, %c0_84], %125 {strides = array<i32>} : memref<4x8x8x8xf32, #tpu.memory_space<vmem>>, vector<1x1x8x8xf32>,
    %cst_85 = arith.constant dense<0.000000e+00> : vector<8x8xf32>
    %126 = tpu.matmul %116, %116, %cst_85 {dimension_numbers = #tpu.dot_dimension_numbers<[1], [1], [0], [0], [0, 0, 1, 0], [], []>} : vector<8x8xf32>, vector<8x8xf32>, vector<8x8xf32> -> vector<8x8xf32>
    %c1_86 = arith.constant 1 : index
    %c3_87 = arith.constant 3 : index
    %c0_88 = arith.constant 0 : index
    %c0_89 = arith.constant 0 : index
    %127 = vector.load %arg9[%c1_86, %c3_87, %c0_88, %c0_89] : memref<4x8x8x8xf32, #tpu.memory_space<vmem>>, vector<1x1x8x8xf32>
    %128 = vector.shape_cast %127 : vector<1x1x8x8xf32> to vector<8x8xf32>
    %129 = vector.shape_cast %126 : vector<8x8xf32> to vector<1x1x8x8xf32>
    tpu.vector_store %arg9[%c1_86, %c3_87, %c0_88, %c0_89], %129 {strides = array<i32>} : memref<4x8x8x8xf32, #tpu.memory_space<vmem>>, vector<1x1x8x8xf32>,
    %cst_90 = arith.constant dense<0.000000e+00> : vector<8x8xf32>
    %130 = tpu.matmul %117, %117, %cst_90 {dimension_numbers = #tpu.dot_dimension_numbers<[1], [1], [0], [0], [0, 0, 1, 0], [], []>} : vector<8x8xf32>, vector<8x8xf32>, vector<8x8xf32> -> vector<8x8xf32>
    %c2_91 = arith.constant 2 : index
    %c3_92 = arith.constant 3 : index
    %c0_93 = arith.constant 0 : index
    %c0_94 = arith.constant 0 : index
    %131 = vector.load %arg9[%c2_91, %c3_92, %c0_93, %c0_94] : memref<4x8x8x8xf32, #tpu.memory_space<vmem>>, vector<1x1x8x8xf32>
    %132 = vector.shape_cast %131 : vector<1x1x8x8xf32> to vector<8x8xf32>
    %133 = vector.shape_cast %130 : vector<8x8xf32> to vector<1x1x8x8xf32>
    tpu.vector_store %arg9[%c2_91, %c3_92, %c0_93, %c0_94], %133 {strides = array<i32>} : memref<4x8x8x8xf32, #tpu.memory_space<vmem>>, vector<1x1x8x8xf32>,
    %cst_95 = arith.constant dense<0.000000e+00> : vector<8x8xf32>
    %134 = tpu.matmul %119, %119, %cst_95 {dimension_numbers = #tpu.dot_dimension_numbers<[1], [1], [0], [0], [0, 0, 1, 0], [], []>} : vector<8x8xf32>, vector<8x8xf32>, vector<8x8xf32> -> vector<8x8xf32>
    %c3_96 = arith.constant 3 : index
    %c3_97 = arith.constant 3 : index
    %c0_98 = arith.constant 0 : index
    %c0_99 = arith.constant 0 : index
    %135 = vector.load %arg9[%c3_96, %c3_97, %c0_98, %c0_99] : memref<4x8x8x8xf32, #tpu.memory_space<vmem>>, vector<1x1x8x8xf32>
    %136 = vector.shape_cast %135 : vector<1x1x8x8xf32> to vector<8x8xf32>
    %137 = vector.shape_cast %134 : vector<8x8xf32> to vector<1x1x8x8xf32>
    tpu.vector_store %arg9[%c3_96, %c3_97, %c0_98, %c0_99], %137 {strides = array<i32>} : memref<4x8x8x8xf32, #tpu.memory_space<vmem>>, vector<1x1x8x8xf32>,
    %cst_100 = arith.constant dense<0xFF800000> : vector<8xf32>
    %138 = vector.multi_reduction <maximumf>, %122, %cst_100 [1] : vector<8x8xf32> to vector<8xf32>
    %139 = vector.shape_cast %138 : vector<8xf32> to vector<8x1xf32>
    %140 = vector.broadcast %139 : vector<8x1xf32> to vector<8x8xf32>
    %141 = arith.subf %122, %140 : vector<8x8xf32>
    %142 = math.exp %141 : vector<8x8xf32>
    %cst_101 = arith.constant dense<0.000000e+00> : vector<8xf32>
    %143 = vector.multi_reduction <add>, %142, %cst_101 [1] : vector<8x8xf32> to vector<8xf32>
    %144 = vector.shape_cast %143 : vector<8xf32> to vector<8x1xf32>
    %145 = vector.broadcast %144 : vector<8x1xf32> to vector<8x8xf32>
    %146 = arith.divf %142, %145 : vector<8x8xf32>
    %cst_102 = arith.constant dense<0.000000e+00> : vector<8x8xf32>
    %147 = tpu.matmul %146, %118, %cst_102 {dimension_numbers = #tpu.dot_dimension_numbers<[1], [0], [0], [1], [0, 0, 1, 1], [], []>} : vector<8x8xf32>, vector<8x8xf32>, vector<8x8xf32> -> vector<8x8xf32>
    %c0_103 = arith.constant 0 : index
    %c24 = arith.constant 24 : index
    %148 = vector.load %arg10[%c0_103, %c24] : memref<16x32xf32, #tpu.memory_space<vmem>>, vector<8x8xf32>
    tpu.vector_store %arg10[%c0_103, %c24], %147 {strides = array<i32>} : memref<16x32xf32, #tpu.memory_space<vmem>>, vector<8x8xf32>,
    %149 = vector.extract_strided_slice %15 {offsets = [1, 0], sizes = [1, 8], strides = [1, 1]} : vector<2x8xf32> to vector<1x8xf32>
    %150 = vector.extract_strided_slice %8 {offsets = [8, 0], sizes = [8, 8], strides = [1, 1]} : vector<16x32xf32> to vector<8x8xf32>
    %151 = vector.extract_strided_slice %11 {offsets = [8, 0], sizes = [8, 8], strides = [1, 1]} : vector<16x32xf32> to vector<8x8xf32>
    %152 = vector.extract_strided_slice %12 {offsets = [8, 0], sizes = [8, 8], strides = [1, 1]} : vector<16x32xf32> to vector<8x8xf32>
    %153 = vector.extract_strided_slice %14 {offsets = [8, 0], sizes = [8, 8], strides = [1, 1]} : vector<16x32xf32> to vector<8x8xf32>
    %cst_104 = arith.constant dense<0.000000e+00> : vector<8x8xf32>
    %154 = tpu.matmul %150, %151, %cst_104 {dimension_numbers = #tpu.dot_dimension_numbers<[1], [1], [0], [0], [0, 0, 1, 0], [], []>} : vector<8x8xf32>, vector<8x8xf32>, vector<8x8xf32> -> vector<8x8xf32>
    %155 = vector.broadcast %149 : vector<1x8xf32> to vector<8x8xf32>
    %156 = arith.addf %154, %155 : vector<8x8xf32>
    %c0_105 = arith.constant 0 : index
    %c4 = arith.constant 4 : index
    %c0_106 = arith.constant 0 : index
    %c0_107 = arith.constant 0 : index
    %157 = vector.load %arg9[%c0_105, %c4, %c0_106, %c0_107] : memref<4x8x8x8xf32, #tpu.memory_space<vmem>>, vector<1x1x8x8xf32>
    %158 = vector.shape_cast %157 : vector<1x1x8x8xf32> to vector<8x8xf32>
    %159 = vector.shape_cast %156 : vector<8x8xf32> to vector<1x1x8x8xf32>
    tpu.vector_store %arg9[%c0_105, %c4, %c0_106, %c0_107], %159 {strides = array<i32>} : memref<4x8x8x8xf32, #tpu.memory_space<vmem>>, vector<1x1x8x8xf32>,
    %cst_108 = arith.constant dense<0.000000e+00> : vector<8x8xf32>
    %160 = tpu.matmul %150, %150, %cst_108 {dimension_numbers = #tpu.dot_dimension_numbers<[1], [1], [0], [0], [0, 0, 1, 0], [], []>} : vector<8x8xf32>, vector<8x8xf32>, vector<8x8xf32> -> vector<8x8xf32>
    %c1_109 = arith.constant 1 : index
    %c4_110 = arith.constant 4 : index
    %c0_111 = arith.constant 0 : index
    %c0_112 = arith.constant 0 : index
    %161 = vector.load %arg9[%c1_109, %c4_110, %c0_111, %c0_112] : memref<4x8x8x8xf32, #tpu.memory_space<vmem>>, vector<1x1x8x8xf32>
    %162 = vector.shape_cast %161 : vector<1x1x8x8xf32> to vector<8x8xf32>
    %163 = vector.shape_cast %160 : vector<8x8xf32> to vector<1x1x8x8xf32>
    tpu.vector_store %arg9[%c1_109, %c4_110, %c0_111, %c0_112], %163 {strides = array<i32>} : memref<4x8x8x8xf32, #tpu.memory_space<vmem>>, vector<1x1x8x8xf32>,
    %cst_113 = arith.constant dense<0.000000e+00> : vector<8x8xf32>
    %164 = tpu.matmul %151, %151, %cst_113 {dimension_numbers = #tpu.dot_dimension_numbers<[1], [1], [0], [0], [0, 0, 1, 0], [], []>} : vector<8x8xf32>, vector<8x8xf32>, vector<8x8xf32> -> vector<8x8xf32>
    %c2_114 = arith.constant 2 : index
    %c4_115 = arith.constant 4 : index
    %c0_116 = arith.constant 0 : index
    %c0_117 = arith.constant 0 : index
    %165 = vector.load %arg9[%c2_114, %c4_115, %c0_116, %c0_117] : memref<4x8x8x8xf32, #tpu.memory_space<vmem>>, vector<1x1x8x8xf32>
    %166 = vector.shape_cast %165 : vector<1x1x8x8xf32> to vector<8x8xf32>
    %167 = vector.shape_cast %164 : vector<8x8xf32> to vector<1x1x8x8xf32>
    tpu.vector_store %arg9[%c2_114, %c4_115, %c0_116, %c0_117], %167 {strides = array<i32>} : memref<4x8x8x8xf32, #tpu.memory_space<vmem>>, vector<1x1x8x8xf32>,
    %cst_118 = arith.constant dense<0.000000e+00> : vector<8x8xf32>
    %168 = tpu.matmul %153, %153, %cst_118 {dimension_numbers = #tpu.dot_dimension_numbers<[1], [1], [0], [0], [0, 0, 1, 0], [], []>} : vector<8x8xf32>, vector<8x8xf32>, vector<8x8xf32> -> vector<8x8xf32>
    %c3_119 = arith.constant 3 : index
    %c4_120 = arith.constant 4 : index
    %c0_121 = arith.constant 0 : index
    %c0_122 = arith.constant 0 : index
    %169 = vector.load %arg9[%c3_119, %c4_120, %c0_121, %c0_122] : memref<4x8x8x8xf32, #tpu.memory_space<vmem>>, vector<1x1x8x8xf32>
    %170 = vector.shape_cast %169 : vector<1x1x8x8xf32> to vector<8x8xf32>
    %171 = vector.shape_cast %168 : vector<8x8xf32> to vector<1x1x8x8xf32>
    tpu.vector_store %arg9[%c3_119, %c4_120, %c0_121, %c0_122], %171 {strides = array<i32>} : memref<4x8x8x8xf32, #tpu.memory_space<vmem>>, vector<1x1x8x8xf32>,
    %cst_123 = arith.constant dense<0xFF800000> : vector<8xf32>
    %172 = vector.multi_reduction <maximumf>, %156, %cst_123 [1] : vector<8x8xf32> to vector<8xf32>
    %173 = vector.shape_cast %172 : vector<8xf32> to vector<8x1xf32>
    %174 = vector.broadcast %173 : vector<8x1xf32> to vector<8x8xf32>
    %175 = arith.subf %156, %174 : vector<8x8xf32>
    %176 = math.exp %175 : vector<8x8xf32>
    %cst_124 = arith.constant dense<0.000000e+00> : vector<8xf32>
    %177 = vector.multi_reduction <add>, %176, %cst_124 [1] : vector<8x8xf32> to vector<8xf32>
    %178 = vector.shape_cast %177 : vector<8xf32> to vector<8x1xf32>
    %179 = vector.broadcast %178 : vector<8x1xf32> to vector<8x8xf32>
    %180 = arith.divf %176, %179 : vector<8x8xf32>
    %cst_125 = arith.constant dense<0.000000e+00> : vector<8x8xf32>
    %181 = tpu.matmul %180, %152, %cst_125 {dimension_numbers = #tpu.dot_dimension_numbers<[1], [0], [0], [1], [0, 0, 1, 1], [], []>} : vector<8x8xf32>, vector<8x8xf32>, vector<8x8xf32> -> vector<8x8xf32>
    %c8_126 = arith.constant 8 : index
    %c0_127 = arith.constant 0 : index
    %182 = vector.load %arg10[%c8_126, %c0_127] : memref<16x32xf32, #tpu.memory_space<vmem>>, vector<8x8xf32>
    tpu.vector_store %arg10[%c8_126, %c0_127], %181 {strides = array<i32>} : memref<16x32xf32, #tpu.memory_space<vmem>>, vector<8x8xf32>,
    %183 = vector.extract_strided_slice %8 {offsets = [8, 8], sizes = [8, 8], strides = [1, 1]} : vector<16x32xf32> to vector<8x8xf32>
    %184 = vector.extract_strided_slice %11 {offsets = [8, 8], sizes = [8, 8], strides = [1, 1]} : vector<16x32xf32> to vector<8x8xf32>
    %185 = vector.extract_strided_slice %12 {offsets = [8, 8], sizes = [8, 8], strides = [1, 1]} : vector<16x32xf32> to vector<8x8xf32>
    %186 = vector.extract_strided_slice %14 {offsets = [8, 8], sizes = [8, 8], strides = [1, 1]} : vector<16x32xf32> to vector<8x8xf32>
    %cst_128 = arith.constant dense<0.000000e+00> : vector<8x8xf32>
    %187 = tpu.matmul %183, %184, %cst_128 {dimension_numbers = #tpu.dot_dimension_numbers<[1], [1], [0], [0], [0, 0, 1, 0], [], []>} : vector<8x8xf32>, vector<8x8xf32>, vector<8x8xf32> -> vector<8x8xf32>
    %188 = vector.broadcast %149 : vector<1x8xf32> to vector<8x8xf32>
    %189 = arith.addf %187, %188 : vector<8x8xf32>
    %c0_129 = arith.constant 0 : index
    %c5 = arith.constant 5 : index
    %c0_130 = arith.constant 0 : index
    %c0_131 = arith.constant 0 : index
    %190 = vector.load %arg9[%c0_129, %c5, %c0_130, %c0_131] : memref<4x8x8x8xf32, #tpu.memory_space<vmem>>, vector<1x1x8x8xf32>
    %191 = vector.shape_cast %190 : vector<1x1x8x8xf32> to vector<8x8xf32>
    %192 = vector.shape_cast %189 : vector<8x8xf32> to vector<1x1x8x8xf32>
    tpu.vector_store %arg9[%c0_129, %c5, %c0_130, %c0_131], %192 {strides = array<i32>} : memref<4x8x8x8xf32, #tpu.memory_space<vmem>>, vector<1x1x8x8xf32>,
    %cst_132 = arith.constant dense<0.000000e+00> : vector<8x8xf32>
    %193 = tpu.matmul %183, %183, %cst_132 {dimension_numbers = #tpu.dot_dimension_numbers<[1], [1], [0], [0], [0, 0, 1, 0], [], []>} : vector<8x8xf32>, vector<8x8xf32>, vector<8x8xf32> -> vector<8x8xf32>
    %c1_133 = arith.constant 1 : index
    %c5_134 = arith.constant 5 : index
    %c0_135 = arith.constant 0 : index
    %c0_136 = arith.constant 0 : index
    %194 = vector.load %arg9[%c1_133, %c5_134, %c0_135, %c0_136] : memref<4x8x8x8xf32, #tpu.memory_space<vmem>>, vector<1x1x8x8xf32>
    %195 = vector.shape_cast %194 : vector<1x1x8x8xf32> to vector<8x8xf32>
    %196 = vector.shape_cast %193 : vector<8x8xf32> to vector<1x1x8x8xf32>
    tpu.vector_store %arg9[%c1_133, %c5_134, %c0_135, %c0_136], %196 {strides = array<i32>} : memref<4x8x8x8xf32, #tpu.memory_space<vmem>>, vector<1x1x8x8xf32>,
    %cst_137 = arith.constant dense<0.000000e+00> : vector<8x8xf32>
    %197 = tpu.matmul %184, %184, %cst_137 {dimension_numbers = #tpu.dot_dimension_numbers<[1], [1], [0], [0], [0, 0, 1, 0], [], []>} : vector<8x8xf32>, vector<8x8xf32>, vector<8x8xf32> -> vector<8x8xf32>
    %c2_138 = arith.constant 2 : index
    %c5_139 = arith.constant 5 : index
    %c0_140 = arith.constant 0 : index
    %c0_141 = arith.constant 0 : index
    %198 = vector.load %arg9[%c2_138, %c5_139, %c0_140, %c0_141] : memref<4x8x8x8xf32, #tpu.memory_space<vmem>>, vector<1x1x8x8xf32>
    %199 = vector.shape_cast %198 : vector<1x1x8x8xf32> to vector<8x8xf32>
    %200 = vector.shape_cast %197 : vector<8x8xf32> to vector<1x1x8x8xf32>
    tpu.vector_store %arg9[%c2_138, %c5_139, %c0_140, %c0_141], %200 {strides = array<i32>} : memref<4x8x8x8xf32, #tpu.memory_space<vmem>>, vector<1x1x8x8xf32>,
    %cst_142 = arith.constant dense<0.000000e+00> : vector<8x8xf32>
    %201 = tpu.matmul %186, %186, %cst_142 {dimension_numbers = #tpu.dot_dimension_numbers<[1], [1], [0], [0], [0, 0, 1, 0], [], []>} : vector<8x8xf32>, vector<8x8xf32>, vector<8x8xf32> -> vector<8x8xf32>
    %c3_143 = arith.constant 3 : index
    %c5_144 = arith.constant 5 : index
    %c0_145 = arith.constant 0 : index
    %c0_146 = arith.constant 0 : index
    %202 = vector.load %arg9[%c3_143, %c5_144, %c0_145, %c0_146] : memref<4x8x8x8xf32, #tpu.memory_space<vmem>>, vector<1x1x8x8xf32>
    %203 = vector.shape_cast %202 : vector<1x1x8x8xf32> to vector<8x8xf32>
    %204 = vector.shape_cast %201 : vector<8x8xf32> to vector<1x1x8x8xf32>
    tpu.vector_store %arg9[%c3_143, %c5_144, %c0_145, %c0_146], %204 {strides = array<i32>} : memref<4x8x8x8xf32, #tpu.memory_space<vmem>>, vector<1x1x8x8xf32>,
    %cst_147 = arith.constant dense<0xFF800000> : vector<8xf32>
    %205 = vector.multi_reduction <maximumf>, %189, %cst_147 [1] : vector<8x8xf32> to vector<8xf32>
    %206 = vector.shape_cast %205 : vector<8xf32> to vector<8x1xf32>
    %207 = vector.broadcast %206 : vector<8x1xf32> to vector<8x8xf32>
    %208 = arith.subf %189, %207 : vector<8x8xf32>
    %209 = math.exp %208 : vector<8x8xf32>
    %cst_148 = arith.constant dense<0.000000e+00> : vector<8xf32>
    %210 = vector.multi_reduction <add>, %209, %cst_148 [1] : vector<8x8xf32> to vector<8xf32>
    %211 = vector.shape_cast %210 : vector<8xf32> to vector<8x1xf32>
    %212 = vector.broadcast %211 : vector<8x1xf32> to vector<8x8xf32>
    %213 = arith.divf %209, %212 : vector<8x8xf32>
    %cst_149 = arith.constant dense<0.000000e+00> : vector<8x8xf32>
    %214 = tpu.matmul %213, %185, %cst_149 {dimension_numbers = #tpu.dot_dimension_numbers<[1], [0], [0], [1], [0, 0, 1, 1], [], []>} : vector<8x8xf32>, vector<8x8xf32>, vector<8x8xf32> -> vector<8x8xf32>
    %c8_150 = arith.constant 8 : index
    %c8_151 = arith.constant 8 : index
    %215 = vector.load %arg10[%c8_150, %c8_151] : memref<16x32xf32, #tpu.memory_space<vmem>>, vector<8x8xf32>
    tpu.vector_store %arg10[%c8_150, %c8_151], %214 {strides = array<i32>} : memref<16x32xf32, #tpu.memory_space<vmem>>, vector<8x8xf32>,
    %216 = vector.extract_strided_slice %8 {offsets = [8, 16], sizes = [8, 8], strides = [1, 1]} : vector<16x32xf32> to vector<8x8xf32>
    %217 = vector.extract_strided_slice %11 {offsets = [8, 16], sizes = [8, 8], strides = [1, 1]} : vector<16x32xf32> to vector<8x8xf32>
    %218 = vector.extract_strided_slice %12 {offsets = [8, 16], sizes = [8, 8], strides = [1, 1]} : vector<16x32xf32> to vector<8x8xf32>
    %219 = vector.extract_strided_slice %14 {offsets = [8, 16], sizes = [8, 8], strides = [1, 1]} : vector<16x32xf32> to vector<8x8xf32>
    %cst_152 = arith.constant dense<0.000000e+00> : vector<8x8xf32>
    %220 = tpu.matmul %216, %217, %cst_152 {dimension_numbers = #tpu.dot_dimension_numbers<[1], [1], [0], [0], [0, 0, 1, 0], [], []>} : vector<8x8xf32>, vector<8x8xf32>, vector<8x8xf32> -> vector<8x8xf32>
    %221 = vector.broadcast %149 : vector<1x8xf32> to vector<8x8xf32>
    %222 = arith.addf %220, %221 : vector<8x8xf32>
    %c0_153 = arith.constant 0 : index
    %c6 = arith.constant 6 : index
    %c0_154 = arith.constant 0 : index
    %c0_155 = arith.constant 0 : index
    %223 = vector.load %arg9[%c0_153, %c6, %c0_154, %c0_155] : memref<4x8x8x8xf32, #tpu.memory_space<vmem>>, vector<1x1x8x8xf32>
    %224 = vector.shape_cast %223 : vector<1x1x8x8xf32> to vector<8x8xf32>
    %225 = vector.shape_cast %222 : vector<8x8xf32> to vector<1x1x8x8xf32>
    tpu.vector_store %arg9[%c0_153, %c6, %c0_154, %c0_155], %225 {strides = array<i32>} : memref<4x8x8x8xf32, #tpu.memory_space<vmem>>, vector<1x1x8x8xf32>,
    %cst_156 = arith.constant dense<0.000000e+00> : vector<8x8xf32>
    %226 = tpu.matmul %216, %216, %cst_156 {dimension_numbers = #tpu.dot_dimension_numbers<[1], [1], [0], [0], [0, 0, 1, 0], [], []>} : vector<8x8xf32>, vector<8x8xf32>, vector<8x8xf32> -> vector<8x8xf32>
    %c1_157 = arith.constant 1 : index
    %c6_158 = arith.constant 6 : index
    %c0_159 = arith.constant 0 : index
    %c0_160 = arith.constant 0 : index
    %227 = vector.load %arg9[%c1_157, %c6_158, %c0_159, %c0_160] : memref<4x8x8x8xf32, #tpu.memory_space<vmem>>, vector<1x1x8x8xf32>
    %228 = vector.shape_cast %227 : vector<1x1x8x8xf32> to vector<8x8xf32>
    %229 = vector.shape_cast %226 : vector<8x8xf32> to vector<1x1x8x8xf32>
    tpu.vector_store %arg9[%c1_157, %c6_158, %c0_159, %c0_160], %229 {strides = array<i32>} : memref<4x8x8x8xf32, #tpu.memory_space<vmem>>, vector<1x1x8x8xf32>,
    %cst_161 = arith.constant dense<0.000000e+00> : vector<8x8xf32>
    %230 = tpu.matmul %217, %217, %cst_161 {dimension_numbers = #tpu.dot_dimension_numbers<[1], [1], [0], [0], [0, 0, 1, 0], [], []>} : vector<8x8xf32>, vector<8x8xf32>, vector<8x8xf32> -> vector<8x8xf32>
    %c2_162 = arith.constant 2 : index
    %c6_163 = arith.constant 6 : index
    %c0_164 = arith.constant 0 : index
    %c0_165 = arith.constant 0 : index
    %231 = vector.load %arg9[%c2_162, %c6_163, %c0_164, %c0_165] : memref<4x8x8x8xf32, #tpu.memory_space<vmem>>, vector<1x1x8x8xf32>
    %232 = vector.shape_cast %231 : vector<1x1x8x8xf32> to vector<8x8xf32>
    %233 = vector.shape_cast %230 : vector<8x8xf32> to vector<1x1x8x8xf32>
    tpu.vector_store %arg9[%c2_162, %c6_163, %c0_164, %c0_165], %233 {strides = array<i32>} : memref<4x8x8x8xf32, #tpu.memory_space<vmem>>, vector<1x1x8x8xf32>,
    %cst_166 = arith.constant dense<0.000000e+00> : vector<8x8xf32>
    %234 = tpu.matmul %219, %219, %cst_166 {dimension_numbers = #tpu.dot_dimension_numbers<[1], [1], [0], [0], [0, 0, 1, 0], [], []>} : vector<8x8xf32>, vector<8x8xf32>, vector<8x8xf32> -> vector<8x8xf32>
    %c3_167 = arith.constant 3 : index
    %c6_168 = arith.constant 6 : index
    %c0_169 = arith.constant 0 : index
    %c0_170 = arith.constant 0 : index
    %235 = vector.load %arg9[%c3_167, %c6_168, %c0_169, %c0_170] : memref<4x8x8x8xf32, #tpu.memory_space<vmem>>, vector<1x1x8x8xf32>
    %236 = vector.shape_cast %235 : vector<1x1x8x8xf32> to vector<8x8xf32>
    %237 = vector.shape_cast %234 : vector<8x8xf32> to vector<1x1x8x8xf32>
    tpu.vector_store %arg9[%c3_167, %c6_168, %c0_169, %c0_170], %237 {strides = array<i32>} : memref<4x8x8x8xf32, #tpu.memory_space<vmem>>, vector<1x1x8x8xf32>,
    %cst_171 = arith.constant dense<0xFF800000> : vector<8xf32>
    %238 = vector.multi_reduction <maximumf>, %222, %cst_171 [1] : vector<8x8xf32> to vector<8xf32>
    %239 = vector.shape_cast %238 : vector<8xf32> to vector<8x1xf32>
    %240 = vector.broadcast %239 : vector<8x1xf32> to vector<8x8xf32>
    %241 = arith.subf %222, %240 : vector<8x8xf32>
    %242 = math.exp %241 : vector<8x8xf32>
    %cst_172 = arith.constant dense<0.000000e+00> : vector<8xf32>
    %243 = vector.multi_reduction <add>, %242, %cst_172 [1] : vector<8x8xf32> to vector<8xf32>
    %244 = vector.shape_cast %243 : vector<8xf32> to vector<8x1xf32>
    %245 = vector.broadcast %244 : vector<8x1xf32> to vector<8x8xf32>
    %246 = arith.divf %242, %245 : vector<8x8xf32>
    %cst_173 = arith.constant dense<0.000000e+00> : vector<8x8xf32>
    %247 = tpu.matmul %246, %218, %cst_173 {dimension_numbers = #tpu.dot_dimension_numbers<[1], [0], [0], [1], [0, 0, 1, 1], [], []>} : vector<8x8xf32>, vector<8x8xf32>, vector<8x8xf32> -> vector<8x8xf32>
    %c8_174 = arith.constant 8 : index
    %c16_175 = arith.constant 16 : index
    %248 = vector.load %arg10[%c8_174, %c16_175] : memref<16x32xf32, #tpu.memory_space<vmem>>, vector<8x8xf32>
    tpu.vector_store %arg10[%c8_174, %c16_175], %247 {strides = array<i32>} : memref<16x32xf32, #tpu.memory_space<vmem>>, vector<8x8xf32>,
    %249 = vector.extract_strided_slice %8 {offsets = [8, 24], sizes = [8, 8], strides = [1, 1]} : vector<16x32xf32> to vector<8x8xf32>
    %250 = vector.extract_strided_slice %11 {offsets = [8, 24], sizes = [8, 8], strides = [1, 1]} : vector<16x32xf32> to vector<8x8xf32>
    %251 = vector.extract_strided_slice %12 {offsets = [8, 24], sizes = [8, 8], strides = [1, 1]} : vector<16x32xf32> to vector<8x8xf32>
    %252 = vector.extract_strided_slice %14 {offsets = [8, 24], sizes = [8, 8], strides = [1, 1]} : vector<16x32xf32> to vector<8x8xf32>
    %cst_176 = arith.constant dense<0.000000e+00> : vector<8x8xf32>
    %253 = tpu.matmul %249, %250, %cst_176 {dimension_numbers = #tpu.dot_dimension_numbers<[1], [1], [0], [0], [0, 0, 1, 0], [], []>} : vector<8x8xf32>, vector<8x8xf32>, vector<8x8xf32> -> vector<8x8xf32>
    %254 = vector.broadcast %149 : vector<1x8xf32> to vector<8x8xf32>
    %255 = arith.addf %253, %254 : vector<8x8xf32>
    %c0_177 = arith.constant 0 : index
    %c7 = arith.constant 7 : index
    %c0_178 = arith.constant 0 : index
    %c0_179 = arith.constant 0 : index
    %256 = vector.load %arg9[%c0_177, %c7, %c0_178, %c0_179] : memref<4x8x8x8xf32, #tpu.memory_space<vmem>>, vector<1x1x8x8xf32>
    %257 = vector.shape_cast %256 : vector<1x1x8x8xf32> to vector<8x8xf32>
    %258 = vector.shape_cast %255 : vector<8x8xf32> to vector<1x1x8x8xf32>
    tpu.vector_store %arg9[%c0_177, %c7, %c0_178, %c0_179], %258 {strides = array<i32>} : memref<4x8x8x8xf32, #tpu.memory_space<vmem>>, vector<1x1x8x8xf32>,
    %cst_180 = arith.constant dense<0.000000e+00> : vector<8x8xf32>
    %259 = tpu.matmul %249, %249, %cst_180 {dimension_numbers = #tpu.dot_dimension_numbers<[1], [1], [0], [0], [0, 0, 1, 0], [], []>} : vector<8x8xf32>, vector<8x8xf32>, vector<8x8xf32> -> vector<8x8xf32>
    %c1_181 = arith.constant 1 : index
    %c7_182 = arith.constant 7 : index
    %c0_183 = arith.constant 0 : index
    %c0_184 = arith.constant 0 : index
    %260 = vector.load %arg9[%c1_181, %c7_182, %c0_183, %c0_184] : memref<4x8x8x8xf32, #tpu.memory_space<vmem>>, vector<1x1x8x8xf32>
    %261 = vector.shape_cast %260 : vector<1x1x8x8xf32> to vector<8x8xf32>
    %262 = vector.shape_cast %259 : vector<8x8xf32> to vector<1x1x8x8xf32>
    tpu.vector_store %arg9[%c1_181, %c7_182, %c0_183, %c0_184], %262 {strides = array<i32>} : memref<4x8x8x8xf32, #tpu.memory_space<vmem>>, vector<1x1x8x8xf32>,
    %cst_185 = arith.constant dense<0.000000e+00> : vector<8x8xf32>
    %263 = tpu.matmul %250, %250, %cst_185 {dimension_numbers = #tpu.dot_dimension_numbers<[1], [1], [0], [0], [0, 0, 1, 0], [], []>} : vector<8x8xf32>, vector<8x8xf32>, vector<8x8xf32> -> vector<8x8xf32>
    %c2_186 = arith.constant 2 : index
    %c7_187 = arith.constant 7 : index
    %c0_188 = arith.constant 0 : index
    %c0_189 = arith.constant 0 : index
    %264 = vector.load %arg9[%c2_186, %c7_187, %c0_188, %c0_189] : memref<4x8x8x8xf32, #tpu.memory_space<vmem>>, vector<1x1x8x8xf32>
    %265 = vector.shape_cast %264 : vector<1x1x8x8xf32> to vector<8x8xf32>
    %266 = vector.shape_cast %263 : vector<8x8xf32> to vector<1x1x8x8xf32>
    tpu.vector_store %arg9[%c2_186, %c7_187, %c0_188, %c0_189], %266 {strides = array<i32>} : memref<4x8x8x8xf32, #tpu.memory_space<vmem>>, vector<1x1x8x8xf32>,
    %cst_190 = arith.constant dense<0.000000e+00> : vector<8x8xf32>
    %267 = tpu.matmul %252, %252, %cst_190 {dimension_numbers = #tpu.dot_dimension_numbers<[1], [1], [0], [0], [0, 0, 1, 0], [], []>} : vector<8x8xf32>, vector<8x8xf32>, vector<8x8xf32> -> vector<8x8xf32>
    %c3_191 = arith.constant 3 : index
    %c7_192 = arith.constant 7 : index
    %c0_193 = arith.constant 0 : index
    %c0_194 = arith.constant 0 : index
    %268 = vector.load %arg9[%c3_191, %c7_192, %c0_193, %c0_194] : memref<4x8x8x8xf32, #tpu.memory_space<vmem>>, vector<1x1x8x8xf32>
    %269 = vector.shape_cast %268 : vector<1x1x8x8xf32> to vector<8x8xf32>
    %270 = vector.shape_cast %267 : vector<8x8xf32> to vector<1x1x8x8xf32>
    tpu.vector_store %arg9[%c3_191, %c7_192, %c0_193, %c0_194], %270 {strides = array<i32>} : memref<4x8x8x8xf32, #tpu.memory_space<vmem>>, vector<1x1x8x8xf32>,
    %cst_195 = arith.constant dense<0xFF800000> : vector<8xf32>
    %271 = vector.multi_reduction <maximumf>, %255, %cst_195 [1] : vector<8x8xf32> to vector<8xf32>
    %272 = vector.shape_cast %271 : vector<8xf32> to vector<8x1xf32>
    %273 = vector.broadcast %272 : vector<8x1xf32> to vector<8x8xf32>
    %274 = arith.subf %255, %273 : vector<8x8xf32>
    %275 = math.exp %274 : vector<8x8xf32>
    %cst_196 = arith.constant dense<0.000000e+00> : vector<8xf32>
    %276 = vector.multi_reduction <add>, %275, %cst_196 [1] : vector<8x8xf32> to vector<8xf32>
    %277 = vector.shape_cast %276 : vector<8xf32> to vector<8x1xf32>
    %278 = vector.broadcast %277 : vector<8x1xf32> to vector<8x8xf32>
    %279 = arith.divf %275, %278 : vector<8x8xf32>
    %cst_197 = arith.constant dense<0.000000e+00> : vector<8x8xf32>
    %280 = tpu.matmul %279, %251, %cst_197 {dimension_numbers = #tpu.dot_dimension_numbers<[1], [0], [0], [1], [0, 0, 1, 1], [], []>} : vector<8x8xf32>, vector<8x8xf32>, vector<8x8xf32> -> vector<8x8xf32>
    %c8_198 = arith.constant 8 : index
    %c24_199 = arith.constant 24 : index
    %281 = vector.load %arg10[%c8_198, %c24_199] : memref<16x32xf32, #tpu.memory_space<vmem>>, vector<8x8xf32>
    tpu.vector_store %arg10[%c8_198, %c24_199], %280 {strides = array<i32>} : memref<16x32xf32, #tpu.memory_space<vmem>>, vector<8x8xf32>,
    %c0_200 = arith.constant 0 : index
    %c0_201 = arith.constant 0 : index
    %282 = vector.load %arg10[%c0_200, %c0_201] : memref<16x32xf32, #tpu.memory_space<vmem>>, vector<16x32xf32>
    %c0_202 = arith.constant 0 : index
    %c0_203 = arith.constant 0 : index
    %283 = vector.load %arg4[%c0_202, %c0_203] : memref<32x32xf32, #tpu.memory_space<vmem>>, vector<32x32xf32>
    %cst_204 = arith.constant dense<0.000000e+00> : vector<16x32xf32>
    %284 = tpu.matmul %282, %283, %cst_204 {dimension_numbers = #tpu.dot_dimension_numbers<[1], [0], [0], [1], [0, 0, 1, 1], [], []>} : vector<16x32xf32>, vector<32x32xf32>, vector<16x32xf32> -> vector<16x32xf32>
    %c0_205 = arith.constant 0 : index
    %c0_206 = arith.constant 0 : index
    %285 = vector.load %arg5[%c0_205, %c0_206] : memref<1x32xf32, #tpu.memory_space<vmem>>, vector<1x32xf32>
    %286 = vector.broadcast %285 : vector<1x32xf32> to vector<16x32xf32>
    %287 = arith.addf %284, %286 : vector<16x32xf32>
    %288 = arith.addf %287, %0 : vector<16x32xf32>
    %cst_207 = arith.constant dense<0.000000e+00> : vector<16xf32>
    %289 = vector.multi_reduction <add>, %288, %cst_207 [1] : vector<16x32xf32> to vector<16xf32>
    %290 = vector.shape_cast %289 : vector<16xf32> to vector<16x1xf32>
    %cst_208 = arith.constant 3.200000e+01 : f32
    %291 = vector.broadcast %cst_208 : f32 to vector<16x1xf32>
    %292 = arith.divf %290, %291 : vector<16x1xf32>
    %293 = vector.broadcast %292 : vector<16x1xf32> to vector<16x32xf32>
    %294 = arith.subf %288, %293 : vector<16x32xf32>
    %295 = arith.mulf %294, %294 : vector<16x32xf32>
    %cst_209 = arith.constant dense<0.000000e+00> : vector<16xf32>
    %296 = vector.multi_reduction <add>, %295, %cst_209 [1] : vector<16x32xf32> to vector<16xf32>
    %297 = vector.shape_cast %296 : vector<16xf32> to vector<16x1xf32>
    %cst_210 = arith.constant 3.200000e+01 : f32
    %298 = vector.broadcast %cst_210 : f32 to vector<16x1xf32>
    %299 = arith.divf %297, %298 : vector<16x1xf32>
    %300 = vector.broadcast %292 : vector<16x1xf32> to vector<16x32xf32>
    %301 = arith.subf %288, %300 : vector<16x32xf32>
    %cst_211 = arith.constant 9.99999996E-13 : f32
    %302 = vector.broadcast %cst_211 : f32 to vector<16x1xf32>
    %303 = arith.addf %299, %302 : vector<16x1xf32>
    %304 = math.rsqrt %303 : vector<16x1xf32>
    %305 = vector.broadcast %304 : vector<16x1xf32> to vector<16x32xf32>
    %306 = arith.mulf %301, %305 : vector<16x32xf32>
    %c0_212 = arith.constant 0 : index
    %c0_213 = arith.constant 0 : index
    %307 = vector.load %arg6[%c0_212, %c0_213] : memref<1x32xf32, #tpu.memory_space<vmem>>, vector<1x32xf32>
    %308 = vector.broadcast %307 : vector<1x32xf32> to vector<16x32xf32>
    %309 = arith.mulf %306, %308 : vector<16x32xf32>
    %c0_214 = arith.constant 0 : index
    %c0_215 = arith.constant 0 : index
    %310 = vector.load %arg7[%c0_214, %c0_215] : memref<1x32xf32, #tpu.memory_space<vmem>>, vector<1x32xf32>
    %311 = vector.broadcast %310 : vector<1x32xf32> to vector<16x32xf32>
    %312 = arith.addf %309, %311 : vector<16x32xf32>
    %c0_216 = arith.constant 0 : index
    %c0_217 = arith.constant 0 : index
    %313 = vector.load %arg8[%c0_216, %c0_217] : memref<16x32xf32, #tpu.memory_space<vmem>>, vector<16x32xf32>
    tpu.vector_store %arg8[%c0_216, %c0_217], %312 {strides = array<i32>} : memref<16x32xf32, #tpu.memory_space<vmem>>, vector<16x32xf32>,
    return
  }
}

</mosaic_0001>

<llo_original>
// kernel: tpu_custom_call.1
$region0: #{tpu_custom_call.1}
  #allocation0 [shape = 'u32[]', space=smem, size = 0x4, offset = 0x4, fixed_abs, tag = 'smem constant byte address 0x4 - core index']
  #allocation1 [shape = 'u32[144,128]{1,0:T(1,128)}', space=vmem, size = 0x12000, scoped, tag = 'internal scratch']
  #allocation2 [shape = 'f32[16,32]{1,0:T(8,128)}', space=vmem, size = 0x2000, scoped, tag = 'scratch operand']
  %s0 = inlined_call_operand.hbm [shape: f32[16,32], index: 0, kind: input, shape index: {}]
  %s1 = inlined_call_operand.hbm [shape: f32[2,8], index: 1, kind: input, shape index: {}]
  %s2 = inlined_call_operand.hbm [shape: f32[32,96], index: 2, kind: input, shape index: {}]
  %s3 = inlined_call_operand.vmem [shape: f32[1,96], index: 3, kind: input, shape index: {}]
  %s4 = inlined_call_operand.hbm [shape: f32[32,32], index: 4, kind: input, shape index: {}]
  %s5 = inlined_call_operand.vmem [shape: f32[1,32], index: 5, kind: input, shape index: {}]
  %s6 = inlined_call_operand.vmem [shape: f32[1,32], index: 6, kind: input, shape index: {}]
  %s7 = inlined_call_operand.vmem [shape: f32[1,32], index: 7, kind: input, shape index: {}]
  %s8 = inlined_call_operand.hbm [shape: f32[16,32], index: 8, kind: output, shape index: {0}]
  %s9 = inlined_call_operand.hbm [shape: f32[4,8,8,8], index: 9, kind: output, shape index: {1}]
  %10 = xla_tuple %s8, %s9
  %s11 = sld [smem:[#allocation0]]
  $region66: #{tpu_custom_call.1} parent=0
    _
  %s13 = ssub.s32 1, %s11
  %s14 = scalar_select 0, %s13, %s11
  $region1: #{tpu_custom_call.1} parent=0
    #allocation3 [shape = 'u8[8192]{0}', space=vmem, size = 0x2000, scoped, tag = 'input window, operand 0, single buffered']
    #allocation4 [shape = 's32[1]{0}', space=sflag, size = 0x4, scoped, tag = 'scoped memory for tpu_custom_call.1']
    #allocation5 [shape = 's32[1]{0}', space=sflag, size = 0x4, scoped, tag = 'scoped memory for tpu_custom_call.1']
    #allocation6 [shape = 'u8[1024]{0}', space=vmem, size = 0x400, scoped, tag = 'input window, operand 1, single buffered']
    #allocation7 [shape = 's32[1]{0}', space=sflag, size = 0x4, scoped, tag = 'scoped memory for tpu_custom_call.1']
    #allocation8 [shape = 'u8[16384]{0}', space=vmem, size = 0x4000, scoped, tag = 'input window, operand 2, single buffered']
    #allocation9 [shape = 'u8[16384]{0}', space=vmem, size = 0x4000, scoped, tag = 'input window, operand 4, single buffered']
    #allocation10 [shape = 's32[1]{0}', space=sflag, size = 0x4, scoped, tag = 'scoped memory for tpu_custom_call.1']
    #allocation11 [shape = 'u8[8192]{0}', space=vmem, size = 0x2000, scoped, tag = 'output window, operand 0, single buffered']
    #allocation12 [shape = 'u8[131072]{0}', space=vmem, size = 0x20000, scoped, tag = 'output window, operand 1, single buffered']
    #allocation13 [shape = 's32[1]{0}', space=sflag, size = 0x4, scoped, tag = 'scoped memory for tpu_custom_call.1']
    %15 = vsyncpa [#allocation4], 0
    %16 = vsyncpa [#allocation7], 0
    %17 = vsyncpa [#allocation10], 0
    %18 = vsyncpa [#allocation5], 0
    %19 = vsyncpa [#allocation13], 0
    // Predicated region
    $region2: #{tpu_custom_call.1} parent=1 // pred_check
      _
    $region3: #{tpu_custom_call.1} parent=1 // pred_check_branch
      %21 = sbr.rel (0) target = $region5
    $region4: #{tpu_custom_call.1} parent=1 // pred_region
      %s23 = ssub.s32 256, 256
      %24 = vsyncadd [#allocation4], %s23
      %s25 = sshll.u32 [#allocation3], 4
      %s26 = int_to_ptr.vmem [resolvable:$true] %s25
      %31 = dma.hbm_to_vmem [thread:$0]  %s0, 256, %s26, [#allocation4], 128, 128, 8
    $region5: #{tpu_custom_call.1} parent=1 // pred_fallthru
      _
    // Predicated region
    $region6: #{tpu_custom_call.1} parent=1 // pred_check
      _
    $region7: #{tpu_custom_call.1} parent=1 // pred_check_branch
      %33 = sbr.rel (0) target = $region9
    $region8: #{tpu_custom_call.1} parent=1 // pred_region
      %s35 = ssub.s32 32, 32
      %36 = vsyncadd [#allocation7], %s35
      %s38 = sshll.u32 [#allocation6], 4
      %s39 = int_to_ptr.vmem [resolvable:$true] %s38
      %41 = dma.hbm_to_vmem [thread:$0]  %s1, 32, %s39, [#allocation7]
    $region9: #{tpu_custom_call.1} parent=1 // pred_fallthru
      _
    // Predicated region
    $region10: #{tpu_custom_call.1} parent=1 // pred_check
      _
    $region11: #{tpu_custom_call.1} parent=1 // pred_check_branch
      %43 = sbr.rel (0) target = $region13
    $region12: #{tpu_custom_call.1} parent=1 // pred_region
      %s45 = ssub.s32 512, 512
      %46 = vsyncadd [#allocation7], %s45
      %s47 = sshll.u32 [#allocation8], 4
      %s48 = int_to_ptr.vmem [resolvable:$true] %s47
      %53 = dma.hbm_to_vmem [thread:$0]  %s2, 512, %s48, [#allocation7], 128, 128, 8
    $region13: #{tpu_custom_call.1} parent=1 // pred_fallthru
      _
    // Predicated region
    $region14: #{tpu_custom_call.1} parent=1 // pred_check
      _
    $region15: #{tpu_custom_call.1} parent=1 // pred_check_branch
      %55 = sbr.rel (0) target = $region17
    $region16: #{tpu_custom_call.1} parent=1 // pred_region
      _
    $region17: #{tpu_custom_call.1} parent=1 // pred_fallthru
      _
    // Predicated region
    $region18: #{tpu_custom_call.1} parent=1 // pred_check
      _
    $region19: #{tpu_custom_call.1} parent=1 // pred_check_branch
      %57 = sbr.rel (0) target = $region21
    $region20: #{tpu_custom_call.1} parent=1 // pred_region
      %s59 = ssub.s32 512, 512
      %60 = vsyncadd [#allocation10], %s59
      %s61 = sshll.u32 [#allocation9], 4
      %s62 = int_to_ptr.vmem [resolvable:$true] %s61
      %67 = dma.hbm_to_vmem [thread:$0]  %s4, 512, %s62, [#allocation10], 128, 128, 8
    $region21: #{tpu_custom_call.1} parent=1 // pred_fallthru
      _
    // Predicated region
    $region22: #{tpu_custom_call.1} parent=1 // pred_check
      _
    $region23: #{tpu_custom_call.1} parent=1 // pred_check_branch
      %69 = sbr.rel (0) target = $region25
    $region24: #{tpu_custom_call.1} parent=1 // pred_region
      _
    $region25: #{tpu_custom_call.1} parent=1 // pred_fallthru
      _
    // Predicated region
    $region26: #{tpu_custom_call.1} parent=1 // pred_check
      _
    $region27: #{tpu_custom_call.1} parent=1 // pred_check_branch
      %71 = sbr.rel (0) target = $region29
    $region28: #{tpu_custom_call.1} parent=1 // pred_region
      _
    $region29: #{tpu_custom_call.1} parent=1 // pred_fallthru
      _
    // Predicated region
    $region30: #{tpu_custom_call.1} parent=1 // pred_check
      _
    $region31: #{tpu_custom_call.1} parent=1 // pred_check_branch
      %73 = sbr.rel (0) target = $region33
    $region32: #{tpu_custom_call.1} parent=1 // pred_region
      _
    $region33: #{tpu_custom_call.1} parent=1 // pred_fallthru
      _
    // Predicated region
    $region34: #{tpu_custom_call.1} parent=1 // pred_check
      _
    $region35: #{tpu_custom_call.1} parent=1 // pred_check_branch
      %75 = sbr.rel (0) target = $region37
    $region36: #{tpu_custom_call.1} parent=1 // pred_region
      %76 = dma.done [#allocation4], 256
    $region37: #{tpu_custom_call.1} parent=1 // pred_fallthru
      _
    // Predicated region
    $region38: #{tpu_custom_call.1} parent=1 // pred_check
      _
    $region39: #{tpu_custom_call.1} parent=1 // pred_check_branch
      %78 = sbr.rel (0) target = $region41
    $region40: #{tpu_custom_call.1} parent=1 // pred_region
      %79 = dma.done [#allocation7], 32
    $region41: #{tpu_custom_call.1} parent=1 // pred_fallthru
      _
    // Predicated region
    $region42: #{tpu_custom_call.1} parent=1 // pred_check
      _
    $region43: #{tpu_custom_call.1} parent=1 // pred_check_branch
      %81 = sbr.rel (0) target = $region45
    $region44: #{tpu_custom_call.1} parent=1 // pred_region
      %82 = dma.done [#allocation7], 512
    $region45: #{tpu_custom_call.1} parent=1 // pred_fallthru
      _
    // Predicated region
    $region46: #{tpu_custom_call.1} parent=1 // pred_check
      _
    $region47: #{tpu_custom_call.1} parent=1 // pred_check_branch
      %84 = sbr.rel (0) target = $region49
    $region48: #{tpu_custom_call.1} parent=1 // pred_region
      %85 = dma.done [#allocation10], 512
    $region49: #{tpu_custom_call.1} parent=1 // pred_fallthru
      _
    %v86 = vld [vmem:[#allocation3] sm:$0xff]
    %v87 = vld [vmem:[#allocation3 + $0x8] sm:$0xff]
    %v88 = vld [vmem:[#allocation8] sm:$0xff]
    %v89 = vld [vmem:[#allocation8 + $0x8] sm:$0xff]
    %v90 = vld [vmem:[#allocation8 + $0x10] sm:$0xff]
    %v91 = vld [vmem:[#allocation8 + $0x18] sm:$0xff]
    %v92 = vld [vmem:[%s3] sm:$0x1]
    %v94 = vlaneseq
    %v95 = vshrl.u32 %v94, 7
    %v96 = vsub.s32 0, %v95
    %v97 = vrot.slane %v92, %v96
    %vm99 = vcmask 261120
    %v101 = vsel %vm99, %v86, 0
    %v104 = vsel %vm99, %v87, 0
    %106 = vmatprep.subr.mxu0 0.0
    %107 = vmatpush1.msra.mxu0 0.0
    %108 = vmatprep.subr.mxu0 0.0
    %109 = vmatpush1.msra.mxu0 0.0
    %110 = vmatprep.subr.mxu0 0.0
    %111 = vmatpush1.msra.mxu0 0.0
    %112 = vmatprep.subr.mxu0 0.0
    %113 = vmatpush1.msra.mxu0 0.0
    %114 = vmatprep.subr.mxu0 0.0
    %115 = vmatpush1.msra.mxu0 0.0
    %116 = vmatprep.subr.mxu0 0.0
    %117 = vmatpush1.msra.mxu0 0.0
    %118 = vmatprep.subr.mxu0 0.0
    %119 = vmatpush1.msra.mxu0 0.0
    %120 = vmatprep.subr.mxu0 0.0
    %121 = vmatpush1.msra.mxu0 0.0
    %122 = vmatprep.subr.mxu0 0.0
    %123 = vmatpush1.msra.mxu0 0.0
    %124 = vmatprep.subr.mxu0 0.0
    %125 = vmatpush1.msra.mxu0 0.0
    %126 = vmatprep.subr.mxu0 0.0
    %127 = vmatpush1.msra.mxu0 0.0
    %128 = vmatprep.subr.mxu0 0.0
    %129 = vmatpush1.msra.mxu0 0.0
    %130 = vmatprep.subr.mxu0 0.0
    %131 = vmatpush1.msra.mxu0 %v91
    %132 = vmatprep.subr.mxu0 0.0
    %133 = vmatpush1.msra.mxu0 %v90
    %134 = vmatprep.subr.mxu0 0.0
    %135 = vmatpush1.msra.mxu0 %v89
    %136 = vmatprep.subr.mxu0 0.0
    %137 = vmatpush1.msra.mxu0 %v88
    %138 = vmatprep.subr.mxu0 0.0
    %139 = vmatpush2.msra.mxu0 0.0
    %140 = vmatprep.subr.mxu0 0.0
    %141 = vmatpush2.msra.mxu0 0.0
    %142 = vmatprep.subr.mxu0 0.0
    %143 = vmatpush2.msra.mxu0 0.0
    %144 = vmatprep.subr.mxu0 0.0
    %145 = vmatpush2.msra.mxu0 0.0
    %146 = vmatprep.subr.mxu0 0.0
    %147 = vmatpush2.msra.mxu0 0.0
    %148 = vmatprep.subr.mxu0 0.0
    %149 = vmatpush2.msra.mxu0 0.0
    %150 = vmatprep.subr.mxu0 0.0
    %151 = vmatpush2.msra.mxu0 0.0
    %152 = vmatprep.subr.mxu0 0.0
    %153 = vmatpush2.msra.mxu0 0.0
    %154 = vmatprep.subr.mxu0 0.0
    %155 = vmatpush2.msra.mxu0 0.0
    %156 = vmatprep.subr.mxu0 0.0
    %157 = vmatpush2.msra.mxu0 0.0
    %158 = vmatprep.subr.mxu0 0.0
    %159 = vmatpush2.msra.mxu0 0.0
    %160 = vmatprep.subr.mxu0 0.0
    %161 = vmatpush2.msra.mxu0 0.0
    %162 = vmatprep.subr.mxu0 0.0
    %163 = vmatpush2.msra.mxu0 0.0
    %164 = vmatprep.subr.mxu0 0.0
    %165 = vmatpush2.msra.mxu0 0.0
    %166 = vmatprep.subr.mxu0 0.0
    %167 = vmatpush2.msra.mxu0 0.0
    %168 = vmatprep.subr.mxu0 0.0
    %169 = vmatpush2.msra.mxu0 0.0
    %170 = vmatprep.mubr.f32.mxu0 0.0
    %171 = vmatmul.mubr.f32.gmra.mxu0 %v101
    %v172 = vpop.f32.mrf.mxu0
    %v173 = vadd.f32 %v97, %v172
    %v174 = vpop.f32.mrf.mxu0
    %175 = vmatprep.mubr.f32.mxu0 0.0
    %176 = vmatmul.mubr.f32.gmra.mxu0 %v104
    %v177 = vpop.f32.mrf.mxu0
    %v178 = vadd.f32 %v97, %v177
    %v179 = vpop.f32.mrf.mxu0
    %180 = vdwg.mxu0
    %v181 = vmul.f32 %v173, 0.59460354
    %v182 = vmul.f32 %v178, 0.59460354
    %v183 = vld [vmem:[#allocation6] sm:$0x3]
    %v184 = vlaneseq
    %v185 = vshrl.u32 %v184, 7
    %v186 = vsub.s32 0, %v185
    %v187 = vrot.slane %v183, %v186
    %189 = vrot.lane.b32.xlu0 %v181, 96
    %v190 = vpop.permute.xlu0 %189
    %vm191 = vcmask 64512
    %v192 = vsel %vm191, %v181, 0
    %v194 = vsel %vm191, %v190, 0
    %196 = vmatprep.subr.mxu0 0.0
    %197 = vmatpush1.xpose.msra.mxu0 0.0
    %198 = vmatprep.subr.mxu0 0.0
    %199 = vmatpush1.xpose.msra.mxu0 0.0
    %200 = vmatprep.subr.mxu0 0.0
    %201 = vmatpush1.xpose.msra.mxu0 0.0
    %202 = vmatprep.subr.mxu0 0.0
    %203 = vmatpush1.xpose.msra.mxu0 0.0
    %204 = vmatprep.subr.mxu0 0.0
    %205 = vmatpush1.xpose.msra.mxu0 0.0
    %206 = vmatprep.subr.mxu0 0.0
    %207 = vmatpush1.xpose.msra.mxu0 0.0
    %208 = vmatprep.subr.mxu0 0.0
    %209 = vmatpush1.xpose.msra.mxu0 0.0
    %210 = vmatprep.subr.mxu0 0.0
    %211 = vmatpush1.xpose.msra.mxu0 0.0
    %212 = vmatprep.subr.mxu0 0.0
    %213 = vmatpush1.xpose.msra.mxu0 0.0
    %214 = vmatprep.subr.mxu0 0.0
    %215 = vmatpush1.xpose.msra.mxu0 0.0
    %216 = vmatprep.subr.mxu0 0.0
    %217 = vmatpush1.xpose.msra.mxu0 0.0
    %218 = vmatprep.subr.mxu0 0.0
    %219 = vmatpush1.xpose.msra.mxu0 0.0
    %220 = vmatprep.subr.mxu0 0.0
    %221 = vmatpush1.xpose.msra.mxu0 0.0
    %222 = vmatprep.subr.mxu0 0.0
    %223 = vmatpush1.xpose.msra.mxu0 0.0
    %224 = vmatprep.subr.mxu0 0.0
    %225 = vmatpush1.xpose.msra.mxu0 0.0
    %226 = vmatprep.subr.mxu0 0.0
    %227 = vmatpush1.xpose.msra.mxu0 %v194
    %228 = vmatprep.subr.mxu0 0.0
    %229 = vmatpush2.xpose.msra.mxu0 0.0
    %230 = vmatprep.subr.mxu0 0.0
    %231 = vmatpush2.xpose.msra.mxu0 0.0
    %232 = vmatprep.subr.mxu0 0.0
    %233 = vmatpush2.xpose.msra.mxu0 0.0
    %234 = vmatprep.subr.mxu0 0.0
    %235 = vmatpush2.xpose.msra.mxu0 0.0
    %236 = vmatprep.subr.mxu0 0.0
    %237 = vmatpush2.xpose.msra.mxu0 0.0
    %238 = vmatprep.subr.mxu0 0.0
    %239 = vmatpush2.xpose.msra.mxu0 0.0
    %240 = vmatprep.subr.mxu0 0.0
    %241 = vmatpush2.xpose.msra.mxu0 0.0
    %242 = vmatprep.subr.mxu0 0.0
    %243 = vmatpush2.xpose.msra.mxu0 0.0
    %244 = vmatprep.subr.mxu0 0.0
    %245 = vmatpush2.xpose.msra.mxu0 0.0
    %246 = vmatprep.subr.mxu0 0.0
    %247 = vmatpush2.xpose.msra.mxu0 0.0
    %248 = vmatprep.subr.mxu0 0.0
    %249 = vmatpush2.xpose.msra.mxu0 0.0
    %250 = vmatprep.subr.mxu0 0.0
    %251 = vmatpush2.xpose.msra.mxu0 0.0
    %252 = vmatprep.subr.mxu0 0.0
    %253 = vmatpush2.xpose.msra.mxu0 0.0
    %254 = vmatprep.subr.mxu0 0.0
    %255 = vmatpush2.xpose.msra.mxu0 0.0
    %256 = vmatprep.subr.mxu0 0.0
    %257 = vmatpush2.xpose.msra.mxu0 0.0
    %258 = vmatprep.subr.mxu0 0.0
    %259 = vmatpush2.xpose.msra.mxu0 0.0
    %260 = vmatprep.mubr.f32.mxu0 0.0
    %261 = vmatmul.mubr.f32.gmra.mxu0 %v192
    %v262 = vpop.f32.mrf.mxu0
    %v263 = vadd.f32 %v187, %v262
    %v264 = vpop.f32.mrf.mxu0
    %265 = vdwg.mxu0
    %266 = vst.msk [vmem:[#allocation12] sm:$0xff] %vm191, %v263
    %267 = vmatprep.subr.mxu0 0.0
    %268 = vmatpush1.xpose.msra.mxu0 0.0
    %269 = vmatprep.subr.mxu0 0.0
    %270 = vmatpush1.xpose.msra.mxu0 0.0
    %271 = vmatprep.subr.mxu0 0.0
    %272 = vmatpush1.xpose.msra.mxu0 0.0
    %273 = vmatprep.subr.mxu0 0.0
    %274 = vmatpush1.xpose.msra.mxu0 0.0
    %275 = vmatprep.subr.mxu0 0.0
    %276 = vmatpush1.xpose.msra.mxu0 0.0
    %277 = vmatprep.subr.mxu0 0.0
    %278 = vmatpush1.xpose.msra.mxu0 0.0
    %279 = vmatprep.subr.mxu0 0.0
    %280 = vmatpush1.xpose.msra.mxu0 0.0
    %281 = vmatprep.subr.mxu0 0.0
    %282 = vmatpush1.xpose.msra.mxu0 0.0
    %283 = vmatprep.subr.mxu0 0.0
    %284 = vmatpush1.xpose.msra.mxu0 0.0
    %285 = vmatprep.subr.mxu0 0.0
    %286 = vmatpush1.xpose.msra.mxu0 0.0
    %287 = vmatprep.subr.mxu0 0.0
    %288 = vmatpush1.xpose.msra.mxu0 0.0
    %289 = vmatprep.subr.mxu0 0.0
    %290 = vmatpush1.xpose.msra.mxu0 0.0
    %291 = vmatprep.subr.mxu0 0.0
    %292 = vmatpush1.xpose.msra.mxu0 0.0
    %293 = vmatprep.subr.mxu0 0.0
    %294 = vmatpush1.xpose.msra.mxu0 0.0
    %295 = vmatprep.subr.mxu0 0.0
    %296 = vmatpush1.xpose.msra.mxu0 0.0
    %297 = vmatprep.subr.mxu0 0.0
    %298 = vmatpush1.xpose.msra.mxu0 %v192
    %299 = vmatprep.subr.mxu0 0.0
    %300 = vmatpush2.xpose.msra.mxu0 0.0
    %301 = vmatprep.subr.mxu0 0.0
    %302 = vmatpush2.xpose.msra.mxu0 0.0
    %303 = vmatprep.subr.mxu0 0.0
    %304 = vmatpush2.xpose.msra.mxu0 0.0
    %305 = vmatprep.subr.mxu0 0.0
    %306 = vmatpush2.xpose.msra.mxu0 0.0
    %307 = vmatprep.subr.mxu0 0.0
    %308 = vmatpush2.xpose.msra.mxu0 0.0
    %309 = vmatprep.subr.mxu0 0.0
    %310 = vmatpush2.xpose.msra.mxu0 0.0
    %311 = vmatprep.subr.mxu0 0.0
    %312 = vmatpush2.xpose.msra.mxu0 0.0
    %313 = vmatprep.subr.mxu0 0.0
    %314 = vmatpush2.xpose.msra.mxu0 0.0
    %315 = vmatprep.subr.mxu0 0.0
    %316 = vmatpush2.xpose.msra.mxu0 0.0
    %317 = vmatprep.subr.mxu0 0.0
    %318 = vmatpush2.xpose.msra.mxu0 0.0
    %319 = vmatprep.subr.mxu0 0.0
    %320 = vmatpush2.xpose.msra.mxu0 0.0
    %321 = vmatprep.subr.mxu0 0.0
    %322 = vmatpush2.xpose.msra.mxu0 0.0
    %323 = vmatprep.subr.mxu0 0.0
    %324 = vmatpush2.xpose.msra.mxu0 0.0
    %325 = vmatprep.subr.mxu0 0.0
    %326 = vmatpush2.xpose.msra.mxu0 0.0
    %327 = vmatprep.subr.mxu0 0.0
    %328 = vmatpush2.xpose.msra.mxu0 0.0
    %329 = vmatprep.subr.mxu0 0.0
    %330 = vmatpush2.xpose.msra.mxu0 0.0
    %331 = vmatprep.mubr.f32.mxu0 0.0
    %332 = vmatmul.mubr.f32.gmra.mxu0 %v192
    %v333 = vpop.f32.mrf.mxu0
    %v334 = vadd.f32 0.0, %v333
    %v335 = vpop.f32.mrf.mxu0
    %336 = vdwg.mxu0
    %s337 = scalar_lea.vmem [#allocation12], 64
    %338 = vst.msk [vmem:[%s337] sm:$0xff] %vm191, %v334
    %339 = vmatprep.subr.mxu0 0.0
    %340 = vmatpush1.xpose.msra.mxu0 0.0
    %341 = vmatprep.subr.mxu0 0.0
    %342 = vmatpush1.xpose.msra.mxu0 0.0
    %343 = vmatprep.subr.mxu0 0.0
    %344 = vmatpush1.xpose.msra.mxu0 0.0
    %345 = vmatprep.subr.mxu0 0.0
    %346 = vmatpush1.xpose.msra.mxu0 0.0
    %347 = vmatprep.subr.mxu0 0.0
    %348 = vmatpush1.xpose.msra.mxu0 0.0
    %349 = vmatprep.subr.mxu0 0.0
    %350 = vmatpush1.xpose.msra.mxu0 0.0
    %351 = vmatprep.subr.mxu0 0.0
    %352 = vmatpush1.xpose.msra.mxu0 0.0
    %353 = vmatprep.subr.mxu0 0.0
    %354 = vmatpush1.xpose.msra.mxu0 0.0
    %355 = vmatprep.subr.mxu0 0.0
    %356 = vmatpush1.xpose.msra.mxu0 0.0
    %357 = vmatprep.subr.mxu0 0.0
    %358 = vmatpush1.xpose.msra.mxu0 0.0
    %359 = vmatprep.subr.mxu0 0.0
    %360 = vmatpush1.xpose.msra.mxu0 0.0
    %361 = vmatprep.subr.mxu0 0.0
    %362 = vmatpush1.xpose.msra.mxu0 0.0
    %363 = vmatprep.subr.mxu0 0.0
    %364 = vmatpush1.xpose.msra.mxu0 0.0
    %365 = vmatprep.subr.mxu0 0.0
    %366 = vmatpush1.xpose.msra.mxu0 0.0
    %367 = vmatprep.subr.mxu0 0.0
    %368 = vmatpush1.xpose.msra.mxu0 0.0
    %369 = vmatprep.subr.mxu0 0.0
    %370 = vmatpush1.xpose.msra.mxu0 %v194
    %371 = vmatprep.subr.mxu0 0.0
    %372 = vmatpush2.xpose.msra.mxu0 0.0
    %373 = vmatprep.subr.mxu0 0.0
    %374 = vmatpush2.xpose.msra.mxu0 0.0
    %375 = vmatprep.subr.mxu0 0.0
    %376 = vmatpush2.xpose.msra.mxu0 0.0
    %377 = vmatprep.subr.mxu0 0.0
    %378 = vmatpush2.xpose.msra.mxu0 0.0
    %379 = vmatprep.subr.mxu0 0.0
    %380 = vmatpush2.xpose.msra.mxu0 0.0
    %381 = vmatprep.subr.mxu0 0.0
    %382 = vmatpush2.xpose.msra.mxu0 0.0
    %383 = vmatprep.subr.mxu0 0.0
    %384 = vmatpush2.xpose.msra.mxu0 0.0
    %385 = vmatprep.subr.mxu0 0.0
    %386 = vmatpush2.xpose.msra.mxu0 0.0
    %387 = vmatprep.subr.mxu0 0.0
    %388 = vmatpush2.xpose.msra.mxu0 0.0
    %389 = vmatprep.subr.mxu0 0.0
    %390 = vmatpush2.xpose.msra.mxu0 0.0
    %391 = vmatprep.subr.mxu0 0.0
    %392 = vmatpush2.xpose.msra.mxu0 0.0
    %393 = vmatprep.subr.mxu0 0.0
    %394 = vmatpush2.xpose.msra.mxu0 0.0
    %395 = vmatprep.subr.mxu0 0.0
    %396 = vmatpush2.xpose.msra.mxu0 0.0
    %397 = vmatprep.subr.mxu0 0.0
    %398 = vmatpush2.xpose.msra.mxu0 0.0
    %399 = vmatprep.subr.mxu0 0.0
    %400 = vmatpush2.xpose.msra.mxu0 0.0
    %401 = vmatprep.subr.mxu0 0.0
    %402 = vmatpush2.xpose.msra.mxu0 0.0
    %403 = vmatprep.mubr.f32.mxu0 0.0
    %404 = vmatmul.mubr.f32.gmra.mxu0 %v194
    %v405 = vpop.f32.mrf.mxu0
    %v406 = vadd.f32 0.0, %v405
    %v407 = vpop.f32.mrf.mxu0
    %408 = vdwg.mxu0
    %s409 = scalar_lea.vmem [#allocation12], 128
    %410 = vst.msk [vmem:[%s409] sm:$0xff] %vm191, %v406
    %411 = vrot.lane.b32.xlu0 %v181, 64
    %v412 = vpop.permute.xlu0 %411
    %v413 = vsel %vm191, %v412, 0
    %415 = vmatprep.subr.mxu0 0.0
    %416 = vmatpush1.xpose.msra.mxu0 0.0
    %417 = vmatprep.subr.mxu0 0.0
    %418 = vmatpush1.xpose.msra.mxu0 0.0
    %419 = vmatprep.subr.mxu0 0.0
    %420 = vmatpush1.xpose.msra.mxu0 0.0
    %421 = vmatprep.subr.mxu0 0.0
    %422 = vmatpush1.xpose.msra.mxu0 0.0
    %423 = vmatprep.subr.mxu0 0.0
    %424 = vmatpush1.xpose.msra.mxu0 0.0
    %425 = vmatprep.subr.mxu0 0.0
    %426 = vmatpush1.xpose.msra.mxu0 0.0
    %427 = vmatprep.subr.mxu0 0.0
    %428 = vmatpush1.xpose.msra.mxu0 0.0
    %429 = vmatprep.subr.mxu0 0.0
    %430 = vmatpush1.xpose.msra.mxu0 0.0
    %431 = vmatprep.subr.mxu0 0.0
    %432 = vmatpush1.xpose.msra.mxu0 0.0
    %433 = vmatprep.subr.mxu0 0.0
    %434 = vmatpush1.xpose.msra.mxu0 0.0
    %435 = vmatprep.subr.mxu0 0.0
    %436 = vmatpush1.xpose.msra.mxu0 0.0
    %437 = vmatprep.subr.mxu0 0.0
    %438 = vmatpush1.xpose.msra.mxu0 0.0
    %439 = vmatprep.subr.mxu0 0.0
    %440 = vmatpush1.xpose.msra.mxu0 0.0
    %441 = vmatprep.subr.mxu0 0.0
    %442 = vmatpush1.xpose.msra.mxu0 0.0
    %443 = vmatprep.subr.mxu0 0.0
    %444 = vmatpush1.xpose.msra.mxu0 0.0
    %445 = vmatprep.subr.mxu0 0.0
    %446 = vmatpush1.xpose.msra.mxu0 %v413
    %447 = vmatprep.subr.mxu0 0.0
    %448 = vmatpush2.xpose.msra.mxu0 0.0
    %449 = vmatprep.subr.mxu0 0.0
    %450 = vmatpush2.xpose.msra.mxu0 0.0
    %451 = vmatprep.subr.mxu0 0.0
    %452 = vmatpush2.xpose.msra.mxu0 0.0
    %453 = vmatprep.subr.mxu0 0.0
    %454 = vmatpush2.xpose.msra.mxu0 0.0
    %455 = vmatprep.subr.mxu0 0.0
    %456 = vmatpush2.xpose.msra.mxu0 0.0
    %457 = vmatprep.subr.mxu0 0.0
    %458 = vmatpush2.xpose.msra.mxu0 0.0
    %459 = vmatprep.subr.mxu0 0.0
    %460 = vmatpush2.xpose.msra.mxu0 0.0
    %461 = vmatprep.subr.mxu0 0.0
    %462 = vmatpush2.xpose.msra.mxu0 0.0
    %463 = vmatprep.subr.mxu0 0.0
    %464 = vmatpush2.xpose.msra.mxu0 0.0
    %465 = vmatprep.subr.mxu0 0.0
    %466 = vmatpush2.xpose.msra.mxu0 0.0
    %467 = vmatprep.subr.mxu0 0.0
    %468 = vmatpush2.xpose.msra.mxu0 0.0
    %469 = vmatprep.subr.mxu0 0.0
    %470 = vmatpush2.xpose.msra.mxu0 0.0
    %471 = vmatprep.subr.mxu0 0.0
    %472 = vmatpush2.xpose.msra.mxu0 0.0
    %473 = vmatprep.subr.mxu0 0.0
    %474 = vmatpush2.xpose.msra.mxu0 0.0
    %475 = vmatprep.subr.mxu0 0.0
    %476 = vmatpush2.xpose.msra.mxu0 0.0
    %477 = vmatprep.subr.mxu0 0.0
    %478 = vmatpush2.xpose.msra.mxu0 0.0
    %479 = vmatprep.mubr.f32.mxu0 0.0
    %480 = vmatmul.mubr.f32.gmra.mxu0 %v413
    %v481 = vpop.f32.mrf.mxu0
    %v482 = vadd.f32 0.0, %v481
    %v483 = vpop.f32.mrf.mxu0
    %484 = vdwg.mxu0
    %s485 = scalar_lea.vmem [#allocation12], 192
    %486 = vst.msk [vmem:[%s485] sm:$0xff] %vm191, %v482
    %v487 = vsel %vm191, %v263, -inf
    %488 = vmax.xlane.f32.xlu0 %v487
    %v489 = vpop.xlane.xlu0 %488
    %v490 = vsub.f32 %v263, %v489
    %v491 = vmul.f32 %v490, 1.442695
    %v492 = vpow.pop %v491
    %v493 = vsel %vm191, %v492, 0.0
    %494 = vadd.xlane.f32.xlu0 %v493
    %v495 = vpop.xlane.xlu0 %494
    %v496 = vrcp.pop %v495
    %v497 = vmul.f32 %v492, %v496
    %499 = vrot.lane.b32.xlu0 %v173, 64
    %v500 = vpop.permute.xlu0 %499
    %v503 = vsel %vm191, %v497, 0
    %505 = vmatprep.subr.mxu0 0.0
    %506 = vmatpush1.msra.mxu0 0.0
    %507 = vmatprep.subr.mxu0 0.0
    %508 = vmatpush1.msra.mxu0 0.0
    %509 = vmatprep.subr.mxu0 0.0
    %510 = vmatpush1.msra.mxu0 0.0
    %511 = vmatprep.subr.mxu0 0.0
    %512 = vmatpush1.msra.mxu0 0.0
    %513 = vmatprep.subr.mxu0 0.0
    %514 = vmatpush1.msra.mxu0 0.0
    %515 = vmatprep.subr.mxu0 0.0
    %516 = vmatpush1.msra.mxu0 0.0
    %517 = vmatprep.subr.mxu0 0.0
    %518 = vmatpush1.msra.mxu0 0.0
    %519 = vmatprep.subr.mxu0 0.0
    %520 = vmatpush1.msra.mxu0 0.0
    %521 = vmatprep.subr.mxu0 0.0
    %522 = vmatpush1.msra.mxu0 0.0
    %523 = vmatprep.subr.mxu0 0.0
    %524 = vmatpush1.msra.mxu0 0.0
    %525 = vmatprep.subr.mxu0 0.0
    %526 = vmatpush1.msra.mxu0 0.0
    %527 = vmatprep.subr.mxu0 0.0
    %528 = vmatpush1.msra.mxu0 0.0
    %529 = vmatprep.subr.mxu0 0.0
    %530 = vmatpush1.msra.mxu0 0.0
    %531 = vmatprep.subr.mxu0 0.0
    %532 = vmatpush1.msra.mxu0 0.0
    %533 = vmatprep.subr.mxu0 0.0
    %534 = vmatpush1.msra.mxu0 0.0
    %535 = vmatprep.subr.mxu0 0.0
    %536 = vmatpush1.msra.mxu0 %v500
    %537 = vmatprep.subr.mxu0 0.0
    %538 = vmatpush2.msra.mxu0 0.0
    %539 = vmatprep.subr.mxu0 0.0
    %540 = vmatpush2.msra.mxu0 0.0
    %541 = vmatprep.subr.mxu0 0.0
    %542 = vmatpush2.msra.mxu0 0.0
    %543 = vmatprep.subr.mxu0 0.0
    %544 = vmatpush2.msra.mxu0 0.0
    %545 = vmatprep.subr.mxu0 0.0
    %546 = vmatpush2.msra.mxu0 0.0
    %547 = vmatprep.subr.mxu0 0.0
    %548 = vmatpush2.msra.mxu0 0.0
    %549 = vmatprep.subr.mxu0 0.0
    %550 = vmatpush2.msra.mxu0 0.0
    %551 = vmatprep.subr.mxu0 0.0
    %552 = vmatpush2.msra.mxu0 0.0
    %553 = vmatprep.subr.mxu0 0.0
    %554 = vmatpush2.msra.mxu0 0.0
    %555 = vmatprep.subr.mxu0 0.0
    %556 = vmatpush2.msra.mxu0 0.0
    %557 = vmatprep.subr.mxu0 0.0
    %558 = vmatpush2.msra.mxu0 0.0
    %559 = vmatprep.subr.mxu0 0.0
    %560 = vmatpush2.msra.mxu0 0.0
    %561 = vmatprep.subr.mxu0 0.0
    %562 = vmatpush2.msra.mxu0 0.0
    %563 = vmatprep.subr.mxu0 0.0
    %564 = vmatpush2.msra.mxu0 0.0
    %565 = vmatprep.subr.mxu0 0.0
    %566 = vmatpush2.msra.mxu0 0.0
    %567 = vmatprep.subr.mxu0 0.0
    %568 = vmatpush2.msra.mxu0 0.0
    %569 = vmatprep.mubr.f32.mxu0 0.0
    %570 = vmatmul.mubr.f32.gmra.mxu0 %v503
    %v571 = vpop.f32.mrf.mxu0
    %v572 = vadd.f32 0.0, %v571
    %v573 = vpop.f32.mrf.mxu0
    %574 = vdwg.mxu0
    %575 = vst.msk [vmem:[#allocation2] sm:$0xff] %vm191, %v572
    %576 = vrot.lane.b32.xlu0 %v181, 120
    %v577 = vpop.permute.xlu0 %576
    %578 = vrot.lane.b32.xlu0 %v181, 88
    %v579 = vpop.permute.xlu0 %578
    %v580 = vsel %vm191, %v577, 0
    %v582 = vsel %vm191, %v579, 0
    %584 = vmatprep.subr.mxu0 0.0
    %585 = vmatpush1.xpose.msra.mxu0 0.0
    %586 = vmatprep.subr.mxu0 0.0
    %587 = vmatpush1.xpose.msra.mxu0 0.0
    %588 = vmatprep.subr.mxu0 0.0
    %589 = vmatpush1.xpose.msra.mxu0 0.0
    %590 = vmatprep.subr.mxu0 0.0
    %591 = vmatpush1.xpose.msra.mxu0 0.0
    %592 = vmatprep.subr.mxu0 0.0
    %593 = vmatpush1.xpose.msra.mxu0 0.0
    %594 = vmatprep.subr.mxu0 0.0
    %595 = vmatpush1.xpose.msra.mxu0 0.0
    %596 = vmatprep.subr.mxu0 0.0
    %597 = vmatpush1.xpose.msra.mxu0 0.0
    %598 = vmatprep.subr.mxu0 0.0
    %599 = vmatpush1.xpose.msra.mxu0 0.0
    %600 = vmatprep.subr.mxu0 0.0
    %601 = vmatpush1.xpose.msra.mxu0 0.0
    %602 = vmatprep.subr.mxu0 0.0
    %603 = vmatpush1.xpose.msra.mxu0 0.0
    %604 = vmatprep.subr.mxu0 0.0
    %605 = vmatpush1.xpose.msra.mxu0 0.0
    %606 = vmatprep.subr.mxu0 0.0
    %607 = vmatpush1.xpose.msra.mxu0 0.0
    %608 = vmatprep.subr.mxu0 0.0
    %609 = vmatpush1.xpose.msra.mxu0 0.0
    %610 = vmatprep.subr.mxu0 0.0
    %611 = vmatpush1.xpose.msra.mxu0 0.0
    %612 = vmatprep.subr.mxu0 0.0
    %613 = vmatpush1.xpose.msra.mxu0 0.0
    %614 = vmatprep.subr.mxu0 0.0
    %615 = vmatpush1.xpose.msra.mxu0 %v582
    %616 = vmatprep.subr.mxu0 0.0
    %617 = vmatpush2.xpose.msra.mxu0 0.0
    %618 = vmatprep.subr.mxu0 0.0
    %619 = vmatpush2.xpose.msra.mxu0 0.0
    %620 = vmatprep.subr.mxu0 0.0
    %621 = vmatpush2.xpose.msra.mxu0 0.0
    %622 = vmatprep.subr.mxu0 0.0
    %623 = vmatpush2.xpose.msra.mxu0 0.0
    %624 = vmatprep.subr.mxu0 0.0
    %625 = vmatpush2.xpose.msra.mxu0 0.0
    %626 = vmatprep.subr.mxu0 0.0
    %627 = vmatpush2.xpose.msra.mxu0 0.0
    %628 = vmatprep.subr.mxu0 0.0
    %629 = vmatpush2.xpose.msra.mxu0 0.0
    %630 = vmatprep.subr.mxu0 0.0
    %631 = vmatpush2.xpose.msra.mxu0 0.0
    %632 = vmatprep.subr.mxu0 0.0
    %633 = vmatpush2.xpose.msra.mxu0 0.0
    %634 = vmatprep.subr.mxu0 0.0
    %635 = vmatpush2.xpose.msra.mxu0 0.0
    %636 = vmatprep.subr.mxu0 0.0
    %637 = vmatpush2.xpose.msra.mxu0 0.0
    %638 = vmatprep.subr.mxu0 0.0
    %639 = vmatpush2.xpose.msra.mxu0 0.0
    %640 = vmatprep.subr.mxu0 0.0
    %641 = vmatpush2.xpose.msra.mxu0 0.0
    %642 = vmatprep.subr.mxu0 0.0
    %643 = vmatpush2.xpose.msra.mxu0 0.0
    %644 = vmatprep.subr.mxu0 0.0
    %645 = vmatpush2.xpose.msra.mxu0 0.0
    %646 = vmatprep.subr.mxu0 0.0
    %647 = vmatpush2.xpose.msra.mxu0 0.0
    %648 = vmatprep.mubr.f32.mxu0 0.0
    %649 = vmatmul.mubr.f32.gmra.mxu0 %v580
    %v650 = vpop.f32.mrf.mxu0
    %v651 = vadd.f32 %v187, %v650
    %v652 = vpop.f32.mrf.mxu0
    %653 = vdwg.mxu0
    %s654 = scalar_lea.vmem [#allocation12], 8
    %655 = vst.msk [vmem:[%s654] sm:$0xff] %vm191, %v651
    %656 = vmatprep.subr.mxu0 0.0
    %657 = vmatpush1.xpose.msra.mxu0 0.0
    %658 = vmatprep.subr.mxu0 0.0
    %659 = vmatpush1.xpose.msra.mxu0 0.0
    %660 = vmatprep.subr.mxu0 0.0
    %661 = vmatpush1.xpose.msra.mxu0 0.0
    %662 = vmatprep.subr.mxu0 0.0
    %663 = vmatpush1.xpose.msra.mxu0 0.0
    %664 = vmatprep.subr.mxu0 0.0
    %665 = vmatpush1.xpose.msra.mxu0 0.0
    %666 = vmatprep.subr.mxu0 0.0
    %667 = vmatpush1.xpose.msra.mxu0 0.0
    %668 = vmatprep.subr.mxu0 0.0
    %669 = vmatpush1.xpose.msra.mxu0 0.0
    %670 = vmatprep.subr.mxu0 0.0
    %671 = vmatpush1.xpose.msra.mxu0 0.0
    %672 = vmatprep.subr.mxu0 0.0
    %673 = vmatpush1.xpose.msra.mxu0 0.0
    %674 = vmatprep.subr.mxu0 0.0
    %675 = vmatpush1.xpose.msra.mxu0 0.0
    %676 = vmatprep.subr.mxu0 0.0
    %677 = vmatpush1.xpose.msra.mxu0 0.0
    %678 = vmatprep.subr.mxu0 0.0
    %679 = vmatpush1.xpose.msra.mxu0 0.0
    %680 = vmatprep.subr.mxu0 0.0
    %681 = vmatpush1.xpose.msra.mxu0 0.0
    %682 = vmatprep.subr.mxu0 0.0
    %683 = vmatpush1.xpose.msra.mxu0 0.0
    %684 = vmatprep.subr.mxu0 0.0
    %685 = vmatpush1.xpose.msra.mxu0 0.0
    %686 = vmatprep.subr.mxu0 0.0
    %687 = vmatpush1.xpose.msra.mxu0 %v580
    %688 = vmatprep.subr.mxu0 0.0
    %689 = vmatpush2.xpose.msra.mxu0 0.0
    %690 = vmatprep.subr.mxu0 0.0
    %691 = vmatpush2.xpose.msra.mxu0 0.0
    %692 = vmatprep.subr.mxu0 0.0
    %693 = vmatpush2.xpose.msra.mxu0 0.0
    %694 = vmatprep.subr.mxu0 0.0
    %695 = vmatpush2.xpose.msra.mxu0 0.0
    %696 = vmatprep.subr.mxu0 0.0
    %697 = vmatpush2.xpose.msra.mxu0 0.0
    %698 = vmatprep.subr.mxu0 0.0
    %699 = vmatpush2.xpose.msra.mxu0 0.0
    %700 = vmatprep.subr.mxu0 0.0
    %701 = vmatpush2.xpose.msra.mxu0 0.0
    %702 = vmatprep.subr.mxu0 0.0
    %703 = vmatpush2.xpose.msra.mxu0 0.0
    %704 = vmatprep.subr.mxu0 0.0
    %705 = vmatpush2.xpose.msra.mxu0 0.0
    %706 = vmatprep.subr.mxu0 0.0
    %707 = vmatpush2.xpose.msra.mxu0 0.0
    %708 = vmatprep.subr.mxu0 0.0
    %709 = vmatpush2.xpose.msra.mxu0 0.0
    %710 = vmatprep.subr.mxu0 0.0
    %711 = vmatpush2.xpose.msra.mxu0 0.0
    %712 = vmatprep.subr.mxu0 0.0
    %713 = vmatpush2.xpose.msra.mxu0 0.0
    %714 = vmatprep.subr.mxu0 0.0
    %715 = vmatpush2.xpose.msra.mxu0 0.0
    %716 = vmatprep.subr.mxu0 0.0
    %717 = vmatpush2.xpose.msra.mxu0 0.0
    %718 = vmatprep.subr.mxu0 0.0
    %719 = vmatpush2.xpose.msra.mxu0 0.0
    %720 = vmatprep.mubr.f32.mxu0 0.0
    %721 = vmatmul.mubr.f32.gmra.mxu0 %v580
    %v722 = vpop.f32.mrf.mxu0
    %v723 = vadd.f32 0.0, %v722
    %v724 = vpop.f32.mrf.mxu0
    %725 = vdwg.mxu0
    %s726 = scalar_lea.vmem [#allocation12], 72
    %727 = vst.msk [vmem:[%s726] sm:$0xff] %vm191, %v723
    %728 = vmatprep.subr.mxu0 0.0
    %729 = vmatpush1.xpose.msra.mxu0 0.0
    %730 = vmatprep.subr.mxu0 0.0
    %731 = vmatpush1.xpose.msra.mxu0 0.0
    %732 = vmatprep.subr.mxu0 0.0
    %733 = vmatpush1.xpose.msra.mxu0 0.0
    %734 = vmatprep.subr.mxu0 0.0
    %735 = vmatpush1.xpose.msra.mxu0 0.0
    %736 = vmatprep.subr.mxu0 0.0
    %737 = vmatpush1.xpose.msra.mxu0 0.0
    %738 = vmatprep.subr.mxu0 0.0
    %739 = vmatpush1.xpose.msra.mxu0 0.0
    %740 = vmatprep.subr.mxu0 0.0
    %741 = vmatpush1.xpose.msra.mxu0 0.0
    %742 = vmatprep.subr.mxu0 0.0
    %743 = vmatpush1.xpose.msra.mxu0 0.0
    %744 = vmatprep.subr.mxu0 0.0
    %745 = vmatpush1.xpose.msra.mxu0 0.0
    %746 = vmatprep.subr.mxu0 0.0
    %747 = vmatpush1.xpose.msra.mxu0 0.0
    %748 = vmatprep.subr.mxu0 0.0
    %749 = vmatpush1.xpose.msra.mxu0 0.0
    %750 = vmatprep.subr.mxu0 0.0
    %751 = vmatpush1.xpose.msra.mxu0 0.0
    %752 = vmatprep.subr.mxu0 0.0
    %753 = vmatpush1.xpose.msra.mxu0 0.0
    %754 = vmatprep.subr.mxu0 0.0
    %755 = vmatpush1.xpose.msra.mxu0 0.0
    %756 = vmatprep.subr.mxu0 0.0
    %757 = vmatpush1.xpose.msra.mxu0 0.0
    %758 = vmatprep.subr.mxu0 0.0
    %759 = vmatpush1.xpose.msra.mxu0 %v582
    %760 = vmatprep.subr.mxu0 0.0
    %761 = vmatpush2.xpose.msra.mxu0 0.0
    %762 = vmatprep.subr.mxu0 0.0
    %763 = vmatpush2.xpose.msra.mxu0 0.0
    %764 = vmatprep.subr.mxu0 0.0
    %765 = vmatpush2.xpose.msra.mxu0 0.0
    %766 = vmatprep.subr.mxu0 0.0
    %767 = vmatpush2.xpose.msra.mxu0 0.0
    %768 = vmatprep.subr.mxu0 0.0
    %769 = vmatpush2.xpose.msra.mxu0 0.0
    %770 = vmatprep.subr.mxu0 0.0
    %771 = vmatpush2.xpose.msra.mxu0 0.0
    %772 = vmatprep.subr.mxu0 0.0
    %773 = vmatpush2.xpose.msra.mxu0 0.0
    %774 = vmatprep.subr.mxu0 0.0
    %775 = vmatpush2.xpose.msra.mxu0 0.0
    %776 = vmatprep.subr.mxu0 0.0
    %777 = vmatpush2.xpose.msra.mxu0 0.0
    %778 = vmatprep.subr.mxu0 0.0
    %779 = vmatpush2.xpose.msra.mxu0 0.0
    %780 = vmatprep.subr.mxu0 0.0
    %781 = vmatpush2.xpose.msra.mxu0 0.0
    %782 = vmatprep.subr.mxu0 0.0
    %783 = vmatpush2.xpose.msra.mxu0 0.0
    %784 = vmatprep.subr.mxu0 0.0
    %785 = vmatpush2.xpose.msra.mxu0 0.0
    %786 = vmatprep.subr.mxu0 0.0
    %787 = vmatpush2.xpose.msra.mxu0 0.0
    %788 = vmatprep.subr.mxu0 0.0
    %789 = vmatpush2.xpose.msra.mxu0 0.0
    %790 = vmatprep.subr.mxu0 0.0
    %791 = vmatpush2.xpose.msra.mxu0 0.0
    %792 = vmatprep.mubr.f32.mxu0 0.0
    %793 = vmatmul.mubr.f32.gmra.mxu0 %v582
    %v794 = vpop.f32.mrf.mxu0
    %v795 = vadd.f32 0.0, %v794
    %v796 = vpop.f32.mrf.mxu0
    %797 = vdwg.mxu0
    %s798 = scalar_lea.vmem [#allocation12], 136
    %799 = vst.msk [vmem:[%s798] sm:$0xff] %vm191, %v795
    %800 = vrot.lane.b32.xlu0 %v181, 56
    %v801 = vpop.permute.xlu0 %800
    %v802 = vsel %vm191, %v801, 0
    %804 = vmatprep.subr.mxu0 0.0
    %805 = vmatpush1.xpose.msra.mxu0 0.0
    %806 = vmatprep.subr.mxu0 0.0
    %807 = vmatpush1.xpose.msra.mxu0 0.0
    %808 = vmatprep.subr.mxu0 0.0
    %809 = vmatpush1.xpose.msra.mxu0 0.0
    %810 = vmatprep.subr.mxu0 0.0
    %811 = vmatpush1.xpose.msra.mxu0 0.0
    %812 = vmatprep.subr.mxu0 0.0
    %813 = vmatpush1.xpose.msra.mxu0 0.0
    %814 = vmatprep.subr.mxu0 0.0
    %815 = vmatpush1.xpose.msra.mxu0 0.0
    %816 = vmatprep.subr.mxu0 0.0
    %817 = vmatpush1.xpose.msra.mxu0 0.0
    %818 = vmatprep.subr.mxu0 0.0
    %819 = vmatpush1.xpose.msra.mxu0 0.0
    %820 = vmatprep.subr.mxu0 0.0
    %821 = vmatpush1.xpose.msra.mxu0 0.0
    %822 = vmatprep.subr.mxu0 0.0
    %823 = vmatpush1.xpose.msra.mxu0 0.0
    %824 = vmatprep.subr.mxu0 0.0
    %825 = vmatpush1.xpose.msra.mxu0 0.0
    %826 = vmatprep.subr.mxu0 0.0
    %827 = vmatpush1.xpose.msra.mxu0 0.0
    %828 = vmatprep.subr.mxu0 0.0
    %829 = vmatpush1.xpose.msra.mxu0 0.0
    %830 = vmatprep.subr.mxu0 0.0
    %831 = vmatpush1.xpose.msra.mxu0 0.0
    %832 = vmatprep.subr.mxu0 0.0
    %833 = vmatpush1.xpose.msra.mxu0 0.0
    %834 = vmatprep.subr.mxu0 0.0
    %835 = vmatpush1.xpose.msra.mxu0 %v802
    %836 = vmatprep.subr.mxu0 0.0
    %837 = vmatpush2.xpose.msra.mxu0 0.0
    %838 = vmatprep.subr.mxu0 0.0
    %839 = vmatpush2.xpose.msra.mxu0 0.0
    %840 = vmatprep.subr.mxu0 0.0
    %841 = vmatpush2.xpose.msra.mxu0 0.0
    %842 = vmatprep.subr.mxu0 0.0
    %843 = vmatpush2.xpose.msra.mxu0 0.0
    %844 = vmatprep.subr.mxu0 0.0
    %845 = vmatpush2.xpose.msra.mxu0 0.0
    %846 = vmatprep.subr.mxu0 0.0
    %847 = vmatpush2.xpose.msra.mxu0 0.0
    %848 = vmatprep.subr.mxu0 0.0
    %849 = vmatpush2.xpose.msra.mxu0 0.0
    %850 = vmatprep.subr.mxu0 0.0
    %851 = vmatpush2.xpose.msra.mxu0 0.0
    %852 = vmatprep.subr.mxu0 0.0
    %853 = vmatpush2.xpose.msra.mxu0 0.0
    %854 = vmatprep.subr.mxu0 0.0
    %855 = vmatpush2.xpose.msra.mxu0 0.0
    %856 = vmatprep.subr.mxu0 0.0
    %857 = vmatpush2.xpose.msra.mxu0 0.0
    %858 = vmatprep.subr.mxu0 0.0
    %859 = vmatpush2.xpose.msra.mxu0 0.0
    %860 = vmatprep.subr.mxu0 0.0
    %861 = vmatpush2.xpose.msra.mxu0 0.0
    %862 = vmatprep.subr.mxu0 0.0
    %863 = vmatpush2.xpose.msra.mxu0 0.0
    %864 = vmatprep.subr.mxu0 0.0
    %865 = vmatpush2.xpose.msra.mxu0 0.0
    %866 = vmatprep.subr.mxu0 0.0
    %867 = vmatpush2.xpose.msra.mxu0 0.0
    %868 = vmatprep.mubr.f32.mxu0 0.0
    %869 = vmatmul.mubr.f32.gmra.mxu0 %v802
    %v870 = vpop.f32.mrf.mxu0
    %v871 = vadd.f32 0.0, %v870
    %v872 = vpop.f32.mrf.mxu0
    %873 = vdwg.mxu0
    %s874 = scalar_lea.vmem [#allocation12], 200
    %875 = vst.msk [vmem:[%s874] sm:$0xff] %vm191, %v871
    %v876 = vsel %vm191, %v651, -inf
    %877 = vmax.xlane.f32.xlu0 %v876
    %v878 = vpop.xlane.xlu0 %877
    %v879 = vsub.f32 %v651, %v878
    %v880 = vmul.f32 %v879, 1.442695
    %v881 = vpow.pop %v880
    %v882 = vsel %vm191, %v881, 0.0
    %883 = vadd.xlane.f32.xlu0 %v882
    %v884 = vpop.xlane.xlu0 %883
    %v885 = vrcp.pop %v884
    %v886 = vmul.f32 %v881, %v885
    %887 = vrot.lane.b32.xlu0 %v173, 56
    %v888 = vpop.permute.xlu0 %887
    %v891 = vsel %vm191, %v886, 0
    %893 = vmatprep.subr.mxu0 0.0
    %894 = vmatpush1.msra.mxu0 0.0
    %895 = vmatprep.subr.mxu0 0.0
    %896 = vmatpush1.msra.mxu0 0.0
    %897 = vmatprep.subr.mxu0 0.0
    %898 = vmatpush1.msra.mxu0 0.0
    %899 = vmatprep.subr.mxu0 0.0
    %900 = vmatpush1.msra.mxu0 0.0
    %901 = vmatprep.subr.mxu0 0.0
    %902 = vmatpush1.msra.mxu0 0.0
    %903 = vmatprep.subr.mxu0 0.0
    %904 = vmatpush1.msra.mxu0 0.0
    %905 = vmatprep.subr.mxu0 0.0
    %906 = vmatpush1.msra.mxu0 0.0
    %907 = vmatprep.subr.mxu0 0.0
    %908 = vmatpush1.msra.mxu0 0.0
    %909 = vmatprep.subr.mxu0 0.0
    %910 = vmatpush1.msra.mxu0 0.0
    %911 = vmatprep.subr.mxu0 0.0
    %912 = vmatpush1.msra.mxu0 0.0
    %913 = vmatprep.subr.mxu0 0.0
    %914 = vmatpush1.msra.mxu0 0.0
    %915 = vmatprep.subr.mxu0 0.0
    %916 = vmatpush1.msra.mxu0 0.0
    %917 = vmatprep.subr.mxu0 0.0
    %918 = vmatpush1.msra.mxu0 0.0
    %919 = vmatprep.subr.mxu0 0.0
    %920 = vmatpush1.msra.mxu0 0.0
    %921 = vmatprep.subr.mxu0 0.0
    %922 = vmatpush1.msra.mxu0 0.0
    %923 = vmatprep.subr.mxu0 0.0
    %924 = vmatpush1.msra.mxu0 %v888
    %925 = vmatprep.subr.mxu0 0.0
    %926 = vmatpush2.msra.mxu0 0.0
    %927 = vmatprep.subr.mxu0 0.0
    %928 = vmatpush2.msra.mxu0 0.0
    %929 = vmatprep.subr.mxu0 0.0
    %930 = vmatpush2.msra.mxu0 0.0
    %931 = vmatprep.subr.mxu0 0.0
    %932 = vmatpush2.msra.mxu0 0.0
    %933 = vmatprep.subr.mxu0 0.0
    %934 = vmatpush2.msra.mxu0 0.0
    %935 = vmatprep.subr.mxu0 0.0
    %936 = vmatpush2.msra.mxu0 0.0
    %937 = vmatprep.subr.mxu0 0.0
    %938 = vmatpush2.msra.mxu0 0.0
    %939 = vmatprep.subr.mxu0 0.0
    %940 = vmatpush2.msra.mxu0 0.0
    %941 = vmatprep.subr.mxu0 0.0
    %942 = vmatpush2.msra.mxu0 0.0
    %943 = vmatprep.subr.mxu0 0.0
    %944 = vmatpush2.msra.mxu0 0.0
    %945 = vmatprep.subr.mxu0 0.0
    %946 = vmatpush2.msra.mxu0 0.0
    %947 = vmatprep.subr.mxu0 0.0
    %948 = vmatpush2.msra.mxu0 0.0
    %949 = vmatprep.subr.mxu0 0.0
    %950 = vmatpush2.msra.mxu0 0.0
    %951 = vmatprep.subr.mxu0 0.0
    %952 = vmatpush2.msra.mxu0 0.0
    %953 = vmatprep.subr.mxu0 0.0
    %954 = vmatpush2.msra.mxu0 0.0
    %955 = vmatprep.subr.mxu0 0.0
    %956 = vmatpush2.msra.mxu0 0.0
    %957 = vmatprep.mubr.f32.mxu0 0.0
    %958 = vmatmul.mubr.f32.gmra.mxu0 %v891
    %v959 = vpop.f32.mrf.mxu0
    %v960 = vadd.f32 0.0, %v959
    %v961 = vpop.f32.mrf.mxu0
    %962 = vdwg.mxu0
    %964 = vrot.lane.b32.xlu0 %v960, 8
    %v965 = vpop.permute.xlu0 %964
    %vm967 = vcmask 130112
    %968 = vst.msk [vmem:[#allocation2] sm:$0xff] %vm967, %v965
    %969 = vrot.lane.b32.xlu0 %v181, 112
    %v970 = vpop.permute.xlu0 %969
    %971 = vrot.lane.b32.xlu0 %v181, 80
    %v972 = vpop.permute.xlu0 %971
    %v973 = vsel %vm191, %v970, 0
    %v975 = vsel %vm191, %v972, 0
    %977 = vmatprep.subr.mxu0 0.0
    %978 = vmatpush1.xpose.msra.mxu0 0.0
    %979 = vmatprep.subr.mxu0 0.0
    %980 = vmatpush1.xpose.msra.mxu0 0.0
    %981 = vmatprep.subr.mxu0 0.0
    %982 = vmatpush1.xpose.msra.mxu0 0.0
    %983 = vmatprep.subr.mxu0 0.0
    %984 = vmatpush1.xpose.msra.mxu0 0.0
    %985 = vmatprep.subr.mxu0 0.0
    %986 = vmatpush1.xpose.msra.mxu0 0.0
    %987 = vmatprep.subr.mxu0 0.0
    %988 = vmatpush1.xpose.msra.mxu0 0.0
    %989 = vmatprep.subr.mxu0 0.0
    %990 = vmatpush1.xpose.msra.mxu0 0.0
    %991 = vmatprep.subr.mxu0 0.0
    %992 = vmatpush1.xpose.msra.mxu0 0.0
    %993 = vmatprep.subr.mxu0 0.0
    %994 = vmatpush1.xpose.msra.mxu0 0.0
    %995 = vmatprep.subr.mxu0 0.0
    %996 = vmatpush1.xpose.msra.mxu0 0.0
    %997 = vmatprep.subr.mxu0 0.0
    %998 = vmatpush1.xpose.msra.mxu0 0.0
    %999 = vmatprep.subr.mxu0 0.0
    %1000 = vmatpush1.xpose.msra.mxu0 0.0
    %1001 = vmatprep.subr.mxu0 0.0
    %1002 = vmatpush1.xpose.msra.mxu0 0.0
    %1003 = vmatprep.subr.mxu0 0.0
    %1004 = vmatpush1.xpose.msra.mxu0 0.0
    %1005 = vmatprep.subr.mxu0 0.0
    %1006 = vmatpush1.xpose.msra.mxu0 0.0
    %1007 = vmatprep.subr.mxu0 0.0
    %1008 = vmatpush1.xpose.msra.mxu0 %v975
    %1009 = vmatprep.subr.mxu0 0.0
    %1010 = vmatpush2.xpose.msra.mxu0 0.0
    %1011 = vmatprep.subr.mxu0 0.0
    %1012 = vmatpush2.xpose.msra.mxu0 0.0
    %1013 = vmatprep.subr.mxu0 0.0
    %1014 = vmatpush2.xpose.msra.mxu0 0.0
    %1015 = vmatprep.subr.mxu0 0.0
    %1016 = vmatpush2.xpose.msra.mxu0 0.0
    %1017 = vmatprep.subr.mxu0 0.0
    %1018 = vmatpush2.xpose.msra.mxu0 0.0
    %1019 = vmatprep.subr.mxu0 0.0
    %1020 = vmatpush2.xpose.msra.mxu0 0.0
    %1021 = vmatprep.subr.mxu0 0.0
    %1022 = vmatpush2.xpose.msra.mxu0 0.0
    %1023 = vmatprep.subr.mxu0 0.0
    %1024 = vmatpush2.xpose.msra.mxu0 0.0
    %1025 = vmatprep.subr.mxu0 0.0
    %1026 = vmatpush2.xpose.msra.mxu0 0.0
    %1027 = vmatprep.subr.mxu0 0.0
    %1028 = vmatpush2.xpose.msra.mxu0 0.0
    %1029 = vmatprep.subr.mxu0 0.0
    %1030 = vmatpush2.xpose.msra.mxu0 0.0
    %1031 = vmatprep.subr.mxu0 0.0
    %1032 = vmatpush2.xpose.msra.mxu0 0.0
    %1033 = vmatprep.subr.mxu0 0.0
    %1034 = vmatpush2.xpose.msra.mxu0 0.0
    %1035 = vmatprep.subr.mxu0 0.0
    %1036 = vmatpush2.xpose.msra.mxu0 0.0
    %1037 = vmatprep.subr.mxu0 0.0
    %1038 = vmatpush2.xpose.msra.mxu0 0.0
    %1039 = vmatprep.subr.mxu0 0.0
    %1040 = vmatpush2.xpose.msra.mxu0 0.0
    %1041 = vmatprep.mubr.f32.mxu0 0.0
    %1042 = vmatmul.mubr.f32.gmra.mxu0 %v973
    %v1043 = vpop.f32.mrf.mxu0
    %v1044 = vadd.f32 %v187, %v1043
    %v1045 = vpop.f32.mrf.mxu0
    %1046 = vdwg.mxu0
    %s1047 = scalar_lea.vmem [#allocation12], 16
    %1048 = vst.msk [vmem:[%s1047] sm:$0xff] %vm191, %v1044
    %1049 = vmatprep.subr.mxu0 0.0
    %1050 = vmatpush1.xpose.msra.mxu0 0.0
    %1051 = vmatprep.subr.mxu0 0.0
    %1052 = vmatpush1.xpose.msra.mxu0 0.0
    %1053 = vmatprep.subr.mxu0 0.0
    %1054 = vmatpush1.xpose.msra.mxu0 0.0
    %1055 = vmatprep.subr.mxu0 0.0
    %1056 = vmatpush1.xpose.msra.mxu0 0.0
    %1057 = vmatprep.subr.mxu0 0.0
    %1058 = vmatpush1.xpose.msra.mxu0 0.0
    %1059 = vmatprep.subr.mxu0 0.0
    %1060 = vmatpush1.xpose.msra.mxu0 0.0
    %1061 = vmatprep.subr.mxu0 0.0
    %1062 = vmatpush1.xpose.msra.mxu0 0.0
    %1063 = vmatprep.subr.mxu0 0.0
    %1064 = vmatpush1.xpose.msra.mxu0 0.0
    %1065 = vmatprep.subr.mxu0 0.0
    %1066 = vmatpush1.xpose.msra.mxu0 0.0
    %1067 = vmatprep.subr.mxu0 0.0
    %1068 = vmatpush1.xpose.msra.mxu0 0.0
    %1069 = vmatprep.subr.mxu0 0.0
    %1070 = vmatpush1.xpose.msra.mxu0 0.0
    %1071 = vmatprep.subr.mxu0 0.0
    %1072 = vmatpush1.xpose.msra.mxu0 0.0
    %1073 = vmatprep.subr.mxu0 0.0
    %1074 = vmatpush1.xpose.msra.mxu0 0.0
    %1075 = vmatprep.subr.mxu0 0.0
    %1076 = vmatpush1.xpose.msra.mxu0 0.0
    %1077 = vmatprep.subr.mxu0 0.0
    %1078 = vmatpush1.xpose.msra.mxu0 0.0
    %1079 = vmatprep.subr.mxu0 0.0
    %1080 = vmatpush1.xpose.msra.mxu0 %v973
    %1081 = vmatprep.subr.mxu0 0.0
    %1082 = vmatpush2.xpose.msra.mxu0 0.0
    %1083 = vmatprep.subr.mxu0 0.0
    %1084 = vmatpush2.xpose.msra.mxu0 0.0
    %1085 = vmatprep.subr.mxu0 0.0
    %1086 = vmatpush2.xpose.msra.mxu0 0.0
    %1087 = vmatprep.subr.mxu0 0.0
    %1088 = vmatpush2.xpose.msra.mxu0 0.0
    %1089 = vmatprep.subr.mxu0 0.0
    %1090 = vmatpush2.xpose.msra.mxu0 0.0
    %1091 = vmatprep.subr.mxu0 0.0
    %1092 = vmatpush2.xpose.msra.mxu0 0.0
    %1093 = vmatprep.subr.mxu0 0.0
    %1094 = vmatpush2.xpose.msra.mxu0 0.0
    %1095 = vmatprep.subr.mxu0 0.0
    %1096 = vmatpush2.xpose.msra.mxu0 0.0
    %1097 = vmatprep.subr.mxu0 0.0
    %1098 = vmatpush2.xpose.msra.mxu0 0.0
    %1099 = vmatprep.subr.mxu0 0.0
    %1100 = vmatpush2.xpose.msra.mxu0 0.0
    %1101 = vmatprep.subr.mxu0 0.0
    %1102 = vmatpush2.xpose.msra.mxu0 0.0
    %1103 = vmatprep.subr.mxu0 0.0
    %1104 = vmatpush2.xpose.msra.mxu0 0.0
    %1105 = vmatprep.subr.mxu0 0.0
    %1106 = vmatpush2.xpose.msra.mxu0 0.0
    %1107 = vmatprep.subr.mxu0 0.0
    %1108 = vmatpush2.xpose.msra.mxu0 0.0
    %1109 = vmatprep.subr.mxu0 0.0
    %1110 = vmatpush2.xpose.msra.mxu0 0.0
    %1111 = vmatprep.subr.mxu0 0.0
    %1112 = vmatpush2.xpose.msra.mxu0 0.0
    %1113 = vmatprep.mubr.f32.mxu0 0.0
    %1114 = vmatmul.mubr.f32.gmra.mxu0 %v973
    %v1115 = vpop.f32.mrf.mxu0
    %v1116 = vadd.f32 0.0, %v1115
    %v1117 = vpop.f32.mrf.mxu0
    %1118 = vdwg.mxu0
    %s1119 = scalar_lea.vmem [#allocation12], 80
    %1120 = vst.msk [vmem:[%s1119] sm:$0xff] %vm191, %v1116
    %1121 = vmatprep.subr.mxu0 0.0
    %1122 = vmatpush1.xpose.msra.mxu0 0.0
    %1123 = vmatprep.subr.mxu0 0.0
    %1124 = vmatpush1.xpose.msra.mxu0 0.0
    %1125 = vmatprep.subr.mxu0 0.0
    %1126 = vmatpush1.xpose.msra.mxu0 0.0
    %1127 = vmatprep.subr.mxu0 0.0
    %1128 = vmatpush1.xpose.msra.mxu0 0.0
    %1129 = vmatprep.subr.mxu0 0.0
    %1130 = vmatpush1.xpose.msra.mxu0 0.0
    %1131 = vmatprep.subr.mxu0 0.0
    %1132 = vmatpush1.xpose.msra.mxu0 0.0
    %1133 = vmatprep.subr.mxu0 0.0
    %1134 = vmatpush1.xpose.msra.mxu0 0.0
    %1135 = vmatprep.subr.mxu0 0.0
    %1136 = vmatpush1.xpose.msra.mxu0 0.0
    %1137 = vmatprep.subr.mxu0 0.0
    %1138 = vmatpush1.xpose.msra.mxu0 0.0
    %1139 = vmatprep.subr.mxu0 0.0
    %1140 = vmatpush1.xpose.msra.mxu0 0.0
    %1141 = vmatprep.subr.mxu0 0.0
    %1142 = vmatpush1.xpose.msra.mxu0 0.0
    %1143 = vmatprep.subr.mxu0 0.0
    %1144 = vmatpush1.xpose.msra.mxu0 0.0
    %1145 = vmatprep.subr.mxu0 0.0
    %1146 = vmatpush1.xpose.msra.mxu0 0.0
    %1147 = vmatprep.subr.mxu0 0.0
    %1148 = vmatpush1.xpose.msra.mxu0 0.0
    %1149 = vmatprep.subr.mxu0 0.0
    %1150 = vmatpush1.xpose.msra.mxu0 0.0
    %1151 = vmatprep.subr.mxu0 0.0
    %1152 = vmatpush1.xpose.msra.mxu0 %v975
    %1153 = vmatprep.subr.mxu0 0.0
    %1154 = vmatpush2.xpose.msra.mxu0 0.0
    %1155 = vmatprep.subr.mxu0 0.0
    %1156 = vmatpush2.xpose.msra.mxu0 0.0
    %1157 = vmatprep.subr.mxu0 0.0
    %1158 = vmatpush2.xpose.msra.mxu0 0.0
    %1159 = vmatprep.subr.mxu0 0.0
    %1160 = vmatpush2.xpose.msra.mxu0 0.0
    %1161 = vmatprep.subr.mxu0 0.0
    %1162 = vmatpush2.xpose.msra.mxu0 0.0
    %1163 = vmatprep.subr.mxu0 0.0
    %1164 = vmatpush2.xpose.msra.mxu0 0.0
    %1165 = vmatprep.subr.mxu0 0.0
    %1166 = vmatpush2.xpose.msra.mxu0 0.0
    %1167 = vmatprep.subr.mxu0 0.0
    %1168 = vmatpush2.xpose.msra.mxu0 0.0
    %1169 = vmatprep.subr.mxu0 0.0
    %1170 = vmatpush2.xpose.msra.mxu0 0.0
    %1171 = vmatprep.subr.mxu0 0.0
    %1172 = vmatpush2.xpose.msra.mxu0 0.0
    %1173 = vmatprep.subr.mxu0 0.0
    %1174 = vmatpush2.xpose.msra.mxu0 0.0
    %1175 = vmatprep.subr.mxu0 0.0
    %1176 = vmatpush2.xpose.msra.mxu0 0.0
    %1177 = vmatprep.subr.mxu0 0.0
    %1178 = vmatpush2.xpose.msra.mxu0 0.0
    %1179 = vmatprep.subr.mxu0 0.0
    %1180 = vmatpush2.xpose.msra.mxu0 0.0
    %1181 = vmatprep.subr.mxu0 0.0
    %1182 = vmatpush2.xpose.msra.mxu0 0.0
    %1183 = vmatprep.subr.mxu0 0.0
    %1184 = vmatpush2.xpose.msra.mxu0 0.0
    %1185 = vmatprep.mubr.f32.mxu0 0.0
    %1186 = vmatmul.mubr.f32.gmra.mxu0 %v975
    %v1187 = vpop.f32.mrf.mxu0
    %v1188 = vadd.f32 0.0, %v1187
    %v1189 = vpop.f32.mrf.mxu0
    %1190 = vdwg.mxu0
    %s1191 = scalar_lea.vmem [#allocation12], 144
    %1192 = vst.msk [vmem:[%s1191] sm:$0xff] %vm191, %v1188
    %1193 = vrot.lane.b32.xlu0 %v181, 48
    %v1194 = vpop.permute.xlu0 %1193
    %v1195 = vsel %vm191, %v1194, 0
    %1197 = vmatprep.subr.mxu0 0.0
    %1198 = vmatpush1.xpose.msra.mxu0 0.0
    %1199 = vmatprep.subr.mxu0 0.0
    %1200 = vmatpush1.xpose.msra.mxu0 0.0
    %1201 = vmatprep.subr.mxu0 0.0
    %1202 = vmatpush1.xpose.msra.mxu0 0.0
    %1203 = vmatprep.subr.mxu0 0.0
    %1204 = vmatpush1.xpose.msra.mxu0 0.0
    %1205 = vmatprep.subr.mxu0 0.0
    %1206 = vmatpush1.xpose.msra.mxu0 0.0
    %1207 = vmatprep.subr.mxu0 0.0
    %1208 = vmatpush1.xpose.msra.mxu0 0.0
    %1209 = vmatprep.subr.mxu0 0.0
    %1210 = vmatpush1.xpose.msra.mxu0 0.0
    %1211 = vmatprep.subr.mxu0 0.0
    %1212 = vmatpush1.xpose.msra.mxu0 0.0
    %1213 = vmatprep.subr.mxu0 0.0
    %1214 = vmatpush1.xpose.msra.mxu0 0.0
    %1215 = vmatprep.subr.mxu0 0.0
    %1216 = vmatpush1.xpose.msra.mxu0 0.0
    %1217 = vmatprep.subr.mxu0 0.0
    %1218 = vmatpush1.xpose.msra.mxu0 0.0
    %1219 = vmatprep.subr.mxu0 0.0
    %1220 = vmatpush1.xpose.msra.mxu0 0.0
    %1221 = vmatprep.subr.mxu0 0.0
    %1222 = vmatpush1.xpose.msra.mxu0 0.0
    %1223 = vmatprep.subr.mxu0 0.0
    %1224 = vmatpush1.xpose.msra.mxu0 0.0
    %1225 = vmatprep.subr.mxu0 0.0
    %1226 = vmatpush1.xpose.msra.mxu0 0.0
    %1227 = vmatprep.subr.mxu0 0.0
    %1228 = vmatpush1.xpose.msra.mxu0 %v1195
    %1229 = vmatprep.subr.mxu0 0.0
    %1230 = vmatpush2.xpose.msra.mxu0 0.0
    %1231 = vmatprep.subr.mxu0 0.0
    %1232 = vmatpush2.xpose.msra.mxu0 0.0
    %1233 = vmatprep.subr.mxu0 0.0
    %1234 = vmatpush2.xpose.msra.mxu0 0.0
    %1235 = vmatprep.subr.mxu0 0.0
    %1236 = vmatpush2.xpose.msra.mxu0 0.0
    %1237 = vmatprep.subr.mxu0 0.0
    %1238 = vmatpush2.xpose.msra.mxu0 0.0
    %1239 = vmatprep.subr.mxu0 0.0
    %1240 = vmatpush2.xpose.msra.mxu0 0.0
    %1241 = vmatprep.subr.mxu0 0.0
    %1242 = vmatpush2.xpose.msra.mxu0 0.0
    %1243 = vmatprep.subr.mxu0 0.0
    %1244 = vmatpush2.xpose.msra.mxu0 0.0
    %1245 = vmatprep.subr.mxu0 0.0
    %1246 = vmatpush2.xpose.msra.mxu0 0.0
    %1247 = vmatprep.subr.mxu0 0.0
    %1248 = vmatpush2.xpose.msra.mxu0 0.0
    %1249 = vmatprep.subr.mxu0 0.0
    %1250 = vmatpush2.xpose.msra.mxu0 0.0
    %1251 = vmatprep.subr.mxu0 0.0
    %1252 = vmatpush2.xpose.msra.mxu0 0.0
    %1253 = vmatprep.subr.mxu0 0.0
    %1254 = vmatpush2.xpose.msra.mxu0 0.0
    %1255 = vmatprep.subr.mxu0 0.0
    %1256 = vmatpush2.xpose.msra.mxu0 0.0
    %1257 = vmatprep.subr.mxu0 0.0
    %1258 = vmatpush2.xpose.msra.mxu0 0.0
    %1259 = vmatprep.subr.mxu0 0.0
    %1260 = vmatpush2.xpose.msra.mxu0 0.0
    %1261 = vmatprep.mubr.f32.mxu0 0.0
    %1262 = vmatmul.mubr.f32.gmra.mxu0 %v1195
    %v1263 = vpop.f32.mrf.mxu0
    %v1264 = vadd.f32 0.0, %v1263
    %v1265 = vpop.f32.mrf.mxu0
    %1266 = vdwg.mxu0
    %s1267 = scalar_lea.vmem [#allocation12], 208
    %1268 = vst.msk [vmem:[%s1267] sm:$0xff] %vm191, %v1264
    %v1269 = vsel %vm191, %v1044, -inf
    %1270 = vmax.xlane.f32.xlu0 %v1269
    %v1271 = vpop.xlane.xlu0 %1270
    %v1272 = vsub.f32 %v1044, %v1271
    %v1273 = vmul.f32 %v1272, 1.442695
    %v1274 = vpow.pop %v1273
    %v1275 = vsel %vm191, %v1274, 0.0
    %1276 = vadd.xlane.f32.xlu0 %v1275
    %v1277 = vpop.xlane.xlu0 %1276
    %v1278 = vrcp.pop %v1277
    %v1279 = vmul.f32 %v1274, %v1278
    %1280 = vrot.lane.b32.xlu0 %v173, 48
    %v1281 = vpop.permute.xlu0 %1280
    %v1284 = vsel %vm191, %v1279, 0
    %1286 = vmatprep.subr.mxu0 0.0
    %1287 = vmatpush1.msra.mxu0 0.0
    %1288 = vmatprep.subr.mxu0 0.0
    %1289 = vmatpush1.msra.mxu0 0.0
    %1290 = vmatprep.subr.mxu0 0.0
    %1291 = vmatpush1.msra.mxu0 0.0
    %1292 = vmatprep.subr.mxu0 0.0
    %1293 = vmatpush1.msra.mxu0 0.0
    %1294 = vmatprep.subr.mxu0 0.0
    %1295 = vmatpush1.msra.mxu0 0.0
    %1296 = vmatprep.subr.mxu0 0.0
    %1297 = vmatpush1.msra.mxu0 0.0
    %1298 = vmatprep.subr.mxu0 0.0
    %1299 = vmatpush1.msra.mxu0 0.0
    %1300 = vmatprep.subr.mxu0 0.0
    %1301 = vmatpush1.msra.mxu0 0.0
    %1302 = vmatprep.subr.mxu0 0.0
    %1303 = vmatpush1.msra.mxu0 0.0
    %1304 = vmatprep.subr.mxu0 0.0
    %1305 = vmatpush1.msra.mxu0 0.0
    %1306 = vmatprep.subr.mxu0 0.0
    %1307 = vmatpush1.msra.mxu0 0.0
    %1308 = vmatprep.subr.mxu0 0.0
    %1309 = vmatpush1.msra.mxu0 0.0
    %1310 = vmatprep.subr.mxu0 0.0
    %1311 = vmatpush1.msra.mxu0 0.0
    %1312 = vmatprep.subr.mxu0 0.0
    %1313 = vmatpush1.msra.mxu0 0.0
    %1314 = vmatprep.subr.mxu0 0.0
    %1315 = vmatpush1.msra.mxu0 0.0
    %1316 = vmatprep.subr.mxu0 0.0
    %1317 = vmatpush1.msra.mxu0 %v1281
    %1318 = vmatprep.subr.mxu0 0.0
    %1319 = vmatpush2.msra.mxu0 0.0
    %1320 = vmatprep.subr.mxu0 0.0
    %1321 = vmatpush2.msra.mxu0 0.0
    %1322 = vmatprep.subr.mxu0 0.0
    %1323 = vmatpush2.msra.mxu0 0.0
    %1324 = vmatprep.subr.mxu0 0.0
    %1325 = vmatpush2.msra.mxu0 0.0
    %1326 = vmatprep.subr.mxu0 0.0
    %1327 = vmatpush2.msra.mxu0 0.0
    %1328 = vmatprep.subr.mxu0 0.0
    %1329 = vmatpush2.msra.mxu0 0.0
    %1330 = vmatprep.subr.mxu0 0.0
    %1331 = vmatpush2.msra.mxu0 0.0
    %1332 = vmatprep.subr.mxu0 0.0
    %1333 = vmatpush2.msra.mxu0 0.0
    %1334 = vmatprep.subr.mxu0 0.0
    %1335 = vmatpush2.msra.mxu0 0.0
    %1336 = vmatprep.subr.mxu0 0.0
    %1337 = vmatpush2.msra.mxu0 0.0
    %1338 = vmatprep.subr.mxu0 0.0
    %1339 = vmatpush2.msra.mxu0 0.0
    %1340 = vmatprep.subr.mxu0 0.0
    %1341 = vmatpush2.msra.mxu0 0.0
    %1342 = vmatprep.subr.mxu0 0.0
    %1343 = vmatpush2.msra.mxu0 0.0
    %1344 = vmatprep.subr.mxu0 0.0
    %1345 = vmatpush2.msra.mxu0 0.0
    %1346 = vmatprep.subr.mxu0 0.0
    %1347 = vmatpush2.msra.mxu0 0.0
    %1348 = vmatprep.subr.mxu0 0.0
    %1349 = vmatpush2.msra.mxu0 0.0
    %1350 = vmatprep.mubr.f32.mxu0 0.0
    %1351 = vmatmul.mubr.f32.gmra.mxu0 %v1284
    %v1352 = vpop.f32.mrf.mxu0
    %v1353 = vadd.f32 0.0, %v1352
    %v1354 = vpop.f32.mrf.mxu0
    %1355 = vdwg.mxu0
    %1357 = vrot.lane.b32.xlu0 %v1353, 16
    %v1358 = vpop.permute.xlu0 %1357
    %vm1360 = vcmask 195712
    %1361 = vst.msk [vmem:[#allocation2] sm:$0xff] %vm1360, %v1358
    %1362 = vrot.lane.b32.xlu0 %v181, 104
    %v1363 = vpop.permute.xlu0 %1362
    %1364 = vrot.lane.b32.xlu0 %v181, 72
    %v1365 = vpop.permute.xlu0 %1364
    %v1366 = vsel %vm191, %v1363, 0
    %v1368 = vsel %vm191, %v1365, 0
    %1370 = vmatprep.subr.mxu0 0.0
    %1371 = vmatpush1.xpose.msra.mxu0 0.0
    %1372 = vmatprep.subr.mxu0 0.0
    %1373 = vmatpush1.xpose.msra.mxu0 0.0
    %1374 = vmatprep.subr.mxu0 0.0
    %1375 = vmatpush1.xpose.msra.mxu0 0.0
    %1376 = vmatprep.subr.mxu0 0.0
    %1377 = vmatpush1.xpose.msra.mxu0 0.0
    %1378 = vmatprep.subr.mxu0 0.0
    %1379 = vmatpush1.xpose.msra.mxu0 0.0
    %1380 = vmatprep.subr.mxu0 0.0
    %1381 = vmatpush1.xpose.msra.mxu0 0.0
    %1382 = vmatprep.subr.mxu0 0.0
    %1383 = vmatpush1.xpose.msra.mxu0 0.0
    %1384 = vmatprep.subr.mxu0 0.0
    %1385 = vmatpush1.xpose.msra.mxu0 0.0
    %1386 = vmatprep.subr.mxu0 0.0
    %1387 = vmatpush1.xpose.msra.mxu0 0.0
    %1388 = vmatprep.subr.mxu0 0.0
    %1389 = vmatpush1.xpose.msra.mxu0 0.0
    %1390 = vmatprep.subr.mxu0 0.0
    %1391 = vmatpush1.xpose.msra.mxu0 0.0
    %1392 = vmatprep.subr.mxu0 0.0
    %1393 = vmatpush1.xpose.msra.mxu0 0.0
    %1394 = vmatprep.subr.mxu0 0.0
    %1395 = vmatpush1.xpose.msra.mxu0 0.0
    %1396 = vmatprep.subr.mxu0 0.0
    %1397 = vmatpush1.xpose.msra.mxu0 0.0
    %1398 = vmatprep.subr.mxu0 0.0
    %1399 = vmatpush1.xpose.msra.mxu0 0.0
    %1400 = vmatprep.subr.mxu0 0.0
    %1401 = vmatpush1.xpose.msra.mxu0 %v1368
    %1402 = vmatprep.subr.mxu0 0.0
    %1403 = vmatpush2.xpose.msra.mxu0 0.0
    %1404 = vmatprep.subr.mxu0 0.0
    %1405 = vmatpush2.xpose.msra.mxu0 0.0
    %1406 = vmatprep.subr.mxu0 0.0
    %1407 = vmatpush2.xpose.msra.mxu0 0.0
    %1408 = vmatprep.subr.mxu0 0.0
    %1409 = vmatpush2.xpose.msra.mxu0 0.0
    %1410 = vmatprep.subr.mxu0 0.0
    %1411 = vmatpush2.xpose.msra.mxu0 0.0
    %1412 = vmatprep.subr.mxu0 0.0
    %1413 = vmatpush2.xpose.msra.mxu0 0.0
    %1414 = vmatprep.subr.mxu0 0.0
    %1415 = vmatpush2.xpose.msra.mxu0 0.0
    %1416 = vmatprep.subr.mxu0 0.0
    %1417 = vmatpush2.xpose.msra.mxu0 0.0
    %1418 = vmatprep.subr.mxu0 0.0
    %1419 = vmatpush2.xpose.msra.mxu0 0.0
    %1420 = vmatprep.subr.mxu0 0.0
    %1421 = vmatpush2.xpose.msra.mxu0 0.0
    %1422 = vmatprep.subr.mxu0 0.0
    %1423 = vmatpush2.xpose.msra.mxu0 0.0
    %1424 = vmatprep.subr.mxu0 0.0
    %1425 = vmatpush2.xpose.msra.mxu0 0.0
    %1426 = vmatprep.subr.mxu0 0.0
    %1427 = vmatpush2.xpose.msra.mxu0 0.0
    %1428 = vmatprep.subr.mxu0 0.0
    %1429 = vmatpush2.xpose.msra.mxu0 0.0
    %1430 = vmatprep.subr.mxu0 0.0
    %1431 = vmatpush2.xpose.msra.mxu0 0.0
    %1432 = vmatprep.subr.mxu0 0.0
    %1433 = vmatpush2.xpose.msra.mxu0 0.0
    %1434 = vmatprep.mubr.f32.mxu0 0.0
    %1435 = vmatmul.mubr.f32.gmra.mxu0 %v1366
    %v1436 = vpop.f32.mrf.mxu0
    %v1437 = vadd.f32 %v187, %v1436
    %v1438 = vpop.f32.mrf.mxu0
    %1439 = vdwg.mxu0
    %s1440 = scalar_lea.vmem [#allocation12], 24
    %1441 = vst.msk [vmem:[%s1440] sm:$0xff] %vm191, %v1437
    %1442 = vmatprep.subr.mxu0 0.0
    %1443 = vmatpush1.xpose.msra.mxu0 0.0
    %1444 = vmatprep.subr.mxu0 0.0
    %1445 = vmatpush1.xpose.msra.mxu0 0.0
    %1446 = vmatprep.subr.mxu0 0.0
    %1447 = vmatpush1.xpose.msra.mxu0 0.0
    %1448 = vmatprep.subr.mxu0 0.0
    %1449 = vmatpush1.xpose.msra.mxu0 0.0
    %1450 = vmatprep.subr.mxu0 0.0
    %1451 = vmatpush1.xpose.msra.mxu0 0.0
    %1452 = vmatprep.subr.mxu0 0.0
    %1453 = vmatpush1.xpose.msra.mxu0 0.0
    %1454 = vmatprep.subr.mxu0 0.0
    %1455 = vmatpush1.xpose.msra.mxu0 0.0
    %1456 = vmatprep.subr.mxu0 0.0
    %1457 = vmatpush1.xpose.msra.mxu0 0.0
    %1458 = vmatprep.subr.mxu0 0.0
    %1459 = vmatpush1.xpose.msra.mxu0 0.0
    %1460 = vmatprep.subr.mxu0 0.0
    %1461 = vmatpush1.xpose.msra.mxu0 0.0
    %1462 = vmatprep.subr.mxu0 0.0
    %1463 = vmatpush1.xpose.msra.mxu0 0.0
    %1464 = vmatprep.subr.mxu0 0.0
    %1465 = vmatpush1.xpose.msra.mxu0 0.0
    %1466 = vmatprep.subr.mxu0 0.0
    %1467 = vmatpush1.xpose.msra.mxu0 0.0
    %1468 = vmatprep.subr.mxu0 0.0
    %1469 = vmatpush1.xpose.msra.mxu0 0.0
    %1470 = vmatprep.subr.mxu0 0.0
    %1471 = vmatpush1.xpose.msra.mxu0 0.0
    %1472 = vmatprep.subr.mxu0 0.0
    %1473 = vmatpush1.xpose.msra.mxu0 %v1366
    %1474 = vmatprep.subr.mxu0 0.0
    %1475 = vmatpush2.xpose.msra.mxu0 0.0
    %1476 = vmatprep.subr.mxu0 0.0
    %1477 = vmatpush2.xpose.msra.mxu0 0.0
    %1478 = vmatprep.subr.mxu0 0.0
    %1479 = vmatpush2.xpose.msra.mxu0 0.0
    %1480 = vmatprep.subr.mxu0 0.0
    %1481 = vmatpush2.xpose.msra.mxu0 0.0
    %1482 = vmatprep.subr.mxu0 0.0
    %1483 = vmatpush2.xpose.msra.mxu0 0.0
    %1484 = vmatprep.subr.mxu0 0.0
    %1485 = vmatpush2.xpose.msra.mxu0 0.0
    %1486 = vmatprep.subr.mxu0 0.0
    %1487 = vmatpush2.xpose.msra.mxu0 0.0
    %1488 = vmatprep.subr.mxu0 0.0
    %1489 = vmatpush2.xpose.msra.mxu0 0.0
    %1490 = vmatprep.subr.mxu0 0.0
    %1491 = vmatpush2.xpose.msra.mxu0 0.0
    %1492 = vmatprep.subr.mxu0 0.0
    %1493 = vmatpush2.xpose.msra.mxu0 0.0
    %1494 = vmatprep.subr.mxu0 0.0
    %1495 = vmatpush2.xpose.msra.mxu0 0.0
    %1496 = vmatprep.subr.mxu0 0.0
    %1497 = vmatpush2.xpose.msra.mxu0 0.0
    %1498 = vmatprep.subr.mxu0 0.0
    %1499 = vmatpush2.xpose.msra.mxu0 0.0
    %1500 = vmatprep.subr.mxu0 0.0
    %1501 = vmatpush2.xpose.msra.mxu0 0.0
    %1502 = vmatprep.subr.mxu0 0.0
    %1503 = vmatpush2.xpose.msra.mxu0 0.0
    %1504 = vmatprep.subr.mxu0 0.0
    %1505 = vmatpush2.xpose.msra.mxu0 0.0
    %1506 = vmatprep.mubr.f32.mxu0 0.0
    %1507 = vmatmul.mubr.f32.gmra.mxu0 %v1366
    %v1508 = vpop.f32.mrf.mxu0
    %v1509 = vadd.f32 0.0, %v1508
    %v1510 = vpop.f32.mrf.mxu0
    %1511 = vdwg.mxu0
    %s1512 = scalar_lea.vmem [#allocation12], 88
    %1513 = vst.msk [vmem:[%s1512] sm:$0xff] %vm191, %v1509
    %1514 = vmatprep.subr.mxu0 0.0
    %1515 = vmatpush1.xpose.msra.mxu0 0.0
    %1516 = vmatprep.subr.mxu0 0.0
    %1517 = vmatpush1.xpose.msra.mxu0 0.0
    %1518 = vmatprep.subr.mxu0 0.0
    %1519 = vmatpush1.xpose.msra.mxu0 0.0
    %1520 = vmatprep.subr.mxu0 0.0
    %1521 = vmatpush1.xpose.msra.mxu0 0.0
    %1522 = vmatprep.subr.mxu0 0.0
    %1523 = vmatpush1.xpose.msra.mxu0 0.0
    %1524 = vmatprep.subr.mxu0 0.0
    %1525 = vmatpush1.xpose.msra.mxu0 0.0
    %1526 = vmatprep.subr.mxu0 0.0
    %1527 = vmatpush1.xpose.msra.mxu0 0.0
    %1528 = vmatprep.subr.mxu0 0.0
    %1529 = vmatpush1.xpose.msra.mxu0 0.0
    %1530 = vmatprep.subr.mxu0 0.0
    %1531 = vmatpush1.xpose.msra.mxu0 0.0
    %1532 = vmatprep.subr.mxu0 0.0
    %1533 = vmatpush1.xpose.msra.mxu0 0.0
    %1534 = vmatprep.subr.mxu0 0.0
    %1535 = vmatpush1.xpose.msra.mxu0 0.0
    %1536 = vmatprep.subr.mxu0 0.0
    %1537 = vmatpush1.xpose.msra.mxu0 0.0
    %1538 = vmatprep.subr.mxu0 0.0
    %1539 = vmatpush1.xpose.msra.mxu0 0.0
    %1540 = vmatprep.subr.mxu0 0.0
    %1541 = vmatpush1.xpose.msra.mxu0 0.0
    %1542 = vmatprep.subr.mxu0 0.0
    %1543 = vmatpush1.xpose.msra.mxu0 0.0
    %1544 = vmatprep.subr.mxu0 0.0
    %1545 = vmatpush1.xpose.msra.mxu0 %v1368
    %1546 = vmatprep.subr.mxu0 0.0
    %1547 = vmatpush2.xpose.msra.mxu0 0.0
    %1548 = vmatprep.subr.mxu0 0.0
    %1549 = vmatpush2.xpose.msra.mxu0 0.0
    %1550 = vmatprep.subr.mxu0 0.0
    %1551 = vmatpush2.xpose.msra.mxu0 0.0
    %1552 = vmatprep.subr.mxu0 0.0
    %1553 = vmatpush2.xpose.msra.mxu0 0.0
    %1554 = vmatprep.subr.mxu0 0.0
    %1555 = vmatpush2.xpose.msra.mxu0 0.0
    %1556 = vmatprep.subr.mxu0 0.0
    %1557 = vmatpush2.xpose.msra.mxu0 0.0
    %1558 = vmatprep.subr.mxu0 0.0
    %1559 = vmatpush2.xpose.msra.mxu0 0.0
    %1560 = vmatprep.subr.mxu0 0.0
    %1561 = vmatpush2.xpose.msra.mxu0 0.0
    %1562 = vmatprep.subr.mxu0 0.0
    %1563 = vmatpush2.xpose.msra.mxu0 0.0
    %1564 = vmatprep.subr.mxu0 0.0
    %1565 = vmatpush2.xpose.msra.mxu0 0.0
    %1566 = vmatprep.subr.mxu0 0.0
    %1567 = vmatpush2.xpose.msra.mxu0 0.0
    %1568 = vmatprep.subr.mxu0 0.0
    %1569 = vmatpush2.xpose.msra.mxu0 0.0
    %1570 = vmatprep.subr.mxu0 0.0
    %1571 = vmatpush2.xpose.msra.mxu0 0.0
    %1572 = vmatprep.subr.mxu0 0.0
    %1573 = vmatpush2.xpose.msra.mxu0 0.0
    %1574 = vmatprep.subr.mxu0 0.0
    %1575 = vmatpush2.xpose.msra.mxu0 0.0
    %1576 = vmatprep.subr.mxu0 0.0
    %1577 = vmatpush2.xpose.msra.mxu0 0.0
    %1578 = vmatprep.mubr.f32.mxu0 0.0
    %1579 = vmatmul.mubr.f32.gmra.mxu0 %v1368
    %v1580 = vpop.f32.mrf.mxu0
    %v1581 = vadd.f32 0.0, %v1580
    %v1582 = vpop.f32.mrf.mxu0
    %1583 = vdwg.mxu0
    %s1584 = scalar_lea.vmem [#allocation12], 152
    %1585 = vst.msk [vmem:[%s1584] sm:$0xff] %vm191, %v1581
    %1586 = vrot.lane.b32.xlu0 %v181, 40
    %v1587 = vpop.permute.xlu0 %1586
    %v1588 = vsel %vm191, %v1587, 0
    %1590 = vmatprep.subr.mxu0 0.0
    %1591 = vmatpush1.xpose.msra.mxu0 0.0
    %1592 = vmatprep.subr.mxu0 0.0
    %1593 = vmatpush1.xpose.msra.mxu0 0.0
    %1594 = vmatprep.subr.mxu0 0.0
    %1595 = vmatpush1.xpose.msra.mxu0 0.0
    %1596 = vmatprep.subr.mxu0 0.0
    %1597 = vmatpush1.xpose.msra.mxu0 0.0
    %1598 = vmatprep.subr.mxu0 0.0
    %1599 = vmatpush1.xpose.msra.mxu0 0.0
    %1600 = vmatprep.subr.mxu0 0.0
    %1601 = vmatpush1.xpose.msra.mxu0 0.0
    %1602 = vmatprep.subr.mxu0 0.0
    %1603 = vmatpush1.xpose.msra.mxu0 0.0
    %1604 = vmatprep.subr.mxu0 0.0
    %1605 = vmatpush1.xpose.msra.mxu0 0.0
    %1606 = vmatprep.subr.mxu0 0.0
    %1607 = vmatpush1.xpose.msra.mxu0 0.0
    %1608 = vmatprep.subr.mxu0 0.0
    %1609 = vmatpush1.xpose.msra.mxu0 0.0
    %1610 = vmatprep.subr.mxu0 0.0
    %1611 = vmatpush1.xpose.msra.mxu0 0.0
    %1612 = vmatprep.subr.mxu0 0.0
    %1613 = vmatpush1.xpose.msra.mxu0 0.0
    %1614 = vmatprep.subr.mxu0 0.0
    %1615 = vmatpush1.xpose.msra.mxu0 0.0
    %1616 = vmatprep.subr.mxu0 0.0
    %1617 = vmatpush1.xpose.msra.mxu0 0.0
    %1618 = vmatprep.subr.mxu0 0.0
    %1619 = vmatpush1.xpose.msra.mxu0 0.0
    %1620 = vmatprep.subr.mxu0 0.0
    %1621 = vmatpush1.xpose.msra.mxu0 %v1588
    %1622 = vmatprep.subr.mxu0 0.0
    %1623 = vmatpush2.xpose.msra.mxu0 0.0
    %1624 = vmatprep.subr.mxu0 0.0
    %1625 = vmatpush2.xpose.msra.mxu0 0.0
    %1626 = vmatprep.subr.mxu0 0.0
    %1627 = vmatpush2.xpose.msra.mxu0 0.0
    %1628 = vmatprep.subr.mxu0 0.0
    %1629 = vmatpush2.xpose.msra.mxu0 0.0
    %1630 = vmatprep.subr.mxu0 0.0
    %1631 = vmatpush2.xpose.msra.mxu0 0.0
    %1632 = vmatprep.subr.mxu0 0.0
    %1633 = vmatpush2.xpose.msra.mxu0 0.0
    %1634 = vmatprep.subr.mxu0 0.0
    %1635 = vmatpush2.xpose.msra.mxu0 0.0
    %1636 = vmatprep.subr.mxu0 0.0
    %1637 = vmatpush2.xpose.msra.mxu0 0.0
    %1638 = vmatprep.subr.mxu0 0.0
    %1639 = vmatpush2.xpose.msra.mxu0 0.0
    %1640 = vmatprep.subr.mxu0 0.0
    %1641 = vmatpush2.xpose.msra.mxu0 0.0
    %1642 = vmatprep.subr.mxu0 0.0
    %1643 = vmatpush2.xpose.msra.mxu0 0.0
    %1644 = vmatprep.subr.mxu0 0.0
    %1645 = vmatpush2.xpose.msra.mxu0 0.0
    %1646 = vmatprep.subr.mxu0 0.0
    %1647 = vmatpush2.xpose.msra.mxu0 0.0
    %1648 = vmatprep.subr.mxu0 0.0
    %1649 = vmatpush2.xpose.msra.mxu0 0.0
    %1650 = vmatprep.subr.mxu0 0.0
    %1651 = vmatpush2.xpose.msra.mxu0 0.0
    %1652 = vmatprep.subr.mxu0 0.0
    %1653 = vmatpush2.xpose.msra.mxu0 0.0
    %1654 = vmatprep.mubr.f32.mxu0 0.0
    %1655 = vmatmul.mubr.f32.gmra.mxu0 %v1588
    %v1656 = vpop.f32.mrf.mxu0
    %v1657 = vadd.f32 0.0, %v1656
    %v1658 = vpop.f32.mrf.mxu0
    %1659 = vdwg.mxu0
    %s1660 = scalar_lea.vmem [#allocation12], 216
    %1661 = vst.msk [vmem:[%s1660] sm:$0xff] %vm191, %v1657
    %v1662 = vsel %vm191, %v1437, -inf
    %1663 = vmax.xlane.f32.xlu0 %v1662
    %v1664 = vpop.xlane.xlu0 %1663
    %v1665 = vsub.f32 %v1437, %v1664
    %v1666 = vmul.f32 %v1665, 1.442695
    %v1667 = vpow.pop %v1666
    %v1668 = vsel %vm191, %v1667, 0.0
    %1669 = vadd.xlane.f32.xlu0 %v1668
    %v1670 = vpop.xlane.xlu0 %1669
    %v1671 = vrcp.pop %v1670
    %v1672 = vmul.f32 %v1667, %v1671
    %1673 = vrot.lane.b32.xlu0 %v173, 40
    %v1674 = vpop.permute.xlu0 %1673
    %v1677 = vsel %vm191, %v1672, 0
    %1679 = vmatprep.subr.mxu0 0.0
    %1680 = vmatpush1.msra.mxu0 0.0
    %1681 = vmatprep.subr.mxu0 0.0
    %1682 = vmatpush1.msra.mxu0 0.0
    %1683 = vmatprep.subr.mxu0 0.0
    %1684 = vmatpush1.msra.mxu0 0.0
    %1685 = vmatprep.subr.mxu0 0.0
    %1686 = vmatpush1.msra.mxu0 0.0
    %1687 = vmatprep.subr.mxu0 0.0
    %1688 = vmatpush1.msra.mxu0 0.0
    %1689 = vmatprep.subr.mxu0 0.0
    %1690 = vmatpush1.msra.mxu0 0.0
    %1691 = vmatprep.subr.mxu0 0.0
    %1692 = vmatpush1.msra.mxu0 0.0
    %1693 = vmatprep.subr.mxu0 0.0
    %1694 = vmatpush1.msra.mxu0 0.0
    %1695 = vmatprep.subr.mxu0 0.0
    %1696 = vmatpush1.msra.mxu0 0.0
    %1697 = vmatprep.subr.mxu0 0.0
    %1698 = vmatpush1.msra.mxu0 0.0
    %1699 = vmatprep.subr.mxu0 0.0
    %1700 = vmatpush1.msra.mxu0 0.0
    %1701 = vmatprep.subr.mxu0 0.0
    %1702 = vmatpush1.msra.mxu0 0.0
    %1703 = vmatprep.subr.mxu0 0.0
    %1704 = vmatpush1.msra.mxu0 0.0
    %1705 = vmatprep.subr.mxu0 0.0
    %1706 = vmatpush1.msra.mxu0 0.0
    %1707 = vmatprep.subr.mxu0 0.0
    %1708 = vmatpush1.msra.mxu0 0.0
    %1709 = vmatprep.subr.mxu0 0.0
    %1710 = vmatpush1.msra.mxu0 %v1674
    %1711 = vmatprep.subr.mxu0 0.0
    %1712 = vmatpush2.msra.mxu0 0.0
    %1713 = vmatprep.subr.mxu0 0.0
    %1714 = vmatpush2.msra.mxu0 0.0
    %1715 = vmatprep.subr.mxu0 0.0
    %1716 = vmatpush2.msra.mxu0 0.0
    %1717 = vmatprep.subr.mxu0 0.0
    %1718 = vmatpush2.msra.mxu0 0.0
    %1719 = vmatprep.subr.mxu0 0.0
    %1720 = vmatpush2.msra.mxu0 0.0
    %1721 = vmatprep.subr.mxu0 0.0
    %1722 = vmatpush2.msra.mxu0 0.0
    %1723 = vmatprep.subr.mxu0 0.0
    %1724 = vmatpush2.msra.mxu0 0.0
    %1725 = vmatprep.subr.mxu0 0.0
    %1726 = vmatpush2.msra.mxu0 0.0
    %1727 = vmatprep.subr.mxu0 0.0
    %1728 = vmatpush2.msra.mxu0 0.0
    %1729 = vmatprep.subr.mxu0 0.0
    %1730 = vmatpush2.msra.mxu0 0.0
    %1731 = vmatprep.subr.mxu0 0.0
    %1732 = vmatpush2.msra.mxu0 0.0
    %1733 = vmatprep.subr.mxu0 0.0
    %1734 = vmatpush2.msra.mxu0 0.0
    %1735 = vmatprep.subr.mxu0 0.0
    %1736 = vmatpush2.msra.mxu0 0.0
    %1737 = vmatprep.subr.mxu0 0.0
    %1738 = vmatpush2.msra.mxu0 0.0
    %1739 = vmatprep.subr.mxu0 0.0
    %1740 = vmatpush2.msra.mxu0 0.0
    %1741 = vmatprep.subr.mxu0 0.0
    %1742 = vmatpush2.msra.mxu0 0.0
    %1743 = vmatprep.mubr.f32.mxu0 0.0
    %1744 = vmatmul.mubr.f32.gmra.mxu0 %v1677
    %v1745 = vpop.f32.mrf.mxu0
    %v1746 = vadd.f32 0.0, %v1745
    %v1747 = vpop.f32.mrf.mxu0
    %1748 = vdwg.mxu0
    %1750 = vrot.lane.b32.xlu0 %v1746, 24
    %v1751 = vpop.permute.xlu0 %1750
    %vm1753 = vcmask 261312
    %1754 = vst.msk [vmem:[#allocation2] sm:$0xff] %vm1753, %v1751
    %v1755 = vlaneseq
    %v1756 = vshrl.u32 %v1755, 7
    %v1757 = vsub.s32 1, %v1756
    %v1758 = vrot.slane %v183, %v1757
    %1760 = vrot.lane.b32.xlu0 %v182, 96
    %v1761 = vpop.permute.xlu0 %1760
    %v1762 = vsel %vm191, %v182, 0
    %v1764 = vsel %vm191, %v1761, 0
    %1766 = vmatprep.subr.mxu0 0.0
    %1767 = vmatpush1.xpose.msra.mxu0 0.0
    %1768 = vmatprep.subr.mxu0 0.0
    %1769 = vmatpush1.xpose.msra.mxu0 0.0
    %1770 = vmatprep.subr.mxu0 0.0
    %1771 = vmatpush1.xpose.msra.mxu0 0.0
    %1772 = vmatprep.subr.mxu0 0.0
    %1773 = vmatpush1.xpose.msra.mxu0 0.0
    %1774 = vmatprep.subr.mxu0 0.0
    %1775 = vmatpush1.xpose.msra.mxu0 0.0
    %1776 = vmatprep.subr.mxu0 0.0
    %1777 = vmatpush1.xpose.msra.mxu0 0.0
    %1778 = vmatprep.subr.mxu0 0.0
    %1779 = vmatpush1.xpose.msra.mxu0 0.0
    %1780 = vmatprep.subr.mxu0 0.0
    %1781 = vmatpush1.xpose.msra.mxu0 0.0
    %1782 = vmatprep.subr.mxu0 0.0
    %1783 = vmatpush1.xpose.msra.mxu0 0.0
    %1784 = vmatprep.subr.mxu0 0.0
    %1785 = vmatpush1.xpose.msra.mxu0 0.0
    %1786 = vmatprep.subr.mxu0 0.0
    %1787 = vmatpush1.xpose.msra.mxu0 0.0
    %1788 = vmatprep.subr.mxu0 0.0
    %1789 = vmatpush1.xpose.msra.mxu0 0.0
    %1790 = vmatprep.subr.mxu0 0.0
    %1791 = vmatpush1.xpose.msra.mxu0 0.0
    %1792 = vmatprep.subr.mxu0 0.0
    %1793 = vmatpush1.xpose.msra.mxu0 0.0
    %1794 = vmatprep.subr.mxu0 0.0
    %1795 = vmatpush1.xpose.msra.mxu0 0.0
    %1796 = vmatprep.subr.mxu0 0.0
    %1797 = vmatpush1.xpose.msra.mxu0 %v1764
    %1798 = vmatprep.subr.mxu0 0.0
    %1799 = vmatpush2.xpose.msra.mxu0 0.0
    %1800 = vmatprep.subr.mxu0 0.0
    %1801 = vmatpush2.xpose.msra.mxu0 0.0
    %1802 = vmatprep.subr.mxu0 0.0
    %1803 = vmatpush2.xpose.msra.mxu0 0.0
    %1804 = vmatprep.subr.mxu0 0.0
    %1805 = vmatpush2.xpose.msra.mxu0 0.0
    %1806 = vmatprep.subr.mxu0 0.0
    %1807 = vmatpush2.xpose.msra.mxu0 0.0
    %1808 = vmatprep.subr.mxu0 0.0
    %1809 = vmatpush2.xpose.msra.mxu0 0.0
    %1810 = vmatprep.subr.mxu0 0.0
    %1811 = vmatpush2.xpose.msra.mxu0 0.0
    %1812 = vmatprep.subr.mxu0 0.0
    %1813 = vmatpush2.xpose.msra.mxu0 0.0
    %1814 = vmatprep.subr.mxu0 0.0
    %1815 = vmatpush2.xpose.msra.mxu0 0.0
    %1816 = vmatprep.subr.mxu0 0.0
    %1817 = vmatpush2.xpose.msra.mxu0 0.0
    %1818 = vmatprep.subr.mxu0 0.0
    %1819 = vmatpush2.xpose.msra.mxu0 0.0
    %1820 = vmatprep.subr.mxu0 0.0
    %1821 = vmatpush2.xpose.msra.mxu0 0.0
    %1822 = vmatprep.subr.mxu0 0.0
    %1823 = vmatpush2.xpose.msra.mxu0 0.0
    %1824 = vmatprep.subr.mxu0 0.0
    %1825 = vmatpush2.xpose.msra.mxu0 0.0
    %1826 = vmatprep.subr.mxu0 0.0
    %1827 = vmatpush2.xpose.msra.mxu0 0.0
    %1828 = vmatprep.subr.mxu0 0.0
    %1829 = vmatpush2.xpose.msra.mxu0 0.0
    %1830 = vmatprep.mubr.f32.mxu0 0.0
    %1831 = vmatmul.mubr.f32.gmra.mxu0 %v1762
    %v1832 = vpop.f32.mrf.mxu0
    %v1833 = vadd.f32 %v1758, %v1832
    %v1834 = vpop.f32.mrf.mxu0
    %1835 = vdwg.mxu0
    %s1836 = scalar_lea.vmem [#allocation12], 32
    %1837 = vst.msk [vmem:[%s1836] sm:$0xff] %vm191, %v1833
    %1838 = vmatprep.subr.mxu0 0.0
    %1839 = vmatpush1.xpose.msra.mxu0 0.0
    %1840 = vmatprep.subr.mxu0 0.0
    %1841 = vmatpush1.xpose.msra.mxu0 0.0
    %1842 = vmatprep.subr.mxu0 0.0
    %1843 = vmatpush1.xpose.msra.mxu0 0.0
    %1844 = vmatprep.subr.mxu0 0.0
    %1845 = vmatpush1.xpose.msra.mxu0 0.0
    %1846 = vmatprep.subr.mxu0 0.0
    %1847 = vmatpush1.xpose.msra.mxu0 0.0
    %1848 = vmatprep.subr.mxu0 0.0
    %1849 = vmatpush1.xpose.msra.mxu0 0.0
    %1850 = vmatprep.subr.mxu0 0.0
    %1851 = vmatpush1.xpose.msra.mxu0 0.0
    %1852 = vmatprep.subr.mxu0 0.0
    %1853 = vmatpush1.xpose.msra.mxu0 0.0
    %1854 = vmatprep.subr.mxu0 0.0
    %1855 = vmatpush1.xpose.msra.mxu0 0.0
    %1856 = vmatprep.subr.mxu0 0.0
    %1857 = vmatpush1.xpose.msra.mxu0 0.0
    %1858 = vmatprep.subr.mxu0 0.0
    %1859 = vmatpush1.xpose.msra.mxu0 0.0
    %1860 = vmatprep.subr.mxu0 0.0
    %1861 = vmatpush1.xpose.msra.mxu0 0.0
    %1862 = vmatprep.subr.mxu0 0.0
    %1863 = vmatpush1.xpose.msra.mxu0 0.0
    %1864 = vmatprep.subr.mxu0 0.0
    %1865 = vmatpush1.xpose.msra.mxu0 0.0
    %1866 = vmatprep.subr.mxu0 0.0
    %1867 = vmatpush1.xpose.msra.mxu0 0.0
    %1868 = vmatprep.subr.mxu0 0.0
    %1869 = vmatpush1.xpose.msra.mxu0 %v1762
    %1870 = vmatprep.subr.mxu0 0.0
    %1871 = vmatpush2.xpose.msra.mxu0 0.0
    %1872 = vmatprep.subr.mxu0 0.0
    %1873 = vmatpush2.xpose.msra.mxu0 0.0
    %1874 = vmatprep.subr.mxu0 0.0
    %1875 = vmatpush2.xpose.msra.mxu0 0.0
    %1876 = vmatprep.subr.mxu0 0.0
    %1877 = vmatpush2.xpose.msra.mxu0 0.0
    %1878 = vmatprep.subr.mxu0 0.0
    %1879 = vmatpush2.xpose.msra.mxu0 0.0
    %1880 = vmatprep.subr.mxu0 0.0
    %1881 = vmatpush2.xpose.msra.mxu0 0.0
    %1882 = vmatprep.subr.mxu0 0.0
    %1883 = vmatpush2.xpose.msra.mxu0 0.0
    %1884 = vmatprep.subr.mxu0 0.0
    %1885 = vmatpush2.xpose.msra.mxu0 0.0
    %1886 = vmatprep.subr.mxu0 0.0
    %1887 = vmatpush2.xpose.msra.mxu0 0.0
    %1888 = vmatprep.subr.mxu0 0.0
    %1889 = vmatpush2.xpose.msra.mxu0 0.0
    %1890 = vmatprep.subr.mxu0 0.0
    %1891 = vmatpush2.xpose.msra.mxu0 0.0
    %1892 = vmatprep.subr.mxu0 0.0
    %1893 = vmatpush2.xpose.msra.mxu0 0.0
    %1894 = vmatprep.subr.mxu0 0.0
    %1895 = vmatpush2.xpose.msra.mxu0 0.0
    %1896 = vmatprep.subr.mxu0 0.0
    %1897 = vmatpush2.xpose.msra.mxu0 0.0
    %1898 = vmatprep.subr.mxu0 0.0
    %1899 = vmatpush2.xpose.msra.mxu0 0.0
    %1900 = vmatprep.subr.mxu0 0.0
    %1901 = vmatpush2.xpose.msra.mxu0 0.0
    %1902 = vmatprep.mubr.f32.mxu0 0.0
    %1903 = vmatmul.mubr.f32.gmra.mxu0 %v1762
    %v1904 = vpop.f32.mrf.mxu0
    %v1905 = vadd.f32 0.0, %v1904
    %v1906 = vpop.f32.mrf.mxu0
    %1907 = vdwg.mxu0
    %s1908 = scalar_lea.vmem [#allocation12], 96
    %1909 = vst.msk [vmem:[%s1908] sm:$0xff] %vm191, %v1905
    %1910 = vmatprep.subr.mxu0 0.0
    %1911 = vmatpush1.xpose.msra.mxu0 0.0
    %1912 = vmatprep.subr.mxu0 0.0
    %1913 = vmatpush1.xpose.msra.mxu0 0.0
    %1914 = vmatprep.subr.mxu0 0.0
    %1915 = vmatpush1.xpose.msra.mxu0 0.0
    %1916 = vmatprep.subr.mxu0 0.0
    %1917 = vmatpush1.xpose.msra.mxu0 0.0
    %1918 = vmatprep.subr.mxu0 0.0
    %1919 = vmatpush1.xpose.msra.mxu0 0.0
    %1920 = vmatprep.subr.mxu0 0.0
    %1921 = vmatpush1.xpose.msra.mxu0 0.0
    %1922 = vmatprep.subr.mxu0 0.0
    %1923 = vmatpush1.xpose.msra.mxu0 0.0
    %1924 = vmatprep.subr.mxu0 0.0
    %1925 = vmatpush1.xpose.msra.mxu0 0.0
    %1926 = vmatprep.subr.mxu0 0.0
    %1927 = vmatpush1.xpose.msra.mxu0 0.0
    %1928 = vmatprep.subr.mxu0 0.0
    %1929 = vmatpush1.xpose.msra.mxu0 0.0
    %1930 = vmatprep.subr.mxu0 0.0
    %1931 = vmatpush1.xpose.msra.mxu0 0.0
    %1932 = vmatprep.subr.mxu0 0.0
    %1933 = vmatpush1.xpose.msra.mxu0 0.0
    %1934 = vmatprep.subr.mxu0 0.0
    %1935 = vmatpush1.xpose.msra.mxu0 0.0
    %1936 = vmatprep.subr.mxu0 0.0
    %1937 = vmatpush1.xpose.msra.mxu0 0.0
    %1938 = vmatprep.subr.mxu0 0.0
    %1939 = vmatpush1.xpose.msra.mxu0 0.0
    %1940 = vmatprep.subr.mxu0 0.0
    %1941 = vmatpush1.xpose.msra.mxu0 %v1764
    %1942 = vmatprep.subr.mxu0 0.0
    %1943 = vmatpush2.xpose.msra.mxu0 0.0
    %1944 = vmatprep.subr.mxu0 0.0
    %1945 = vmatpush2.xpose.msra.mxu0 0.0
    %1946 = vmatprep.subr.mxu0 0.0
    %1947 = vmatpush2.xpose.msra.mxu0 0.0
    %1948 = vmatprep.subr.mxu0 0.0
    %1949 = vmatpush2.xpose.msra.mxu0 0.0
    %1950 = vmatprep.subr.mxu0 0.0
    %1951 = vmatpush2.xpose.msra.mxu0 0.0
    %1952 = vmatprep.subr.mxu0 0.0
    %1953 = vmatpush2.xpose.msra.mxu0 0.0
    %1954 = vmatprep.subr.mxu0 0.0
    %1955 = vmatpush2.xpose.msra.mxu0 0.0
    %1956 = vmatprep.subr.mxu0 0.0
    %1957 = vmatpush2.xpose.msra.mxu0 0.0
    %1958 = vmatprep.subr.mxu0 0.0
    %1959 = vmatpush2.xpose.msra.mxu0 0.0
    %1960 = vmatprep.subr.mxu0 0.0
    %1961 = vmatpush2.xpose.msra.mxu0 0.0
    %1962 = vmatprep.subr.mxu0 0.0
    %1963 = vmatpush2.xpose.msra.mxu0 0.0
    %1964 = vmatprep.subr.mxu0 0.0
    %1965 = vmatpush2.xpose.msra.mxu0 0.0
    %1966 = vmatprep.subr.mxu0 0.0
    %1967 = vmatpush2.xpose.msra.mxu0 0.0
    %1968 = vmatprep.subr.mxu0 0.0
    %1969 = vmatpush2.xpose.msra.mxu0 0.0
    %1970 = vmatprep.subr.mxu0 0.0
    %1971 = vmatpush2.xpose.msra.mxu0 0.0
    %1972 = vmatprep.subr.mxu0 0.0
    %1973 = vmatpush2.xpose.msra.mxu0 0.0
    %1974 = vmatprep.mubr.f32.mxu0 0.0
    %1975 = vmatmul.mubr.f32.gmra.mxu0 %v1764
    %v1976 = vpop.f32.mrf.mxu0
    %v1977 = vadd.f32 0.0, %v1976
    %v1978 = vpop.f32.mrf.mxu0
    %1979 = vdwg.mxu0
    %s1980 = scalar_lea.vmem [#allocation12], 160
    %1981 = vst.msk [vmem:[%s1980] sm:$0xff] %vm191, %v1977
    %1982 = vrot.lane.b32.xlu0 %v182, 64
    %v1983 = vpop.permute.xlu0 %1982
    %v1984 = vsel %vm191, %v1983, 0
    %1986 = vmatprep.subr.mxu0 0.0
    %1987 = vmatpush1.xpose.msra.mxu0 0.0
    %1988 = vmatprep.subr.mxu0 0.0
    %1989 = vmatpush1.xpose.msra.mxu0 0.0
    %1990 = vmatprep.subr.mxu0 0.0
    %1991 = vmatpush1.xpose.msra.mxu0 0.0
    %1992 = vmatprep.subr.mxu0 0.0
    %1993 = vmatpush1.xpose.msra.mxu0 0.0
    %1994 = vmatprep.subr.mxu0 0.0
    %1995 = vmatpush1.xpose.msra.mxu0 0.0
    %1996 = vmatprep.subr.mxu0 0.0
    %1997 = vmatpush1.xpose.msra.mxu0 0.0
    %1998 = vmatprep.subr.mxu0 0.0
    %1999 = vmatpush1.xpose.msra.mxu0 0.0
    %2000 = vmatprep.subr.mxu0 0.0
    %2001 = vmatpush1.xpose.msra.mxu0 0.0
    %2002 = vmatprep.subr.mxu0 0.0
    %2003 = vmatpush1.xpose.msra.mxu0 0.0
    %2004 = vmatprep.subr.mxu0 0.0
    %2005 = vmatpush1.xpose.msra.mxu0 0.0
    %2006 = vmatprep.subr.mxu0 0.0
    %2007 = vmatpush1.xpose.msra.mxu0 0.0
    %2008 = vmatprep.subr.mxu0 0.0
    %2009 = vmatpush1.xpose.msra.mxu0 0.0
    %2010 = vmatprep.subr.mxu0 0.0
    %2011 = vmatpush1.xpose.msra.mxu0 0.0
    %2012 = vmatprep.subr.mxu0 0.0
    %2013 = vmatpush1.xpose.msra.mxu0 0.0
    %2014 = vmatprep.subr.mxu0 0.0
    %2015 = vmatpush1.xpose.msra.mxu0 0.0
    %2016 = vmatprep.subr.mxu0 0.0
    %2017 = vmatpush1.xpose.msra.mxu0 %v1984
    %2018 = vmatprep.subr.mxu0 0.0
    %2019 = vmatpush2.xpose.msra.mxu0 0.0
    %2020 = vmatprep.subr.mxu0 0.0
    %2021 = vmatpush2.xpose.msra.mxu0 0.0
    %2022 = vmatprep.subr.mxu0 0.0
    %2023 = vmatpush2.xpose.msra.mxu0 0.0
    %2024 = vmatprep.subr.mxu0 0.0
    %2025 = vmatpush2.xpose.msra.mxu0 0.0
    %2026 = vmatprep.subr.mxu0 0.0
    %2027 = vmatpush2.xpose.msra.mxu0 0.0
    %2028 = vmatprep.subr.mxu0 0.0
    %2029 = vmatpush2.xpose.msra.mxu0 0.0
    %2030 = vmatprep.subr.mxu0 0.0
    %2031 = vmatpush2.xpose.msra.mxu0 0.0
    %2032 = vmatprep.subr.mxu0 0.0
    %2033 = vmatpush2.xpose.msra.mxu0 0.0
    %2034 = vmatprep.subr.mxu0 0.0
    %2035 = vmatpush2.xpose.msra.mxu0 0.0
    %2036 = vmatprep.subr.mxu0 0.0
    %2037 = vmatpush2.xpose.msra.mxu0 0.0
    %2038 = vmatprep.subr.mxu0 0.0
    %2039 = vmatpush2.xpose.msra.mxu0 0.0
    %2040 = vmatprep.subr.mxu0 0.0
    %2041 = vmatpush2.xpose.msra.mxu0 0.0
    %2042 = vmatprep.subr.mxu0 0.0
    %2043 = vmatpush2.xpose.msra.mxu0 0.0
    %2044 = vmatprep.subr.mxu0 0.0
    %2045 = vmatpush2.xpose.msra.mxu0 0.0
    %2046 = vmatprep.subr.mxu0 0.0
    %2047 = vmatpush2.xpose.msra.mxu0 0.0
    %2048 = vmatprep.subr.mxu0 0.0
    %2049 = vmatpush2.xpose.msra.mxu0 0.0
    %2050 = vmatprep.mubr.f32.mxu0 0.0
    %2051 = vmatmul.mubr.f32.gmra.mxu0 %v1984
    %v2052 = vpop.f32.mrf.mxu0
    %v2053 = vadd.f32 0.0, %v2052
    %v2054 = vpop.f32.mrf.mxu0
    %2055 = vdwg.mxu0
    %s2056 = scalar_lea.vmem [#allocation12], 224
    %2057 = vst.msk [vmem:[%s2056] sm:$0xff] %vm191, %v2053
    %v2058 = vsel %vm191, %v1833, -inf
    %2059 = vmax.xlane.f32.xlu0 %v2058
    %v2060 = vpop.xlane.xlu0 %2059
    %v2061 = vsub.f32 %v1833, %v2060
    %v2062 = vmul.f32 %v2061, 1.442695
    %v2063 = vpow.pop %v2062
    %v2064 = vsel %vm191, %v2063, 0.0
    %2065 = vadd.xlane.f32.xlu0 %v2064
    %v2066 = vpop.xlane.xlu0 %2065
    %v2067 = vrcp.pop %v2066
    %v2068 = vmul.f32 %v2063, %v2067
    %2070 = vrot.lane.b32.xlu0 %v178, 64
    %v2071 = vpop.permute.xlu0 %2070
    %v2074 = vsel %vm191, %v2068, 0
    %2076 = vmatprep.subr.mxu0 0.0
    %2077 = vmatpush1.msra.mxu0 0.0
    %2078 = vmatprep.subr.mxu0 0.0
    %2079 = vmatpush1.msra.mxu0 0.0
    %2080 = vmatprep.subr.mxu0 0.0
    %2081 = vmatpush1.msra.mxu0 0.0
    %2082 = vmatprep.subr.mxu0 0.0
    %2083 = vmatpush1.msra.mxu0 0.0
    %2084 = vmatprep.subr.mxu0 0.0
    %2085 = vmatpush1.msra.mxu0 0.0
    %2086 = vmatprep.subr.mxu0 0.0
    %2087 = vmatpush1.msra.mxu0 0.0
    %2088 = vmatprep.subr.mxu0 0.0
    %2089 = vmatpush1.msra.mxu0 0.0
    %2090 = vmatprep.subr.mxu0 0.0
    %2091 = vmatpush1.msra.mxu0 0.0
    %2092 = vmatprep.subr.mxu0 0.0
    %2093 = vmatpush1.msra.mxu0 0.0
    %2094 = vmatprep.subr.mxu0 0.0
    %2095 = vmatpush1.msra.mxu0 0.0
    %2096 = vmatprep.subr.mxu0 0.0
    %2097 = vmatpush1.msra.mxu0 0.0
    %2098 = vmatprep.subr.mxu0 0.0
    %2099 = vmatpush1.msra.mxu0 0.0
    %2100 = vmatprep.subr.mxu0 0.0
    %2101 = vmatpush1.msra.mxu0 0.0
    %2102 = vmatprep.subr.mxu0 0.0
    %2103 = vmatpush1.msra.mxu0 0.0
    %2104 = vmatprep.subr.mxu0 0.0
    %2105 = vmatpush1.msra.mxu0 0.0
    %2106 = vmatprep.subr.mxu0 0.0
    %2107 = vmatpush1.msra.mxu0 %v2071
    %2108 = vmatprep.subr.mxu0 0.0
    %2109 = vmatpush2.msra.mxu0 0.0
    %2110 = vmatprep.subr.mxu0 0.0
    %2111 = vmatpush2.msra.mxu0 0.0
    %2112 = vmatprep.subr.mxu0 0.0
    %2113 = vmatpush2.msra.mxu0 0.0
    %2114 = vmatprep.subr.mxu0 0.0
    %2115 = vmatpush2.msra.mxu0 0.0
    %2116 = vmatprep.subr.mxu0 0.0
    %2117 = vmatpush2.msra.mxu0 0.0
    %2118 = vmatprep.subr.mxu0 0.0
    %2119 = vmatpush2.msra.mxu0 0.0
    %2120 = vmatprep.subr.mxu0 0.0
    %2121 = vmatpush2.msra.mxu0 0.0
    %2122 = vmatprep.subr.mxu0 0.0
    %2123 = vmatpush2.msra.mxu0 0.0
    %2124 = vmatprep.subr.mxu0 0.0
    %2125 = vmatpush2.msra.mxu0 0.0
    %2126 = vmatprep.subr.mxu0 0.0
    %2127 = vmatpush2.msra.mxu0 0.0
    %2128 = vmatprep.subr.mxu0 0.0
    %2129 = vmatpush2.msra.mxu0 0.0
    %2130 = vmatprep.subr.mxu0 0.0
    %2131 = vmatpush2.msra.mxu0 0.0
    %2132 = vmatprep.subr.mxu0 0.0
    %2133 = vmatpush2.msra.mxu0 0.0
    %2134 = vmatprep.subr.mxu0 0.0
    %2135 = vmatpush2.msra.mxu0 0.0
    %2136 = vmatprep.subr.mxu0 0.0
    %2137 = vmatpush2.msra.mxu0 0.0
    %2138 = vmatprep.subr.mxu0 0.0
    %2139 = vmatpush2.msra.mxu0 0.0
    %2140 = vmatprep.mubr.f32.mxu0 0.0
    %2141 = vmatmul.mubr.f32.gmra.mxu0 %v2074
    %v2142 = vpop.f32.mrf.mxu0
    %v2143 = vadd.f32 0.0, %v2142
    %v2144 = vpop.f32.mrf.mxu0
    %2145 = vdwg.mxu0
    %2146 = vst.msk [vmem:[#allocation2 + $0x8] sm:$0xff] %vm191, %v2143
    %2147 = vrot.lane.b32.xlu0 %v182, 120
    %v2148 = vpop.permute.xlu0 %2147
    %2149 = vrot.lane.b32.xlu0 %v182, 88
    %v2150 = vpop.permute.xlu0 %2149
    %v2151 = vsel %vm191, %v2148, 0
    %v2153 = vsel %vm191, %v2150, 0
    %2155 = vmatprep.subr.mxu0 0.0
    %2156 = vmatpush1.xpose.msra.mxu0 0.0
    %2157 = vmatprep.subr.mxu0 0.0
    %2158 = vmatpush1.xpose.msra.mxu0 0.0
    %2159 = vmatprep.subr.mxu0 0.0
    %2160 = vmatpush1.xpose.msra.mxu0 0.0
    %2161 = vmatprep.subr.mxu0 0.0
    %2162 = vmatpush1.xpose.msra.mxu0 0.0
    %2163 = vmatprep.subr.mxu0 0.0
    %2164 = vmatpush1.xpose.msra.mxu0 0.0
    %2165 = vmatprep.subr.mxu0 0.0
    %2166 = vmatpush1.xpose.msra.mxu0 0.0
    %2167 = vmatprep.subr.mxu0 0.0
    %2168 = vmatpush1.xpose.msra.mxu0 0.0
    %2169 = vmatprep.subr.mxu0 0.0
    %2170 = vmatpush1.xpose.msra.mxu0 0.0
    %2171 = vmatprep.subr.mxu0 0.0
    %2172 = vmatpush1.xpose.msra.mxu0 0.0
    %2173 = vmatprep.subr.mxu0 0.0
    %2174 = vmatpush1.xpose.msra.mxu0 0.0
    %2175 = vmatprep.subr.mxu0 0.0
    %2176 = vmatpush1.xpose.msra.mxu0 0.0
    %2177 = vmatprep.subr.mxu0 0.0
    %2178 = vmatpush1.xpose.msra.mxu0 0.0
    %2179 = vmatprep.subr.mxu0 0.0
    %2180 = vmatpush1.xpose.msra.mxu0 0.0
    %2181 = vmatprep.subr.mxu0 0.0
    %2182 = vmatpush1.xpose.msra.mxu0 0.0
    %2183 = vmatprep.subr.mxu0 0.0
    %2184 = vmatpush1.xpose.msra.mxu0 0.0
    %2185 = vmatprep.subr.mxu0 0.0
    %2186 = vmatpush1.xpose.msra.mxu0 %v2153
    %2187 = vmatprep.subr.mxu0 0.0
    %2188 = vmatpush2.xpose.msra.mxu0 0.0
    %2189 = vmatprep.subr.mxu0 0.0
    %2190 = vmatpush2.xpose.msra.mxu0 0.0
    %2191 = vmatprep.subr.mxu0 0.0
    %2192 = vmatpush2.xpose.msra.mxu0 0.0
    %2193 = vmatprep.subr.mxu0 0.0
    %2194 = vmatpush2.xpose.msra.mxu0 0.0
    %2195 = vmatprep.subr.mxu0 0.0
    %2196 = vmatpush2.xpose.msra.mxu0 0.0
    %2197 = vmatprep.subr.mxu0 0.0
    %2198 = vmatpush2.xpose.msra.mxu0 0.0
    %2199 = vmatprep.subr.mxu0 0.0
    %2200 = vmatpush2.xpose.msra.mxu0 0.0
    %2201 = vmatprep.subr.mxu0 0.0
    %2202 = vmatpush2.xpose.msra.mxu0 0.0
    %2203 = vmatprep.subr.mxu0 0.0
    %2204 = vmatpush2.xpose.msra.mxu0 0.0
    %2205 = vmatprep.subr.mxu0 0.0
    %2206 = vmatpush2.xpose.msra.mxu0 0.0
    %2207 = vmatprep.subr.mxu0 0.0
    %2208 = vmatpush2.xpose.msra.mxu0 0.0
    %2209 = vmatprep.subr.mxu0 0.0
    %2210 = vmatpush2.xpose.msra.mxu0 0.0
    %2211 = vmatprep.subr.mxu0 0.0
    %2212 = vmatpush2.xpose.msra.mxu0 0.0
    %2213 = vmatprep.subr.mxu0 0.0
    %2214 = vmatpush2.xpose.msra.mxu0 0.0
    %2215 = vmatprep.subr.mxu0 0.0
    %2216 = vmatpush2.xpose.msra.mxu0 0.0
    %2217 = vmatprep.subr.mxu0 0.0
    %2218 = vmatpush2.xpose.msra.mxu0 0.0
    %2219 = vmatprep.mubr.f32.mxu0 0.0
    %2220 = vmatmul.mubr.f32.gmra.mxu0 %v2151
    %v2221 = vpop.f32.mrf.mxu0
    %v2222 = vadd.f32 %v1758, %v2221
    %v2223 = vpop.f32.mrf.mxu0
    %2224 = vdwg.mxu0
    %s2225 = scalar_lea.vmem [#allocation12], 40
    %2226 = vst.msk [vmem:[%s2225] sm:$0xff] %vm191, %v2222
    %2227 = vmatprep.subr.mxu0 0.0
    %2228 = vmatpush1.xpose.msra.mxu0 0.0
    %2229 = vmatprep.subr.mxu0 0.0
    %2230 = vmatpush1.xpose.msra.mxu0 0.0
    %2231 = vmatprep.subr.mxu0 0.0
    %2232 = vmatpush1.xpose.msra.mxu0 0.0
    %2233 = vmatprep.subr.mxu0 0.0
    %2234 = vmatpush1.xpose.msra.mxu0 0.0
    %2235 = vmatprep.subr.mxu0 0.0
    %2236 = vmatpush1.xpose.msra.mxu0 0.0
    %2237 = vmatprep.subr.mxu0 0.0
    %2238 = vmatpush1.xpose.msra.mxu0 0.0
    %2239 = vmatprep.subr.mxu0 0.0
    %2240 = vmatpush1.xpose.msra.mxu0 0.0
    %2241 = vmatprep.subr.mxu0 0.0
    %2242 = vmatpush1.xpose.msra.mxu0 0.0
    %2243 = vmatprep.subr.mxu0 0.0
    %2244 = vmatpush1.xpose.msra.mxu0 0.0
    %2245 = vmatprep.subr.mxu0 0.0
    %2246 = vmatpush1.xpose.msra.mxu0 0.0
    %2247 = vmatprep.subr.mxu0 0.0
    %2248 = vmatpush1.xpose.msra.mxu0 0.0
    %2249 = vmatprep.subr.mxu0 0.0
    %2250 = vmatpush1.xpose.msra.mxu0 0.0
    %2251 = vmatprep.subr.mxu0 0.0
    %2252 = vmatpush1.xpose.msra.mxu0 0.0
    %2253 = vmatprep.subr.mxu0 0.0
    %2254 = vmatpush1.xpose.msra.mxu0 0.0
    %2255 = vmatprep.subr.mxu0 0.0
    %2256 = vmatpush1.xpose.msra.mxu0 0.0
    %2257 = vmatprep.subr.mxu0 0.0
    %2258 = vmatpush1.xpose.msra.mxu0 %v2151
    %2259 = vmatprep.subr.mxu0 0.0
    %2260 = vmatpush2.xpose.msra.mxu0 0.0
    %2261 = vmatprep.subr.mxu0 0.0
    %2262 = vmatpush2.xpose.msra.mxu0 0.0
    %2263 = vmatprep.subr.mxu0 0.0
    %2264 = vmatpush2.xpose.msra.mxu0 0.0
    %2265 = vmatprep.subr.mxu0 0.0
    %2266 = vmatpush2.xpose.msra.mxu0 0.0
    %2267 = vmatprep.subr.mxu0 0.0
    %2268 = vmatpush2.xpose.msra.mxu0 0.0
    %2269 = vmatprep.subr.mxu0 0.0
    %2270 = vmatpush2.xpose.msra.mxu0 0.0
    %2271 = vmatprep.subr.mxu0 0.0
    %2272 = vmatpush2.xpose.msra.mxu0 0.0
    %2273 = vmatprep.subr.mxu0 0.0
    %2274 = vmatpush2.xpose.msra.mxu0 0.0
    %2275 = vmatprep.subr.mxu0 0.0
    %2276 = vmatpush2.xpose.msra.mxu0 0.0
    %2277 = vmatprep.subr.mxu0 0.0
    %2278 = vmatpush2.xpose.msra.mxu0 0.0
    %2279 = vmatprep.subr.mxu0 0.0
    %2280 = vmatpush2.xpose.msra.mxu0 0.0
    %2281 = vmatprep.subr.mxu0 0.0
    %2282 = vmatpush2.xpose.msra.mxu0 0.0
    %2283 = vmatprep.subr.mxu0 0.0
    %2284 = vmatpush2.xpose.msra.mxu0 0.0
    %2285 = vmatprep.subr.mxu0 0.0
    %2286 = vmatpush2.xpose.msra.mxu0 0.0
    %2287 = vmatprep.subr.mxu0 0.0
    %2288 = vmatpush2.xpose.msra.mxu0 0.0
    %2289 = vmatprep.subr.mxu0 0.0
    %2290 = vmatpush2.xpose.msra.mxu0 0.0
    %2291 = vmatprep.mubr.f32.mxu0 0.0
    %2292 = vmatmul.mubr.f32.gmra.mxu0 %v2151
    %v2293 = vpop.f32.mrf.mxu0
    %v2294 = vadd.f32 0.0, %v2293
    %v2295 = vpop.f32.mrf.mxu0
    %2296 = vdwg.mxu0
    %s2297 = scalar_lea.vmem [#allocation12], 104
    %2298 = vst.msk [vmem:[%s2297] sm:$0xff] %vm191, %v2294
    %2299 = vmatprep.subr.mxu0 0.0
    %2300 = vmatpush1.xpose.msra.mxu0 0.0
    %2301 = vmatprep.subr.mxu0 0.0
    %2302 = vmatpush1.xpose.msra.mxu0 0.0
    %2303 = vmatprep.subr.mxu0 0.0
    %2304 = vmatpush1.xpose.msra.mxu0 0.0
    %2305 = vmatprep.subr.mxu0 0.0
    %2306 = vmatpush1.xpose.msra.mxu0 0.0
    %2307 = vmatprep.subr.mxu0 0.0
    %2308 = vmatpush1.xpose.msra.mxu0 0.0
    %2309 = vmatprep.subr.mxu0 0.0
    %2310 = vmatpush1.xpose.msra.mxu0 0.0
    %2311 = vmatprep.subr.mxu0 0.0
    %2312 = vmatpush1.xpose.msra.mxu0 0.0
    %2313 = vmatprep.subr.mxu0 0.0
    %2314 = vmatpush1.xpose.msra.mxu0 0.0
    %2315 = vmatprep.subr.mxu0 0.0
    %2316 = vmatpush1.xpose.msra.mxu0 0.0
    %2317 = vmatprep.subr.mxu0 0.0
    %2318 = vmatpush1.xpose.msra.mxu0 0.0
    %2319 = vmatprep.subr.mxu0 0.0
    %2320 = vmatpush1.xpose.msra.mxu0 0.0
    %2321 = vmatprep.subr.mxu0 0.0
    %2322 = vmatpush1.xpose.msra.mxu0 0.0
    %2323 = vmatprep.subr.mxu0 0.0
    %2324 = vmatpush1.xpose.msra.mxu0 0.0
    %2325 = vmatprep.subr.mxu0 0.0
    %2326 = vmatpush1.xpose.msra.mxu0 0.0
    %2327 = vmatprep.subr.mxu0 0.0
    %2328 = vmatpush1.xpose.msra.mxu0 0.0
    %2329 = vmatprep.subr.mxu0 0.0
    %2330 = vmatpush1.xpose.msra.mxu0 %v2153
    %2331 = vmatprep.subr.mxu0 0.0
    %2332 = vmatpush2.xpose.msra.mxu0 0.0
    %2333 = vmatprep.subr.mxu0 0.0
    %2334 = vmatpush2.xpose.msra.mxu0 0.0
    %2335 = vmatprep.subr.mxu0 0.0
    %2336 = vmatpush2.xpose.msra.mxu0 0.0
    %2337 = vmatprep.subr.mxu0 0.0
    %2338 = vmatpush2.xpose.msra.mxu0 0.0
    %2339 = vmatprep.subr.mxu0 0.0
    %2340 = vmatpush2.xpose.msra.mxu0 0.0
    %2341 = vmatprep.subr.mxu0 0.0
    %2342 = vmatpush2.xpose.msra.mxu0 0.0
    %2343 = vmatprep.subr.mxu0 0.0
    %2344 = vmatpush2.xpose.msra.mxu0 0.0
    %2345 = vmatprep.subr.mxu0 0.0
    %2346 = vmatpush2.xpose.msra.mxu0 0.0
    %2347 = vmatprep.subr.mxu0 0.0
    %2348 = vmatpush2.xpose.msra.mxu0 0.0
    %2349 = vmatprep.subr.mxu0 0.0
    %2350 = vmatpush2.xpose.msra.mxu0 0.0
    %2351 = vmatprep.subr.mxu0 0.0
    %2352 = vmatpush2.xpose.msra.mxu0 0.0
    %2353 = vmatprep.subr.mxu0 0.0
    %2354 = vmatpush2.xpose.msra.mxu0 0.0
    %2355 = vmatprep.subr.mxu0 0.0
    %2356 = vmatpush2.xpose.msra.mxu0 0.0
    %2357 = vmatprep.subr.mxu0 0.0
    %2358 = vmatpush2.xpose.msra.mxu0 0.0
    %2359 = vmatprep.subr.mxu0 0.0
    %2360 = vmatpush2.xpose.msra.mxu0 0.0
    %2361 = vmatprep.subr.mxu0 0.0
    %2362 = vmatpush2.xpose.msra.mxu0 0.0
    %2363 = vmatprep.mubr.f32.mxu0 0.0
    %2364 = vmatmul.mubr.f32.gmra.mxu0 %v2153
    %v2365 = vpop.f32.mrf.mxu0
    %v2366 = vadd.f32 0.0, %v2365
    %v2367 = vpop.f32.mrf.mxu0
    %2368 = vdwg.mxu0
    %s2369 = scalar_lea.vmem [#allocation12], 168
    %2370 = vst.msk [vmem:[%s2369] sm:$0xff] %vm191, %v2366
    %2371 = vrot.lane.b32.xlu0 %v182, 56
    %v2372 = vpop.permute.xlu0 %2371
    %v2373 = vsel %vm191, %v2372, 0
    %2375 = vmatprep.subr.mxu0 0.0
    %2376 = vmatpush1.xpose.msra.mxu0 0.0
    %2377 = vmatprep.subr.mxu0 0.0
    %2378 = vmatpush1.xpose.msra.mxu0 0.0
    %2379 = vmatprep.subr.mxu0 0.0
    %2380 = vmatpush1.xpose.msra.mxu0 0.0
    %2381 = vmatprep.subr.mxu0 0.0
    %2382 = vmatpush1.xpose.msra.mxu0 0.0
    %2383 = vmatprep.subr.mxu0 0.0
    %2384 = vmatpush1.xpose.msra.mxu0 0.0
    %2385 = vmatprep.subr.mxu0 0.0
    %2386 = vmatpush1.xpose.msra.mxu0 0.0
    %2387 = vmatprep.subr.mxu0 0.0
    %2388 = vmatpush1.xpose.msra.mxu0 0.0
    %2389 = vmatprep.subr.mxu0 0.0
    %2390 = vmatpush1.xpose.msra.mxu0 0.0
    %2391 = vmatprep.subr.mxu0 0.0
    %2392 = vmatpush1.xpose.msra.mxu0 0.0
    %2393 = vmatprep.subr.mxu0 0.0
    %2394 = vmatpush1.xpose.msra.mxu0 0.0
    %2395 = vmatprep.subr.mxu0 0.0
    %2396 = vmatpush1.xpose.msra.mxu0 0.0
    %2397 = vmatprep.subr.mxu0 0.0
    %2398 = vmatpush1.xpose.msra.mxu0 0.0
    %2399 = vmatprep.subr.mxu0 0.0
    %2400 = vmatpush1.xpose.msra.mxu0 0.0
    %2401 = vmatprep.subr.mxu0 0.0
    %2402 = vmatpush1.xpose.msra.mxu0 0.0
    %2403 = vmatprep.subr.mxu0 0.0
    %2404 = vmatpush1.xpose.msra.mxu0 0.0
    %2405 = vmatprep.subr.mxu0 0.0
    %2406 = vmatpush1.xpose.msra.mxu0 %v2373
    %2407 = vmatprep.subr.mxu0 0.0
    %2408 = vmatpush2.xpose.msra.mxu0 0.0
    %2409 = vmatprep.subr.mxu0 0.0
    %2410 = vmatpush2.xpose.msra.mxu0 0.0
    %2411 = vmatprep.subr.mxu0 0.0
    %2412 = vmatpush2.xpose.msra.mxu0 0.0
    %2413 = vmatprep.subr.mxu0 0.0
    %2414 = vmatpush2.xpose.msra.mxu0 0.0
    %2415 = vmatprep.subr.mxu0 0.0
    %2416 = vmatpush2.xpose.msra.mxu0 0.0
    %2417 = vmatprep.subr.mxu0 0.0
    %2418 = vmatpush2.xpose.msra.mxu0 0.0
    %2419 = vmatprep.subr.mxu0 0.0
    %2420 = vmatpush2.xpose.msra.mxu0 0.0
    %2421 = vmatprep.subr.mxu0 0.0
    %2422 = vmatpush2.xpose.msra.mxu0 0.0
    %2423 = vmatprep.subr.mxu0 0.0
    %2424 = vmatpush2.xpose.msra.mxu0 0.0
    %2425 = vmatprep.subr.mxu0 0.0
    %2426 = vmatpush2.xpose.msra.mxu0 0.0
    %2427 = vmatprep.subr.mxu0 0.0
    %2428 = vmatpush2.xpose.msra.mxu0 0.0
    %2429 = vmatprep.subr.mxu0 0.0
    %2430 = vmatpush2.xpose.msra.mxu0 0.0
    %2431 = vmatprep.subr.mxu0 0.0
    %2432 = vmatpush2.xpose.msra.mxu0 0.0
    %2433 = vmatprep.subr.mxu0 0.0
    %2434 = vmatpush2.xpose.msra.mxu0 0.0
    %2435 = vmatprep.subr.mxu0 0.0
    %2436 = vmatpush2.xpose.msra.mxu0 0.0
    %2437 = vmatprep.subr.mxu0 0.0
    %2438 = vmatpush2.xpose.msra.mxu0 0.0
    %2439 = vmatprep.mubr.f32.mxu0 0.0
    %2440 = vmatmul.mubr.f32.gmra.mxu0 %v2373
    %v2441 = vpop.f32.mrf.mxu0
    %v2442 = vadd.f32 0.0, %v2441
    %v2443 = vpop.f32.mrf.mxu0
    %2444 = vdwg.mxu0
    %s2445 = scalar_lea.vmem [#allocation12], 232
    %2446 = vst.msk [vmem:[%s2445] sm:$0xff] %vm191, %v2442
    %v2447 = vsel %vm191, %v2222, -inf
    %2448 = vmax.xlane.f32.xlu0 %v2447
    %v2449 = vpop.xlane.xlu0 %2448
    %v2450 = vsub.f32 %v2222, %v2449
    %v2451 = vmul.f32 %v2450, 1.442695
    %v2452 = vpow.pop %v2451
    %v2453 = vsel %vm191, %v2452, 0.0
    %2454 = vadd.xlane.f32.xlu0 %v2453
    %v2455 = vpop.xlane.xlu0 %2454
    %v2456 = vrcp.pop %v2455
    %v2457 = vmul.f32 %v2452, %v2456
    %2458 = vrot.lane.b32.xlu0 %v178, 56
    %v2459 = vpop.permute.xlu0 %2458
    %v2462 = vsel %vm191, %v2457, 0
    %2464 = vmatprep.subr.mxu0 0.0
    %2465 = vmatpush1.msra.mxu0 0.0
    %2466 = vmatprep.subr.mxu0 0.0
    %2467 = vmatpush1.msra.mxu0 0.0
    %2468 = vmatprep.subr.mxu0 0.0
    %2469 = vmatpush1.msra.mxu0 0.0
    %2470 = vmatprep.subr.mxu0 0.0
    %2471 = vmatpush1.msra.mxu0 0.0
    %2472 = vmatprep.subr.mxu0 0.0
    %2473 = vmatpush1.msra.mxu0 0.0
    %2474 = vmatprep.subr.mxu0 0.0
    %2475 = vmatpush1.msra.mxu0 0.0
    %2476 = vmatprep.subr.mxu0 0.0
    %2477 = vmatpush1.msra.mxu0 0.0
    %2478 = vmatprep.subr.mxu0 0.0
    %2479 = vmatpush1.msra.mxu0 0.0
    %2480 = vmatprep.subr.mxu0 0.0
    %2481 = vmatpush1.msra.mxu0 0.0
    %2482 = vmatprep.subr.mxu0 0.0
    %2483 = vmatpush1.msra.mxu0 0.0
    %2484 = vmatprep.subr.mxu0 0.0
    %2485 = vmatpush1.msra.mxu0 0.0
    %2486 = vmatprep.subr.mxu0 0.0
    %2487 = vmatpush1.msra.mxu0 0.0
    %2488 = vmatprep.subr.mxu0 0.0
    %2489 = vmatpush1.msra.mxu0 0.0
    %2490 = vmatprep.subr.mxu0 0.0
    %2491 = vmatpush1.msra.mxu0 0.0
    %2492 = vmatprep.subr.mxu0 0.0
    %2493 = vmatpush1.msra.mxu0 0.0
    %2494 = vmatprep.subr.mxu0 0.0
    %2495 = vmatpush1.msra.mxu0 %v2459
    %2496 = vmatprep.subr.mxu0 0.0
    %2497 = vmatpush2.msra.mxu0 0.0
    %2498 = vmatprep.subr.mxu0 0.0
    %2499 = vmatpush2.msra.mxu0 0.0
    %2500 = vmatprep.subr.mxu0 0.0
    %2501 = vmatpush2.msra.mxu0 0.0
    %2502 = vmatprep.subr.mxu0 0.0
    %2503 = vmatpush2.msra.mxu0 0.0
    %2504 = vmatprep.subr.mxu0 0.0
    %2505 = vmatpush2.msra.mxu0 0.0
    %2506 = vmatprep.subr.mxu0 0.0
    %2507 = vmatpush2.msra.mxu0 0.0
    %2508 = vmatprep.subr.mxu0 0.0
    %2509 = vmatpush2.msra.mxu0 0.0
    %2510 = vmatprep.subr.mxu0 0.0
    %2511 = vmatpush2.msra.mxu0 0.0
    %2512 = vmatprep.subr.mxu0 0.0
    %2513 = vmatpush2.msra.mxu0 0.0
    %2514 = vmatprep.subr.mxu0 0.0
    %2515 = vmatpush2.msra.mxu0 0.0
    %2516 = vmatprep.subr.mxu0 0.0
    %2517 = vmatpush2.msra.mxu0 0.0
    %2518 = vmatprep.subr.mxu0 0.0
    %2519 = vmatpush2.msra.mxu0 0.0
    %2520 = vmatprep.subr.mxu0 0.0
    %2521 = vmatpush2.msra.mxu0 0.0
    %2522 = vmatprep.subr.mxu0 0.0
    %2523 = vmatpush2.msra.mxu0 0.0
    %2524 = vmatprep.subr.mxu0 0.0
    %2525 = vmatpush2.msra.mxu0 0.0
    %2526 = vmatprep.subr.mxu0 0.0
    %2527 = vmatpush2.msra.mxu0 0.0
    %2528 = vmatprep.mubr.f32.mxu0 0.0
    %2529 = vmatmul.mubr.f32.gmra.mxu0 %v2462
    %v2530 = vpop.f32.mrf.mxu0
    %v2531 = vadd.f32 0.0, %v2530
    %v2532 = vpop.f32.mrf.mxu0
    %2533 = vdwg.mxu0
    %2535 = vrot.lane.b32.xlu0 %v2531, 8
    %v2536 = vpop.permute.xlu0 %2535
    %2538 = vst.msk [vmem:[#allocation2 + $0x8] sm:$0xff] %vm967, %v2536
    %2539 = vrot.lane.b32.xlu0 %v182, 112
    %v2540 = vpop.permute.xlu0 %2539
    %2541 = vrot.lane.b32.xlu0 %v182, 80
    %v2542 = vpop.permute.xlu0 %2541
    %v2543 = vsel %vm191, %v2540, 0
    %v2545 = vsel %vm191, %v2542, 0
    %2547 = vmatprep.subr.mxu0 0.0
    %2548 = vmatpush1.xpose.msra.mxu0 0.0
    %2549 = vmatprep.subr.mxu0 0.0
    %2550 = vmatpush1.xpose.msra.mxu0 0.0
    %2551 = vmatprep.subr.mxu0 0.0
    %2552 = vmatpush1.xpose.msra.mxu0 0.0
    %2553 = vmatprep.subr.mxu0 0.0
    %2554 = vmatpush1.xpose.msra.mxu0 0.0
    %2555 = vmatprep.subr.mxu0 0.0
    %2556 = vmatpush1.xpose.msra.mxu0 0.0
    %2557 = vmatprep.subr.mxu0 0.0
    %2558 = vmatpush1.xpose.msra.mxu0 0.0
    %2559 = vmatprep.subr.mxu0 0.0
    %2560 = vmatpush1.xpose.msra.mxu0 0.0
    %2561 = vmatprep.subr.mxu0 0.0
    %2562 = vmatpush1.xpose.msra.mxu0 0.0
    %2563 = vmatprep.subr.mxu0 0.0
    %2564 = vmatpush1.xpose.msra.mxu0 0.0
    %2565 = vmatprep.subr.mxu0 0.0
    %2566 = vmatpush1.xpose.msra.mxu0 0.0
    %2567 = vmatprep.subr.mxu0 0.0
    %2568 = vmatpush1.xpose.msra.mxu0 0.0
    %2569 = vmatprep.subr.mxu0 0.0
    %2570 = vmatpush1.xpose.msra.mxu0 0.0
    %2571 = vmatprep.subr.mxu0 0.0
    %2572 = vmatpush1.xpose.msra.mxu0 0.0
    %2573 = vmatprep.subr.mxu0 0.0
    %2574 = vmatpush1.xpose.msra.mxu0 0.0
    %2575 = vmatprep.subr.mxu0 0.0
    %2576 = vmatpush1.xpose.msra.mxu0 0.0
    %2577 = vmatprep.subr.mxu0 0.0
    %2578 = vmatpush1.xpose.msra.mxu0 %v2545
    %2579 = vmatprep.subr.mxu0 0.0
    %2580 = vmatpush2.xpose.msra.mxu0 0.0
    %2581 = vmatprep.subr.mxu0 0.0
    %2582 = vmatpush2.xpose.msra.mxu0 0.0
    %2583 = vmatprep.subr.mxu0 0.0
    %2584 = vmatpush2.xpose.msra.mxu0 0.0
    %2585 = vmatprep.subr.mxu0 0.0
    %2586 = vmatpush2.xpose.msra.mxu0 0.0
    %2587 = vmatprep.subr.mxu0 0.0
    %2588 = vmatpush2.xpose.msra.mxu0 0.0
    %2589 = vmatprep.subr.mxu0 0.0
    %2590 = vmatpush2.xpose.msra.mxu0 0.0
    %2591 = vmatprep.subr.mxu0 0.0
    %2592 = vmatpush2.xpose.msra.mxu0 0.0
    %2593 = vmatprep.subr.mxu0 0.0
    %2594 = vmatpush2.xpose.msra.mxu0 0.0
    %2595 = vmatprep.subr.mxu0 0.0
    %2596 = vmatpush2.xpose.msra.mxu0 0.0
    %2597 = vmatprep.subr.mxu0 0.0
    %2598 = vmatpush2.xpose.msra.mxu0 0.0
    %2599 = vmatprep.subr.mxu0 0.0
    %2600 = vmatpush2.xpose.msra.mxu0 0.0
    %2601 = vmatprep.subr.mxu0 0.0
    %2602 = vmatpush2.xpose.msra.mxu0 0.0
    %2603 = vmatprep.subr.mxu0 0.0
    %2604 = vmatpush2.xpose.msra.mxu0 0.0
    %2605 = vmatprep.subr.mxu0 0.0
    %2606 = vmatpush2.xpose.msra.mxu0 0.0
    %2607 = vmatprep.subr.mxu0 0.0
    %2608 = vmatpush2.xpose.msra.mxu0 0.0
    %2609 = vmatprep.subr.mxu0 0.0
    %2610 = vmatpush2.xpose.msra.mxu0 0.0
    %2611 = vmatprep.mubr.f32.mxu0 0.0
    %2612 = vmatmul.mubr.f32.gmra.mxu0 %v2543
    %v2613 = vpop.f32.mrf.mxu0
    %v2614 = vadd.f32 %v1758, %v2613
    %v2615 = vpop.f32.mrf.mxu0
    %2616 = vdwg.mxu0
    %s2617 = scalar_lea.vmem [#allocation12], 48
    %2618 = vst.msk [vmem:[%s2617] sm:$0xff] %vm191, %v2614
    %2619 = vmatprep.subr.mxu0 0.0
    %2620 = vmatpush1.xpose.msra.mxu0 0.0
    %2621 = vmatprep.subr.mxu0 0.0
    %2622 = vmatpush1.xpose.msra.mxu0 0.0
    %2623 = vmatprep.subr.mxu0 0.0
    %2624 = vmatpush1.xpose.msra.mxu0 0.0
    %2625 = vmatprep.subr.mxu0 0.0
    %2626 = vmatpush1.xpose.msra.mxu0 0.0
    %2627 = vmatprep.subr.mxu0 0.0
    %2628 = vmatpush1.xpose.msra.mxu0 0.0
    %2629 = vmatprep.subr.mxu0 0.0
    %2630 = vmatpush1.xpose.msra.mxu0 0.0
    %2631 = vmatprep.subr.mxu0 0.0
    %2632 = vmatpush1.xpose.msra.mxu0 0.0
    %2633 = vmatprep.subr.mxu0 0.0
    %2634 = vmatpush1.xpose.msra.mxu0 0.0
    %2635 = vmatprep.subr.mxu0 0.0
    %2636 = vmatpush1.xpose.msra.mxu0 0.0
    %2637 = vmatprep.subr.mxu0 0.0
    %2638 = vmatpush1.xpose.msra.mxu0 0.0
    %2639 = vmatprep.subr.mxu0 0.0
    %2640 = vmatpush1.xpose.msra.mxu0 0.0
    %2641 = vmatprep.subr.mxu0 0.0
    %2642 = vmatpush1.xpose.msra.mxu0 0.0
    %2643 = vmatprep.subr.mxu0 0.0
    %2644 = vmatpush1.xpose.msra.mxu0 0.0
    %2645 = vmatprep.subr.mxu0 0.0
    %2646 = vmatpush1.xpose.msra.mxu0 0.0
    %2647 = vmatprep.subr.mxu0 0.0
    %2648 = vmatpush1.xpose.msra.mxu0 0.0
    %2649 = vmatprep.subr.mxu0 0.0
    %2650 = vmatpush1.xpose.msra.mxu0 %v2543
    %2651 = vmatprep.subr.mxu0 0.0
    %2652 = vmatpush2.xpose.msra.mxu0 0.0
    %2653 = vmatprep.subr.mxu0 0.0
    %2654 = vmatpush2.xpose.msra.mxu0 0.0
    %2655 = vmatprep.subr.mxu0 0.0
    %2656 = vmatpush2.xpose.msra.mxu0 0.0
    %2657 = vmatprep.subr.mxu0 0.0
    %2658 = vmatpush2.xpose.msra.mxu0 0.0
    %2659 = vmatprep.subr.mxu0 0.0
    %2660 = vmatpush2.xpose.msra.mxu0 0.0
    %2661 = vmatprep.subr.mxu0 0.0
    %2662 = vmatpush2.xpose.msra.mxu0 0.0
    %2663 = vmatprep.subr.mxu0 0.0
    %2664 = vmatpush2.xpose.msra.mxu0 0.0
    %2665 = vmatprep.subr.mxu0 0.0
    %2666 = vmatpush2.xpose.msra.mxu0 0.0
    %2667 = vmatprep.subr.mxu0 0.0
    %2668 = vmatpush2.xpose.msra.mxu0 0.0
    %2669 = vmatprep.subr.mxu0 0.0
    %2670 = vmatpush2.xpose.msra.mxu0 0.0
    %2671 = vmatprep.subr.mxu0 0.0
    %2672 = vmatpush2.xpose.msra.mxu0 0.0
    %2673 = vmatprep.subr.mxu0 0.0
    %2674 = vmatpush2.xpose.msra.mxu0 0.0
    %2675 = vmatprep.subr.mxu0 0.0
    %2676 = vmatpush2.xpose.msra.mxu0 0.0
    %2677 = vmatprep.subr.mxu0 0.0
    %2678 = vmatpush2.xpose.msra.mxu0 0.0
    %2679 = vmatprep.subr.mxu0 0.0
    %2680 = vmatpush2.xpose.msra.mxu0 0.0
    %2681 = vmatprep.subr.mxu0 0.0
    %2682 = vmatpush2.xpose.msra.mxu0 0.0
    %2683 = vmatprep.mubr.f32.mxu0 0.0
    %2684 = vmatmul.mubr.f32.gmra.mxu0 %v2543
    %v2685 = vpop.f32.mrf.mxu0
    %v2686 = vadd.f32 0.0, %v2685
    %v2687 = vpop.f32.mrf.mxu0
    %2688 = vdwg.mxu0
    %s2689 = scalar_lea.vmem [#allocation12], 112
    %2690 = vst.msk [vmem:[%s2689] sm:$0xff] %vm191, %v2686
    %2691 = vmatprep.subr.mxu0 0.0
    %2692 = vmatpush1.xpose.msra.mxu0 0.0
    %2693 = vmatprep.subr.mxu0 0.0
    %2694 = vmatpush1.xpose.msra.mxu0 0.0
    %2695 = vmatprep.subr.mxu0 0.0
    %2696 = vmatpush1.xpose.msra.mxu0 0.0
    %2697 = vmatprep.subr.mxu0 0.0
    %2698 = vmatpush1.xpose.msra.mxu0 0.0
    %2699 = vmatprep.subr.mxu0 0.0
    %2700 = vmatpush1.xpose.msra.mxu0 0.0
    %2701 = vmatprep.subr.mxu0 0.0
    %2702 = vmatpush1.xpose.msra.mxu0 0.0
    %2703 = vmatprep.subr.mxu0 0.0
    %2704 = vmatpush1.xpose.msra.mxu0 0.0
    %2705 = vmatprep.subr.mxu0 0.0
    %2706 = vmatpush1.xpose.msra.mxu0 0.0
    %2707 = vmatprep.subr.mxu0 0.0
    %2708 = vmatpush1.xpose.msra.mxu0 0.0
    %2709 = vmatprep.subr.mxu0 0.0
    %2710 = vmatpush1.xpose.msra.mxu0 0.0
    %2711 = vmatprep.subr.mxu0 0.0
    %2712 = vmatpush1.xpose.msra.mxu0 0.0
    %2713 = vmatprep.subr.mxu0 0.0
    %2714 = vmatpush1.xpose.msra.mxu0 0.0
    %2715 = vmatprep.subr.mxu0 0.0
    %2716 = vmatpush1.xpose.msra.mxu0 0.0
    %2717 = vmatprep.subr.mxu0 0.0
    %2718 = vmatpush1.xpose.msra.mxu0 0.0
    %2719 = vmatprep.subr.mxu0 0.0
    %2720 = vmatpush1.xpose.msra.mxu0 0.0
    %2721 = vmatprep.subr.mxu0 0.0
    %2722 = vmatpush1.xpose.msra.mxu0 %v2545
    %2723 = vmatprep.subr.mxu0 0.0
    %2724 = vmatpush2.xpose.msra.mxu0 0.0
    %2725 = vmatprep.subr.mxu0 0.0
    %2726 = vmatpush2.xpose.msra.mxu0 0.0
    %2727 = vmatprep.subr.mxu0 0.0
    %2728 = vmatpush2.xpose.msra.mxu0 0.0
    %2729 = vmatprep.subr.mxu0 0.0
    %2730 = vmatpush2.xpose.msra.mxu0 0.0
    %2731 = vmatprep.subr.mxu0 0.0
    %2732 = vmatpush2.xpose.msra.mxu0 0.0
    %2733 = vmatprep.subr.mxu0 0.0
    %2734 = vmatpush2.xpose.msra.mxu0 0.0
    %2735 = vmatprep.subr.mxu0 0.0
    %2736 = vmatpush2.xpose.msra.mxu0 0.0
    %2737 = vmatprep.subr.mxu0 0.0
    %2738 = vmatpush2.xpose.msra.mxu0 0.0
    %2739 = vmatprep.subr.mxu0 0.0
    %2740 = vmatpush2.xpose.msra.mxu0 0.0
    %2741 = vmatprep.subr.mxu0 0.0
    %2742 = vmatpush2.xpose.msra.mxu0 0.0
    %2743 = vmatprep.subr.mxu0 0.0
    %2744 = vmatpush2.xpose.msra.mxu0 0.0
    %2745 = vmatprep.subr.mxu0 0.0
    %2746 = vmatpush2.xpose.msra.mxu0 0.0
    %2747 = vmatprep.subr.mxu0 0.0
    %2748 = vmatpush2.xpose.msra.mxu0 0.0
    %2749 = vmatprep.subr.mxu0 0.0
    %2750 = vmatpush2.xpose.msra.mxu0 0.0
    %2751 = vmatprep.subr.mxu0 0.0
    %2752 = vmatpush2.xpose.msra.mxu0 0.0
    %2753 = vmatprep.subr.mxu0 0.0
    %2754 = vmatpush2.xpose.msra.mxu0 0.0
    %2755 = vmatprep.mubr.f32.mxu0 0.0
    %2756 = vmatmul.mubr.f32.gmra.mxu0 %v2545
    %v2757 = vpop.f32.mrf.mxu0
    %v2758 = vadd.f32 0.0, %v2757
    %v2759 = vpop.f32.mrf.mxu0
    %2760 = vdwg.mxu0
    %s2761 = scalar_lea.vmem [#allocation12], 176
    %2762 = vst.msk [vmem:[%s2761] sm:$0xff] %vm191, %v2758
    %2763 = vrot.lane.b32.xlu0 %v182, 48
    %v2764 = vpop.permute.xlu0 %2763
    %v2765 = vsel %vm191, %v2764, 0
    %2767 = vmatprep.subr.mxu0 0.0
    %2768 = vmatpush1.xpose.msra.mxu0 0.0
    %2769 = vmatprep.subr.mxu0 0.0
    %2770 = vmatpush1.xpose.msra.mxu0 0.0
    %2771 = vmatprep.subr.mxu0 0.0
    %2772 = vmatpush1.xpose.msra.mxu0 0.0
    %2773 = vmatprep.subr.mxu0 0.0
    %2774 = vmatpush1.xpose.msra.mxu0 0.0
    %2775 = vmatprep.subr.mxu0 0.0
    %2776 = vmatpush1.xpose.msra.mxu0 0.0
    %2777 = vmatprep.subr.mxu0 0.0
    %2778 = vmatpush1.xpose.msra.mxu0 0.0
    %2779 = vmatprep.subr.mxu0 0.0
    %2780 = vmatpush1.xpose.msra.mxu0 0.0
    %2781 = vmatprep.subr.mxu0 0.0
    %2782 = vmatpush1.xpose.msra.mxu0 0.0
    %2783 = vmatprep.subr.mxu0 0.0
    %2784 = vmatpush1.xpose.msra.mxu0 0.0
    %2785 = vmatprep.subr.mxu0 0.0
    %2786 = vmatpush1.xpose.msra.mxu0 0.0
    %2787 = vmatprep.subr.mxu0 0.0
    %2788 = vmatpush1.xpose.msra.mxu0 0.0
    %2789 = vmatprep.subr.mxu0 0.0
    %2790 = vmatpush1.xpose.msra.mxu0 0.0
    %2791 = vmatprep.subr.mxu0 0.0
    %2792 = vmatpush1.xpose.msra.mxu0 0.0
    %2793 = vmatprep.subr.mxu0 0.0
    %2794 = vmatpush1.xpose.msra.mxu0 0.0
    %2795 = vmatprep.subr.mxu0 0.0
    %2796 = vmatpush1.xpose.msra.mxu0 0.0
    %2797 = vmatprep.subr.mxu0 0.0
    %2798 = vmatpush1.xpose.msra.mxu0 %v2765
    %2799 = vmatprep.subr.mxu0 0.0
    %2800 = vmatpush2.xpose.msra.mxu0 0.0
    %2801 = vmatprep.subr.mxu0 0.0
    %2802 = vmatpush2.xpose.msra.mxu0 0.0
    %2803 = vmatprep.subr.mxu0 0.0
    %2804 = vmatpush2.xpose.msra.mxu0 0.0
    %2805 = vmatprep.subr.mxu0 0.0
    %2806 = vmatpush2.xpose.msra.mxu0 0.0
    %2807 = vmatprep.subr.mxu0 0.0
    %2808 = vmatpush2.xpose.msra.mxu0 0.0
    %2809 = vmatprep.subr.mxu0 0.0
    %2810 = vmatpush2.xpose.msra.mxu0 0.0
    %2811 = vmatprep.subr.mxu0 0.0
    %2812 = vmatpush2.xpose.msra.mxu0 0.0
    %2813 = vmatprep.subr.mxu0 0.0
    %2814 = vmatpush2.xpose.msra.mxu0 0.0
    %2815 = vmatprep.subr.mxu0 0.0
    %2816 = vmatpush2.xpose.msra.mxu0 0.0
    %2817 = vmatprep.subr.mxu0 0.0
    %2818 = vmatpush2.xpose.msra.mxu0 0.0
    %2819 = vmatprep.subr.mxu0 0.0
    %2820 = vmatpush2.xpose.msra.mxu0 0.0
    %2821 = vmatprep.subr.mxu0 0.0
    %2822 = vmatpush2.xpose.msra.mxu0 0.0
    %2823 = vmatprep.subr.mxu0 0.0
    %2824 = vmatpush2.xpose.msra.mxu0 0.0
    %2825 = vmatprep.subr.mxu0 0.0
    %2826 = vmatpush2.xpose.msra.mxu0 0.0
    %2827 = vmatprep.subr.mxu0 0.0
    %2828 = vmatpush2.xpose.msra.mxu0 0.0
    %2829 = vmatprep.subr.mxu0 0.0
    %2830 = vmatpush2.xpose.msra.mxu0 0.0
    %2831 = vmatprep.mubr.f32.mxu0 0.0
    %2832 = vmatmul.mubr.f32.gmra.mxu0 %v2765
    %v2833 = vpop.f32.mrf.mxu0
    %v2834 = vadd.f32 0.0, %v2833
    %v2835 = vpop.f32.mrf.mxu0
    %2836 = vdwg.mxu0
    %s2837 = scalar_lea.vmem [#allocation12], 240
    %2838 = vst.msk [vmem:[%s2837] sm:$0xff] %vm191, %v2834
    %v2839 = vsel %vm191, %v2614, -inf
    %2840 = vmax.xlane.f32.xlu0 %v2839
    %v2841 = vpop.xlane.xlu0 %2840
    %v2842 = vsub.f32 %v2614, %v2841
    %v2843 = vmul.f32 %v2842, 1.442695
    %v2844 = vpow.pop %v2843
    %v2845 = vsel %vm191, %v2844, 0.0
    %2846 = vadd.xlane.f32.xlu0 %v2845
    %v2847 = vpop.xlane.xlu0 %2846
    %v2848 = vrcp.pop %v2847
    %v2849 = vmul.f32 %v2844, %v2848
    %2850 = vrot.lane.b32.xlu0 %v178, 48
    %v2851 = vpop.permute.xlu0 %2850
    %v2854 = vsel %vm191, %v2849, 0
    %2856 = vmatprep.subr.mxu0 0.0
    %2857 = vmatpush1.msra.mxu0 0.0
    %2858 = vmatprep.subr.mxu0 0.0
    %2859 = vmatpush1.msra.mxu0 0.0
    %2860 = vmatprep.subr.mxu0 0.0
    %2861 = vmatpush1.msra.mxu0 0.0
    %2862 = vmatprep.subr.mxu0 0.0
    %2863 = vmatpush1.msra.mxu0 0.0
    %2864 = vmatprep.subr.mxu0 0.0
    %2865 = vmatpush1.msra.mxu0 0.0
    %2866 = vmatprep.subr.mxu0 0.0
    %2867 = vmatpush1.msra.mxu0 0.0
    %2868 = vmatprep.subr.mxu0 0.0
    %2869 = vmatpush1.msra.mxu0 0.0
    %2870 = vmatprep.subr.mxu0 0.0
    %2871 = vmatpush1.msra.mxu0 0.0
    %2872 = vmatprep.subr.mxu0 0.0
    %2873 = vmatpush1.msra.mxu0 0.0
    %2874 = vmatprep.subr.mxu0 0.0
    %2875 = vmatpush1.msra.mxu0 0.0
    %2876 = vmatprep.subr.mxu0 0.0
    %2877 = vmatpush1.msra.mxu0 0.0
    %2878 = vmatprep.subr.mxu0 0.0
    %2879 = vmatpush1.msra.mxu0 0.0
    %2880 = vmatprep.subr.mxu0 0.0
    %2881 = vmatpush1.msra.mxu0 0.0
    %2882 = vmatprep.subr.mxu0 0.0
    %2883 = vmatpush1.msra.mxu0 0.0
    %2884 = vmatprep.subr.mxu0 0.0
    %2885 = vmatpush1.msra.mxu0 0.0
    %2886 = vmatprep.subr.mxu0 0.0
    %2887 = vmatpush1.msra.mxu0 %v2851
    %2888 = vmatprep.subr.mxu0 0.0
    %2889 = vmatpush2.msra.mxu0 0.0
    %2890 = vmatprep.subr.mxu0 0.0
    %2891 = vmatpush2.msra.mxu0 0.0
    %2892 = vmatprep.subr.mxu0 0.0
    %2893 = vmatpush2.msra.mxu0 0.0
    %2894 = vmatprep.subr.mxu0 0.0
    %2895 = vmatpush2.msra.mxu0 0.0
    %2896 = vmatprep.subr.mxu0 0.0
    %2897 = vmatpush2.msra.mxu0 0.0
    %2898 = vmatprep.subr.mxu0 0.0
    %2899 = vmatpush2.msra.mxu0 0.0
    %2900 = vmatprep.subr.mxu0 0.0
    %2901 = vmatpush2.msra.mxu0 0.0
    %2902 = vmatprep.subr.mxu0 0.0
    %2903 = vmatpush2.msra.mxu0 0.0
    %2904 = vmatprep.subr.mxu0 0.0
    %2905 = vmatpush2.msra.mxu0 0.0
    %2906 = vmatprep.subr.mxu0 0.0
    %2907 = vmatpush2.msra.mxu0 0.0
    %2908 = vmatprep.subr.mxu0 0.0
    %2909 = vmatpush2.msra.mxu0 0.0
    %2910 = vmatprep.subr.mxu0 0.0
    %2911 = vmatpush2.msra.mxu0 0.0
    %2912 = vmatprep.subr.mxu0 0.0
    %2913 = vmatpush2.msra.mxu0 0.0
    %2914 = vmatprep.subr.mxu0 0.0
    %2915 = vmatpush2.msra.mxu0 0.0
    %2916 = vmatprep.subr.mxu0 0.0
    %2917 = vmatpush2.msra.mxu0 0.0
    %2918 = vmatprep.subr.mxu0 0.0
    %2919 = vmatpush2.msra.mxu0 0.0
    %2920 = vmatprep.mubr.f32.mxu0 0.0
    %2921 = vmatmul.mubr.f32.gmra.mxu0 %v2854
    %v2922 = vpop.f32.mrf.mxu0
    %v2923 = vadd.f32 0.0, %v2922
    %v2924 = vpop.f32.mrf.mxu0
    %2925 = vdwg.mxu0
    %2927 = vrot.lane.b32.xlu0 %v2923, 16
    %v2928 = vpop.permute.xlu0 %2927
    %2930 = vst.msk [vmem:[#allocation2 + $0x8] sm:$0xff] %vm1360, %v2928
    %2931 = vrot.lane.b32.xlu0 %v182, 104
    %v2932 = vpop.permute.xlu0 %2931
    %2933 = vrot.lane.b32.xlu0 %v182, 72
    %v2934 = vpop.permute.xlu0 %2933
    %v2935 = vsel %vm191, %v2932, 0
    %v2937 = vsel %vm191, %v2934, 0
    %2939 = vmatprep.subr.mxu0 0.0
    %2940 = vmatpush1.xpose.msra.mxu0 0.0
    %2941 = vmatprep.subr.mxu0 0.0
    %2942 = vmatpush1.xpose.msra.mxu0 0.0
    %2943 = vmatprep.subr.mxu0 0.0
    %2944 = vmatpush1.xpose.msra.mxu0 0.0
    %2945 = vmatprep.subr.mxu0 0.0
    %2946 = vmatpush1.xpose.msra.mxu0 0.0
    %2947 = vmatprep.subr.mxu0 0.0
    %2948 = vmatpush1.xpose.msra.mxu0 0.0
    %2949 = vmatprep.subr.mxu0 0.0
    %2950 = vmatpush1.xpose.msra.mxu0 0.0
    %2951 = vmatprep.subr.mxu0 0.0
    %2952 = vmatpush1.xpose.msra.mxu0 0.0
    %2953 = vmatprep.subr.mxu0 0.0
    %2954 = vmatpush1.xpose.msra.mxu0 0.0
    %2955 = vmatprep.subr.mxu0 0.0
    %2956 = vmatpush1.xpose.msra.mxu0 0.0
    %2957 = vmatprep.subr.mxu0 0.0
    %2958 = vmatpush1.xpose.msra.mxu0 0.0
    %2959 = vmatprep.subr.mxu0 0.0
    %2960 = vmatpush1.xpose.msra.mxu0 0.0
    %2961 = vmatprep.subr.mxu0 0.0
    %2962 = vmatpush1.xpose.msra.mxu0 0.0
    %2963 = vmatprep.subr.mxu0 0.0
    %2964 = vmatpush1.xpose.msra.mxu0 0.0
    %2965 = vmatprep.subr.mxu0 0.0
    %2966 = vmatpush1.xpose.msra.mxu0 0.0
    %2967 = vmatprep.subr.mxu0 0.0
    %2968 = vmatpush1.xpose.msra.mxu0 0.0
    %2969 = vmatprep.subr.mxu0 0.0
    %2970 = vmatpush1.xpose.msra.mxu0 %v2937
    %2971 = vmatprep.subr.mxu0 0.0
    %2972 = vmatpush2.xpose.msra.mxu0 0.0
    %2973 = vmatprep.subr.mxu0 0.0
    %2974 = vmatpush2.xpose.msra.mxu0 0.0
    %2975 = vmatprep.subr.mxu0 0.0
    %2976 = vmatpush2.xpose.msra.mxu0 0.0
    %2977 = vmatprep.subr.mxu0 0.0
    %2978 = vmatpush2.xpose.msra.mxu0 0.0
    %2979 = vmatprep.subr.mxu0 0.0
    %2980 = vmatpush2.xpose.msra.mxu0 0.0
    %2981 = vmatprep.subr.mxu0 0.0
    %2982 = vmatpush2.xpose.msra.mxu0 0.0
    %2983 = vmatprep.subr.mxu0 0.0
    %2984 = vmatpush2.xpose.msra.mxu0 0.0
    %2985 = vmatprep.subr.mxu0 0.0
    %2986 = vmatpush2.xpose.msra.mxu0 0.0
    %2987 = vmatprep.subr.mxu0 0.0
    %2988 = vmatpush2.xpose.msra.mxu0 0.0
    %2989 = vmatprep.subr.mxu0 0.0
    %2990 = vmatpush2.xpose.msra.mxu0 0.0
    %2991 = vmatprep.subr.mxu0 0.0
    %2992 = vmatpush2.xpose.msra.mxu0 0.0
    %2993 = vmatprep.subr.mxu0 0.0
    %2994 = vmatpush2.xpose.msra.mxu0 0.0
    %2995 = vmatprep.subr.mxu0 0.0
    %2996 = vmatpush2.xpose.msra.mxu0 0.0
    %2997 = vmatprep.subr.mxu0 0.0
    %2998 = vmatpush2.xpose.msra.mxu0 0.0
    %2999 = vmatprep.subr.mxu0 0.0
    %3000 = vmatpush2.xpose.msra.mxu0 0.0
    %3001 = vmatprep.subr.mxu0 0.0
    %3002 = vmatpush2.xpose.msra.mxu0 0.0
    %3003 = vmatprep.mubr.f32.mxu0 0.0
    %3004 = vmatmul.mubr.f32.gmra.mxu0 %v2935
    %v3005 = vpop.f32.mrf.mxu0
    %v3006 = vadd.f32 %v1758, %v3005
    %v3007 = vpop.f32.mrf.mxu0
    %3008 = vdwg.mxu0
    %s3009 = scalar_lea.vmem [#allocation12], 56
    %3010 = vst.msk [vmem:[%s3009] sm:$0xff] %vm191, %v3006
    %3011 = vmatprep.subr.mxu0 0.0
    %3012 = vmatpush1.xpose.msra.mxu0 0.0
    %3013 = vmatprep.subr.mxu0 0.0
    %3014 = vmatpush1.xpose.msra.mxu0 0.0
    %3015 = vmatprep.subr.mxu0 0.0
    %3016 = vmatpush1.xpose.msra.mxu0 0.0
    %3017 = vmatprep.subr.mxu0 0.0
    %3018 = vmatpush1.xpose.msra.mxu0 0.0
    %3019 = vmatprep.subr.mxu0 0.0
    %3020 = vmatpush1.xpose.msra.mxu0 0.0
    %3021 = vmatprep.subr.mxu0 0.0
    %3022 = vmatpush1.xpose.msra.mxu0 0.0
    %3023 = vmatprep.subr.mxu0 0.0
    %3024 = vmatpush1.xpose.msra.mxu0 0.0
    %3025 = vmatprep.subr.mxu0 0.0
    %3026 = vmatpush1.xpose.msra.mxu0 0.0
    %3027 = vmatprep.subr.mxu0 0.0
    %3028 = vmatpush1.xpose.msra.mxu0 0.0
    %3029 = vmatprep.subr.mxu0 0.0
    %3030 = vmatpush1.xpose.msra.mxu0 0.0
    %3031 = vmatprep.subr.mxu0 0.0
    %3032 = vmatpush1.xpose.msra.mxu0 0.0
    %3033 = vmatprep.subr.mxu0 0.0
    %3034 = vmatpush1.xpose.msra.mxu0 0.0
    %3035 = vmatprep.subr.mxu0 0.0
    %3036 = vmatpush1.xpose.msra.mxu0 0.0
    %3037 = vmatprep.subr.mxu0 0.0
    %3038 = vmatpush1.xpose.msra.mxu0 0.0
    %3039 = vmatprep.subr.mxu0 0.0
    %3040 = vmatpush1.xpose.msra.mxu0 0.0
    %3041 = vmatprep.subr.mxu0 0.0
    %3042 = vmatpush1.xpose.msra.mxu0 %v2935
    %3043 = vmatprep.subr.mxu0 0.0
    %3044 = vmatpush2.xpose.msra.mxu0 0.0
    %3045 = vmatprep.subr.mxu0 0.0
    %3046 = vmatpush2.xpose.msra.mxu0 0.0
    %3047 = vmatprep.subr.mxu0 0.0
    %3048 = vmatpush2.xpose.msra.mxu0 0.0
    %3049 = vmatprep.subr.mxu0 0.0
    %3050 = vmatpush2.xpose.msra.mxu0 0.0
    %3051 = vmatprep.subr.mxu0 0.0
    %3052 = vmatpush2.xpose.msra.mxu0 0.0
    %3053 = vmatprep.subr.mxu0 0.0
    %3054 = vmatpush2.xpose.msra.mxu0 0.0
    %3055 = vmatprep.subr.mxu0 0.0
    %3056 = vmatpush2.xpose.msra.mxu0 0.0
    %3057 = vmatprep.subr.mxu0 0.0
    %3058 = vmatpush2.xpose.msra.mxu0 0.0
    %3059 = vmatprep.subr.mxu0 0.0
    %3060 = vmatpush2.xpose.msra.mxu0 0.0
    %3061 = vmatprep.subr.mxu0 0.0
    %3062 = vmatpush2.xpose.msra.mxu0 0.0
    %3063 = vmatprep.subr.mxu0 0.0
    %3064 = vmatpush2.xpose.msra.mxu0 0.0
    %3065 = vmatprep.subr.mxu0 0.0
    %3066 = vmatpush2.xpose.msra.mxu0 0.0
    %3067 = vmatprep.subr.mxu0 0.0
    %3068 = vmatpush2.xpose.msra.mxu0 0.0
    %3069 = vmatprep.subr.mxu0 0.0
    %3070 = vmatpush2.xpose.msra.mxu0 0.0
    %3071 = vmatprep.subr.mxu0 0.0
    %3072 = vmatpush2.xpose.msra.mxu0 0.0
    %3073 = vmatprep.subr.mxu0 0.0
    %3074 = vmatpush2.xpose.msra.mxu0 0.0
    %3075 = vmatprep.mubr.f32.mxu0 0.0
    %3076 = vmatmul.mubr.f32.gmra.mxu0 %v2935
    %v3077 = vpop.f32.mrf.mxu0
    %v3078 = vadd.f32 0.0, %v3077
    %v3079 = vpop.f32.mrf.mxu0
    %3080 = vdwg.mxu0
    %s3081 = scalar_lea.vmem [#allocation12], 120
    %3082 = vst.msk [vmem:[%s3081] sm:$0xff] %vm191, %v3078
    %3083 = vmatprep.subr.mxu0 0.0
    %3084 = vmatpush1.xpose.msra.mxu0 0.0
    %3085 = vmatprep.subr.mxu0 0.0
    %3086 = vmatpush1.xpose.msra.mxu0 0.0
    %3087 = vmatprep.subr.mxu0 0.0
    %3088 = vmatpush1.xpose.msra.mxu0 0.0
    %3089 = vmatprep.subr.mxu0 0.0
    %3090 = vmatpush1.xpose.msra.mxu0 0.0
    %3091 = vmatprep.subr.mxu0 0.0
    %3092 = vmatpush1.xpose.msra.mxu0 0.0
    %3093 = vmatprep.subr.mxu0 0.0
    %3094 = vmatpush1.xpose.msra.mxu0 0.0
    %3095 = vmatprep.subr.mxu0 0.0
    %3096 = vmatpush1.xpose.msra.mxu0 0.0
    %3097 = vmatprep.subr.mxu0 0.0
    %3098 = vmatpush1.xpose.msra.mxu0 0.0
    %3099 = vmatprep.subr.mxu0 0.0
    %3100 = vmatpush1.xpose.msra.mxu0 0.0
    %3101 = vmatprep.subr.mxu0 0.0
    %3102 = vmatpush1.xpose.msra.mxu0 0.0
    %3103 = vmatprep.subr.mxu0 0.0
    %3104 = vmatpush1.xpose.msra.mxu0 0.0
    %3105 = vmatprep.subr.mxu0 0.0
    %3106 = vmatpush1.xpose.msra.mxu0 0.0
    %3107 = vmatprep.subr.mxu0 0.0
    %3108 = vmatpush1.xpose.msra.mxu0 0.0
    %3109 = vmatprep.subr.mxu0 0.0
    %3110 = vmatpush1.xpose.msra.mxu0 0.0
    %3111 = vmatprep.subr.mxu0 0.0
    %3112 = vmatpush1.xpose.msra.mxu0 0.0
    %3113 = vmatprep.subr.mxu0 0.0
    %3114 = vmatpush1.xpose.msra.mxu0 %v2937
    %3115 = vmatprep.subr.mxu0 0.0
    %3116 = vmatpush2.xpose.msra.mxu0 0.0
    %3117 = vmatprep.subr.mxu0 0.0
    %3118 = vmatpush2.xpose.msra.mxu0 0.0
    %3119 = vmatprep.subr.mxu0 0.0
    %3120 = vmatpush2.xpose.msra.mxu0 0.0
    %3121 = vmatprep.subr.mxu0 0.0
    %3122 = vmatpush2.xpose.msra.mxu0 0.0
    %3123 = vmatprep.subr.mxu0 0.0
    %3124 = vmatpush2.xpose.msra.mxu0 0.0
    %3125 = vmatprep.subr.mxu0 0.0
    %3126 = vmatpush2.xpose.msra.mxu0 0.0
    %3127 = vmatprep.subr.mxu0 0.0
    %3128 = vmatpush2.xpose.msra.mxu0 0.0
    %3129 = vmatprep.subr.mxu0 0.0
    %3130 = vmatpush2.xpose.msra.mxu0 0.0
    %3131 = vmatprep.subr.mxu0 0.0
    %3132 = vmatpush2.xpose.msra.mxu0 0.0
    %3133 = vmatprep.subr.mxu0 0.0
    %3134 = vmatpush2.xpose.msra.mxu0 0.0
    %3135 = vmatprep.subr.mxu0 0.0
    %3136 = vmatpush2.xpose.msra.mxu0 0.0
    %3137 = vmatprep.subr.mxu0 0.0
    %3138 = vmatpush2.xpose.msra.mxu0 0.0
    %3139 = vmatprep.subr.mxu0 0.0
    %3140 = vmatpush2.xpose.msra.mxu0 0.0
    %3141 = vmatprep.subr.mxu0 0.0
    %3142 = vmatpush2.xpose.msra.mxu0 0.0
    %3143 = vmatprep.subr.mxu0 0.0
    %3144 = vmatpush2.xpose.msra.mxu0 0.0
    %3145 = vmatprep.subr.mxu0 0.0
    %3146 = vmatpush2.xpose.msra.mxu0 0.0
    %3147 = vmatprep.mubr.f32.mxu0 0.0
    %3148 = vmatmul.mubr.f32.gmra.mxu0 %v2937
    %v3149 = vpop.f32.mrf.mxu0
    %v3150 = vadd.f32 0.0, %v3149
    %v3151 = vpop.f32.mrf.mxu0
    %3152 = vdwg.mxu0
    %s3153 = scalar_lea.vmem [#allocation12], 184
    %3154 = vst.msk [vmem:[%s3153] sm:$0xff] %vm191, %v3150
    %3155 = vrot.lane.b32.xlu0 %v182, 40
    %v3156 = vpop.permute.xlu0 %3155
    %v3157 = vsel %vm191, %v3156, 0
    %3159 = vmatprep.subr.mxu0 0.0
    %3160 = vmatpush1.xpose.msra.mxu0 0.0
    %3161 = vmatprep.subr.mxu0 0.0
    %3162 = vmatpush1.xpose.msra.mxu0 0.0
    %3163 = vmatprep.subr.mxu0 0.0
    %3164 = vmatpush1.xpose.msra.mxu0 0.0
    %3165 = vmatprep.subr.mxu0 0.0
    %3166 = vmatpush1.xpose.msra.mxu0 0.0
    %3167 = vmatprep.subr.mxu0 0.0
    %3168 = vmatpush1.xpose.msra.mxu0 0.0
    %3169 = vmatprep.subr.mxu0 0.0
    %3170 = vmatpush1.xpose.msra.mxu0 0.0
    %3171 = vmatprep.subr.mxu0 0.0
    %3172 = vmatpush1.xpose.msra.mxu0 0.0
    %3173 = vmatprep.subr.mxu0 0.0
    %3174 = vmatpush1.xpose.msra.mxu0 0.0
    %3175 = vmatprep.subr.mxu0 0.0
    %3176 = vmatpush1.xpose.msra.mxu0 0.0
    %3177 = vmatprep.subr.mxu0 0.0
    %3178 = vmatpush1.xpose.msra.mxu0 0.0
    %3179 = vmatprep.subr.mxu0 0.0
    %3180 = vmatpush1.xpose.msra.mxu0 0.0
    %3181 = vmatprep.subr.mxu0 0.0
    %3182 = vmatpush1.xpose.msra.mxu0 0.0
    %3183 = vmatprep.subr.mxu0 0.0
    %3184 = vmatpush1.xpose.msra.mxu0 0.0
    %3185 = vmatprep.subr.mxu0 0.0
    %3186 = vmatpush1.xpose.msra.mxu0 0.0
    %3187 = vmatprep.subr.mxu0 0.0
    %3188 = vmatpush1.xpose.msra.mxu0 0.0
    %3189 = vmatprep.subr.mxu0 0.0
    %3190 = vmatpush1.xpose.msra.mxu0 %v3157
    %3191 = vmatprep.subr.mxu0 0.0
    %3192 = vmatpush2.xpose.msra.mxu0 0.0
    %3193 = vmatprep.subr.mxu0 0.0
    %3194 = vmatpush2.xpose.msra.mxu0 0.0
    %3195 = vmatprep.subr.mxu0 0.0
    %3196 = vmatpush2.xpose.msra.mxu0 0.0
    %3197 = vmatprep.subr.mxu0 0.0
    %3198 = vmatpush2.xpose.msra.mxu0 0.0
    %3199 = vmatprep.subr.mxu0 0.0
    %3200 = vmatpush2.xpose.msra.mxu0 0.0
    %3201 = vmatprep.subr.mxu0 0.0
    %3202 = vmatpush2.xpose.msra.mxu0 0.0
    %3203 = vmatprep.subr.mxu0 0.0
    %3204 = vmatpush2.xpose.msra.mxu0 0.0
    %3205 = vmatprep.subr.mxu0 0.0
    %3206 = vmatpush2.xpose.msra.mxu0 0.0
    %3207 = vmatprep.subr.mxu0 0.0
    %3208 = vmatpush2.xpose.msra.mxu0 0.0
    %3209 = vmatprep.subr.mxu0 0.0
    %3210 = vmatpush2.xpose.msra.mxu0 0.0
    %3211 = vmatprep.subr.mxu0 0.0
    %3212 = vmatpush2.xpose.msra.mxu0 0.0
    %3213 = vmatprep.subr.mxu0 0.0
    %3214 = vmatpush2.xpose.msra.mxu0 0.0
    %3215 = vmatprep.subr.mxu0 0.0
    %3216 = vmatpush2.xpose.msra.mxu0 0.0
    %3217 = vmatprep.subr.mxu0 0.0
    %3218 = vmatpush2.xpose.msra.mxu0 0.0
    %3219 = vmatprep.subr.mxu0 0.0
    %3220 = vmatpush2.xpose.msra.mxu0 0.0
    %3221 = vmatprep.subr.mxu0 0.0
    %3222 = vmatpush2.xpose.msra.mxu0 0.0
    %3223 = vmatprep.mubr.f32.mxu0 0.0
    %3224 = vmatmul.mubr.f32.gmra.mxu0 %v3157
    %v3225 = vpop.f32.mrf.mxu0
    %v3226 = vadd.f32 0.0, %v3225
    %v3227 = vpop.f32.mrf.mxu0
    %3228 = vdwg.mxu0
    %s3229 = scalar_lea.vmem [#allocation12], 248
    %3230 = vst.msk [vmem:[%s3229] sm:$0xff] %vm191, %v3226
    %v3231 = vsel %vm191, %v3006, -inf
    %3232 = vmax.xlane.f32.xlu0 %v3231
    %v3233 = vpop.xlane.xlu0 %3232
    %v3234 = vsub.f32 %v3006, %v3233
    %v3235 = vmul.f32 %v3234, 1.442695
    %v3236 = vpow.pop %v3235
    %v3237 = vsel %vm191, %v3236, 0.0
    %3238 = vadd.xlane.f32.xlu0 %v3237
    %v3239 = vpop.xlane.xlu0 %3238
    %v3240 = vrcp.pop %v3239
    %v3241 = vmul.f32 %v3236, %v3240
    %3242 = vrot.lane.b32.xlu0 %v178, 40
    %v3243 = vpop.permute.xlu0 %3242
    %v3246 = vsel %vm191, %v3241, 0
    %3248 = vmatprep.subr.mxu0 0.0
    %3249 = vmatpush1.msra.mxu0 0.0
    %3250 = vmatprep.subr.mxu0 0.0
    %3251 = vmatpush1.msra.mxu0 0.0
    %3252 = vmatprep.subr.mxu0 0.0
    %3253 = vmatpush1.msra.mxu0 0.0
    %3254 = vmatprep.subr.mxu0 0.0
    %3255 = vmatpush1.msra.mxu0 0.0
    %3256 = vmatprep.subr.mxu0 0.0
    %3257 = vmatpush1.msra.mxu0 0.0
    %3258 = vmatprep.subr.mxu0 0.0
    %3259 = vmatpush1.msra.mxu0 0.0
    %3260 = vmatprep.subr.mxu0 0.0
    %3261 = vmatpush1.msra.mxu0 0.0
    %3262 = vmatprep.subr.mxu0 0.0
    %3263 = vmatpush1.msra.mxu0 0.0
    %3264 = vmatprep.subr.mxu0 0.0
    %3265 = vmatpush1.msra.mxu0 0.0
    %3266 = vmatprep.subr.mxu0 0.0
    %3267 = vmatpush1.msra.mxu0 0.0
    %3268 = vmatprep.subr.mxu0 0.0
    %3269 = vmatpush1.msra.mxu0 0.0
    %3270 = vmatprep.subr.mxu0 0.0
    %3271 = vmatpush1.msra.mxu0 0.0
    %3272 = vmatprep.subr.mxu0 0.0
    %3273 = vmatpush1.msra.mxu0 0.0
    %3274 = vmatprep.subr.mxu0 0.0
    %3275 = vmatpush1.msra.mxu0 0.0
    %3276 = vmatprep.subr.mxu0 0.0
    %3277 = vmatpush1.msra.mxu0 0.0
    %3278 = vmatprep.subr.mxu0 0.0
    %3279 = vmatpush1.msra.mxu0 %v3243
    %3280 = vmatprep.subr.mxu0 0.0
    %3281 = vmatpush2.msra.mxu0 0.0
    %3282 = vmatprep.subr.mxu0 0.0
    %3283 = vmatpush2.msra.mxu0 0.0
    %3284 = vmatprep.subr.mxu0 0.0
    %3285 = vmatpush2.msra.mxu0 0.0
    %3286 = vmatprep.subr.mxu0 0.0
    %3287 = vmatpush2.msra.mxu0 0.0
    %3288 = vmatprep.subr.mxu0 0.0
    %3289 = vmatpush2.msra.mxu0 0.0
    %3290 = vmatprep.subr.mxu0 0.0
    %3291 = vmatpush2.msra.mxu0 0.0
    %3292 = vmatprep.subr.mxu0 0.0
    %3293 = vmatpush2.msra.mxu0 0.0
    %3294 = vmatprep.subr.mxu0 0.0
    %3295 = vmatpush2.msra.mxu0 0.0
    %3296 = vmatprep.subr.mxu0 0.0
    %3297 = vmatpush2.msra.mxu0 0.0
    %3298 = vmatprep.subr.mxu0 0.0
    %3299 = vmatpush2.msra.mxu0 0.0
    %3300 = vmatprep.subr.mxu0 0.0
    %3301 = vmatpush2.msra.mxu0 0.0
    %3302 = vmatprep.subr.mxu0 0.0
    %3303 = vmatpush2.msra.mxu0 0.0
    %3304 = vmatprep.subr.mxu0 0.0
    %3305 = vmatpush2.msra.mxu0 0.0
    %3306 = vmatprep.subr.mxu0 0.0
    %3307 = vmatpush2.msra.mxu0 0.0
    %3308 = vmatprep.subr.mxu0 0.0
    %3309 = vmatpush2.msra.mxu0 0.0
    %3310 = vmatprep.subr.mxu0 0.0
    %3311 = vmatpush2.msra.mxu0 0.0
    %3312 = vmatprep.mubr.f32.mxu0 0.0
    %3313 = vmatmul.mubr.f32.gmra.mxu0 %v3246
    %v3314 = vpop.f32.mrf.mxu0
    %v3315 = vadd.f32 0.0, %v3314
    %v3316 = vpop.f32.mrf.mxu0
    %3317 = vdwg.mxu0
    %3319 = vrot.lane.b32.xlu0 %v3315, 24
    %v3320 = vpop.permute.xlu0 %3319
    %3322 = vst.msk [vmem:[#allocation2 + $0x8] sm:$0xff] %vm1753, %v3320
    %v3323 = vld [vmem:[#allocation2] sm:$0xff]
    %v3324 = vld [vmem:[#allocation2 + $0x8] sm:$0xff]
    %v3325 = vld [vmem:[#allocation9] sm:$0xff]
    %v3326 = vld [vmem:[#allocation9 + $0x8] sm:$0xff]
    %v3327 = vld [vmem:[#allocation9 + $0x10] sm:$0xff]
    %v3328 = vld [vmem:[#allocation9 + $0x18] sm:$0xff]
    %v3329 = vld [vmem:[%s5] sm:$0x1]
    %v3331 = vlaneseq
    %v3332 = vshrl.u32 %v3331, 7
    %v3333 = vsub.s32 0, %v3332
    %v3334 = vrot.slane %v3329, %v3333
    %v3337 = vsel %vm99, %v3323, 0
    %v3340 = vsel %vm99, %v3324, 0
    %3342 = vmatprep.subr.mxu0 0.0
    %3343 = vmatpush1.msra.mxu0 0.0
    %3344 = vmatprep.subr.mxu0 0.0
    %3345 = vmatpush1.msra.mxu0 0.0
    %3346 = vmatprep.subr.mxu0 0.0
    %3347 = vmatpush1.msra.mxu0 0.0
    %3348 = vmatprep.subr.mxu0 0.0
    %3349 = vmatpush1.msra.mxu0 0.0
    %3350 = vmatprep.subr.mxu0 0.0
    %3351 = vmatpush1.msra.mxu0 0.0
    %3352 = vmatprep.subr.mxu0 0.0
    %3353 = vmatpush1.msra.mxu0 0.0
    %3354 = vmatprep.subr.mxu0 0.0
    %3355 = vmatpush1.msra.mxu0 0.0
    %3356 = vmatprep.subr.mxu0 0.0
    %3357 = vmatpush1.msra.mxu0 0.0
    %3358 = vmatprep.subr.mxu0 0.0
    %3359 = vmatpush1.msra.mxu0 0.0
    %3360 = vmatprep.subr.mxu0 0.0
    %3361 = vmatpush1.msra.mxu0 0.0
    %3362 = vmatprep.subr.mxu0 0.0
    %3363 = vmatpush1.msra.mxu0 0.0
    %3364 = vmatprep.subr.mxu0 0.0
    %3365 = vmatpush1.msra.mxu0 0.0
    %3366 = vmatprep.subr.mxu0 0.0
    %3367 = vmatpush1.msra.mxu0 %v3328
    %3368 = vmatprep.subr.mxu0 0.0
    %3369 = vmatpush1.msra.mxu0 %v3327
    %3370 = vmatprep.subr.mxu0 0.0
    %3371 = vmatpush1.msra.mxu0 %v3326
    %3372 = vmatprep.subr.mxu0 0.0
    %3373 = vmatpush1.msra.mxu0 %v3325
    %3374 = vmatprep.subr.mxu0 0.0
    %3375 = vmatpush2.msra.mxu0 0.0
    %3376 = vmatprep.subr.mxu0 0.0
    %3377 = vmatpush2.msra.mxu0 0.0
    %3378 = vmatprep.subr.mxu0 0.0
    %3379 = vmatpush2.msra.mxu0 0.0
    %3380 = vmatprep.subr.mxu0 0.0
    %3381 = vmatpush2.msra.mxu0 0.0
    %3382 = vmatprep.subr.mxu0 0.0
    %3383 = vmatpush2.msra.mxu0 0.0
    %3384 = vmatprep.subr.mxu0 0.0
    %3385 = vmatpush2.msra.mxu0 0.0
    %3386 = vmatprep.subr.mxu0 0.0
    %3387 = vmatpush2.msra.mxu0 0.0
    %3388 = vmatprep.subr.mxu0 0.0
    %3389 = vmatpush2.msra.mxu0 0.0
    %3390 = vmatprep.subr.mxu0 0.0
    %3391 = vmatpush2.msra.mxu0 0.0
    %3392 = vmatprep.subr.mxu0 0.0
    %3393 = vmatpush2.msra.mxu0 0.0
    %3394 = vmatprep.subr.mxu0 0.0
    %3395 = vmatpush2.msra.mxu0 0.0
    %3396 = vmatprep.subr.mxu0 0.0
    %3397 = vmatpush2.msra.mxu0 0.0
    %3398 = vmatprep.subr.mxu0 0.0
    %3399 = vmatpush2.msra.mxu0 0.0
    %3400 = vmatprep.subr.mxu0 0.0
    %3401 = vmatpush2.msra.mxu0 0.0
    %3402 = vmatprep.subr.mxu0 0.0
    %3403 = vmatpush2.msra.mxu0 0.0
    %3404 = vmatprep.subr.mxu0 0.0
    %3405 = vmatpush2.msra.mxu0 0.0
    %3406 = vmatprep.mubr.f32.mxu0 0.0
    %3407 = vmatmul.mubr.f32.gmra.mxu0 %v3337
    %v3408 = vpop.f32.mrf.mxu0
    %v3409 = vadd.f32 %v3334, %v3408
    %v3410 = vpop.f32.mrf.mxu0
    %3411 = vmatprep.mubr.f32.mxu0 0.0
    %3412 = vmatmul.mubr.f32.gmra.mxu0 %v3340
    %v3413 = vpop.f32.mrf.mxu0
    %v3414 = vadd.f32 %v3334, %v3413
    %v3415 = vpop.f32.mrf.mxu0
    %3416 = vdwg.mxu0
    %v3417 = vadd.f32 %v3409, %v86
    %v3418 = vadd.f32 %v3414, %v87
    %v3419 = vsel %vm99, %v3417, 0.0
    %3420 = vadd.xlane.f32.xlu0 %v3419
    %v3421 = vpop.xlane.xlu0 %3420
    %v3422 = vsel %vm99, %v3418, 0.0
    %3423 = vadd.xlane.f32.xlu0 %v3422
    %v3424 = vpop.xlane.xlu0 %3423
    %v3425 = vrcp.pop 32.0
    %v3426 = vmul.f32 %v3421, %v3425
    %v3427 = vmul.f32 %v3424, %v3425
    %v3428 = vsub.f32 %v3417, %v3426
    %v3429 = vsub.f32 %v3418, %v3427
    %v3430 = vmul.f32 %v3428, %v3428
    %v3431 = vmul.f32 %v3429, %v3429
    %v3432 = vsel %vm99, %v3430, 0.0
    %3433 = vadd.xlane.f32.xlu0 %v3432
    %v3434 = vpop.xlane.xlu0 %3433
    %v3435 = vsel %vm99, %v3431, 0.0
    %3436 = vadd.xlane.f32.xlu0 %v3435
    %v3437 = vpop.xlane.xlu0 %3436
    %v3438 = vmul.f32 %v3434, %v3425
    %v3439 = vmul.f32 %v3437, %v3425
    %v3440 = vadd.f32 %v3438, 1e-12
    %v3441 = vadd.f32 %v3439, 1e-12
    %v3442 = vrsqrt.pop %v3440
    %v3443 = vrsqrt.pop %v3441
    %v3444 = vmul.f32 %v3428, %v3442
    %v3445 = vmul.f32 %v3429, %v3443
    %v3446 = vld [vmem:[%s6] sm:$0x1]
    %v3448 = vlaneseq
    %v3449 = vshrl.u32 %v3448, 7
    %v3450 = vsub.s32 0, %v3449
    %v3451 = vrot.slane %v3446, %v3450
    %v3453 = vmul.f32 %v3444, %v3451
    %v3454 = vmul.f32 %v3445, %v3451
    %v3455 = vld [vmem:[%s7] sm:$0x1]
    %v3457 = vlaneseq
    %v3458 = vshrl.u32 %v3457, 7
    %v3459 = vsub.s32 0, %v3458
    %v3460 = vrot.slane %v3455, %v3459
    %v3462 = vadd.f32 %v3453, %v3460
    %v3463 = vadd.f32 %v3454, %v3460
    %3464 = vst.msk [vmem:[#allocation11] sm:$0xff] %vm99, %v3462
    %3465 = vst.msk [vmem:[#allocation11 + $0x8] sm:$0xff] %vm99, %v3463
    // Predicated region
    $region50: #{tpu_custom_call.1} parent=1 // pred_check
      _
    $region51: #{tpu_custom_call.1} parent=1 // pred_check_branch
      %3467 = sbr.rel (0) target = $region53
    $region52: #{tpu_custom_call.1} parent=1 // pred_region
      %s3469 = ssub.s32 256, 256
      %3470 = vsyncadd [#allocation5], %s3469
      %s3471 = sshll.u32 [#allocation11], 4
      %s3472 = int_to_ptr.vmem [resolvable:$true] %s3471
      %3477 = dma.vmem_to_hbm [thread:$0]  %s3472, 256, %s8, [#allocation5], 128, 128, 8
    $region53: #{tpu_custom_call.1} parent=1 // pred_fallthru
      _
    // Predicated region
    $region54: #{tpu_custom_call.1} parent=1 // pred_check
      _
    $region55: #{tpu_custom_call.1} parent=1 // pred_check_branch
      %3479 = sbr.rel (0) target = $region57
    $region56: #{tpu_custom_call.1} parent=1 // pred_region
      %s3481 = ssub.s32 4096, 4096
      %3482 = vsyncadd [#allocation13], %s3481
      %s3483 = sshll.u32 [#allocation12], 4
      %s3484 = int_to_ptr.vmem [resolvable:$true] %s3483
      %3489 = dma.vmem_to_hbm [thread:$0]  %s3484, 4096, %s9, [#allocation13], 128, 128, 8
    $region57: #{tpu_custom_call.1} parent=1 // pred_fallthru
      _
    // Predicated region
    $region58: #{tpu_custom_call.1} parent=1 // pred_check
      _
    $region59: #{tpu_custom_call.1} parent=1 // pred_check_branch
      %3491 = sbr.rel (0) target = $region61
    $region60: #{tpu_custom_call.1} parent=1 // pred_region
      %3492 = dma.done [#allocation5], 256
    $region61: #{tpu_custom_call.1} parent=1 // pred_fallthru
      _
    // Predicated region
    $region62: #{tpu_custom_call.1} parent=1 // pred_check
      _
    $region63: #{tpu_custom_call.1} parent=1 // pred_check_branch
      %3494 = sbr.rel (0) target = $region65
    $region64: #{tpu_custom_call.1} parent=1 // pred_region
      %3495 = dma.done [#allocation13], 4096
    $region65: #{tpu_custom_call.1} parent=1 // pred_fallthru
      _
    %3496 = vsyncpa [#allocation4], 1
    %3497 = vsyncpa [#allocation7], 1
    %3498 = vsyncpa [#allocation10], 1
    %3499 = vsyncpa [#allocation5], 1
    %3500 = vsyncpa [#allocation13], 1

</llo_original>
